<compile_context>
chip_gen: v7x
topology: tpu7x:2x2x1
jax: 0.10.0
libtpu: 0.0.40
codegen_flags: <defaults>
</compile_context>

<pallas_src>
import jax
import jax.numpy as jnp
from jax.experimental import pallas as pl
from jax.experimental.pallas import tpu as pltpu

_VMEM_LIMIT = 32 * 1024 * 1024  # fine on v5e/v6e (128 MiB) and v7x (64 MiB)


# ----------------------------------------------------------------------------
# Tiling helper
# ----------------------------------------------------------------------------
def _pick_lane_tile(m, target):
    """Lane-axis tile: the full dim for small m, otherwise the largest multiple
    of 128 <= target that divides m (no masked trailing block); falls back to a
    128-multiple tile with a masked trailing block."""
    if m <= target:
        return m
    top = (min(target, m) // 128) * 128
    for cand in range(top, 127, -128):
        if m % cand == 0:
            return cand
    return top


# ----------------------------------------------------------------------------
# Pallas kernels
# ----------------------------------------------------------------------------
def _conv_pool_relu_kernel(w_ref, p_ref, b_ref, o_ref):
    """relu(maxpool(conv)) as 4 GEMMs + max, transposed (lane-dense along M).

    w_ref: (OC, K)        bf16 conv weight, rows = out channel
    p_ref: (4, K, tile)   bf16 im2col patches, one slab per 2x2 pool position
    b_ref: (OC, 1)        f32 bias
    o_ref: (OC, tile)     pooled+relu output, columns ordered (n, oh2, ow2)
    """
    w = w_ref[...]
    m = jnp.dot(w, p_ref[0], preferred_element_type=jnp.float32)
    for q in range(1, p_ref.shape[0]):
        m = jnp.maximum(m, jnp.dot(w, p_ref[q], preferred_element_type=jnp.float32))
    # bias is constant over the pool window, so max-then-bias == bias-then-max
    o_ref[...] = jnp.maximum(m + b_ref[...], 0.0).astype(o_ref.dtype)


def conv_pool_relu_T(patches, w, b, out_dtype=jnp.bfloat16, lane_target=2048):
    """Fused conv-as-GEMM + bias + 2x2 max-pool + ReLU, lane-dense output.

    patches: (4, K, M)  with M = N*PH*PW on the lane axis (pooled grid)
    w:       (OC, K)
    b:       (OC, 1) float32
    returns  (OC, M) in out_dtype  == channel-major (OC, N, PH, PW)
    """
    npool, k, m = patches.shape
    oc = w.shape[0]
    tile = _pick_lane_tile(m, lane_target)
    grid = (pl.cdiv(m, tile),)
    cost = pl.CostEstimate(
        flops=2 * npool * oc * k * m,
        transcendentals=0,
        bytes_accessed=2 * (npool * k * m + oc * k + oc * m) + 4 * oc,
    )
    return pl.pallas_call(
        _conv_pool_relu_kernel,
        out_shape=jax.ShapeDtypeStruct((oc, m), out_dtype),
        grid=grid,
        in_specs=[
            pl.BlockSpec((oc, k), lambda i: (0, 0)),
            pl.BlockSpec((npool, k, tile), lambda i: (0, 0, i)),
            pl.BlockSpec((oc, 1), lambda i: (0, 0)),
        ],
        out_specs=pl.BlockSpec((oc, tile), lambda i: (0, i)),
        compiler_params=pltpu.CompilerParams(
            dimension_semantics=("parallel",),
            vmem_limit_bytes=_VMEM_LIMIT,
        ),
        cost_estimate=cost,
    )(w, patches, b)


def _fc_head_T_kernel(x_ref, w1_ref, b1_ref, w2_ref, b2_ref, o_ref):
    """Transposed fc1 + ReLU + fc2 + log_softmax; batch on the lane axis.

    x_ref:  (640, tile)  flattened features (c, h, w) per column
    w1_ref: (384, 640)   fc1 weight, hidden zero-padded 300->384
    b1_ref: (384, 1)     f32
    w2_ref: (10, 384)    fc2 weight, padded columns are zero
    b2_ref: (10, 1)      f32
    o_ref:  (10, tile)   f32 log-probabilities (lane-dense store)
    """
    h = jnp.dot(w1_ref[...], x_ref[...], preferred_element_type=jnp.float32)
    h = jnp.maximum(h + b1_ref[...], 0.0)
    z = jnp.dot(w2_ref[...], h.astype(w2_ref.dtype),
                preferred_element_type=jnp.float32) + b2_ref[...]
    m = jnp.max(z, axis=0, keepdims=True)
    e = z - m
    lse = jnp.log(jnp.sum(jnp.exp(e), axis=0, keepdims=True))
    o_ref[...] = (e - lse).astype(o_ref.dtype)


def fc_head_T(x_t, w1, b1, w2, b2, lane_target=1024):
    """x_t:(640,M), w1:(384,640), w2:(10,384) -> (10,M) log-probabilities."""
    feat, m = x_t.shape
    hid = w1.shape[0]
    ncls = w2.shape[0]
    tile = _pick_lane_tile(m, lane_target)
    grid = (pl.cdiv(m, tile),)
    cost = pl.CostEstimate(
        flops=2 * m * (hid * feat + ncls * hid),
        transcendentals=m * (ncls + 1),
        bytes_accessed=2 * (feat * m + hid * feat + ncls * hid) + 4 * ncls * m,
    )
    return pl.pallas_call(
        _fc_head_T_kernel,
        out_shape=jax.ShapeDtypeStruct((ncls, m), jnp.float32),
        grid=grid,
        in_specs=[
            pl.BlockSpec((feat, tile), lambda i: (0, i)),
            pl.BlockSpec((hid, feat), lambda i: (0, 0)),
            pl.BlockSpec((hid, 1), lambda i: (0, 0)),
            pl.BlockSpec((ncls, hid), lambda i: (0, 0)),
            pl.BlockSpec((ncls, 1), lambda i: (0, 0)),
        ],
        out_specs=pl.BlockSpec((ncls, tile), lambda i: (0, i)),
        compiler_params=pltpu.CompilerParams(
            dimension_semantics=("parallel",),
            vmem_limit_bytes=_VMEM_LIMIT,
        ),
        cost_estimate=cost,
    )(x_t, w1, b1, w2, b2)


# ----------------------------------------------------------------------------
# Plain-JAX glue (layout plumbing only; no full-activation transposes)
# ----------------------------------------------------------------------------
def im2col_pooled_T(x_cnhw, k):
    """Channel-major (C,N,H,W) -> pooled im2col patches (4, C*k*k, N*PH*PW).

    Patch rows are ordered (c, kh, kw) to match PyTorch's conv weight flatten;
    columns are ordered (n, oh2, ow2) over the POOLED output grid; the leading
    axis enumerates the 4 positions of the 2x2 max-pool window.
    """
    c, n, h, w = x_cnhw.shape
    oh, ow = h - k + 1, w - k + 1     # conv output size
    ph, pw = oh // 2, ow // 2         # pooled output size
    mats = []
    for py in range(2):
        for px in range(2):
            taps = []
            for kh in range(k):
                for kw in range(k):
                    h0, w0 = py + kh, px + kw
                    taps.append(
                        x_cnhw[:, :,
                               h0:h0 + 2 * (ph - 1) + 1:2,
                               w0:w0 + 2 * (pw - 1) + 1:2])   # (C, N, PH, PW)
            t = jnp.stack(taps, axis=1)                       # (C, k*k, N, PH, PW)
            mats.append(t.reshape(c * k * k, n * ph * pw))
    return jnp.stack(mats, axis=0), (n, ph, pw)               # (4, C*k*k, N*PH*PW)


# ----------------------------------------------------------------------------
# One-time parameter preparation (hoisted out of the forward pass)
# ----------------------------------------------------------------------------
def prepare_params(params, compute_dtype=jnp.bfloat16, fc_hidden_pad=384):
    oc1 = params["conv1_w"].shape[0]
    oc2 = params["conv2_w"].shape[0]
    w1, b1 = params["fc1_w"], params["fc1_b"]        # (300, 640), (300,)
    w2, b2 = params["fc2_w"], params["fc2_b"]        # (10, 300),  (10,)
    hid = w1.shape[0]
    hp = fc_hidden_pad
    # Zero-pad the hidden dim 300 -> 384: padded rows give relu(0+0)=0 and hit
    # zero columns of w2, so the result is bit-identical in exact arithmetic.
    w1p = jnp.zeros((hp, w1.shape[1]), jnp.float32).at[:hid].set(w1)
    b1p = jnp.zeros((hp,), jnp.float32).at[:hid].set(b1)
    w2p = jnp.zeros((w2.shape[0], hp), jnp.float32).at[:, :hid].set(w2)
    return {
        # (OC, IC*K*K) -- natural PyTorch flatten order (ic, kh, kw)
        "conv1_w": params["conv1_w"].reshape(oc1, -1).astype(compute_dtype),
        "conv1_b": params["conv1_b"].reshape(oc1, 1).astype(jnp.float32),
        "conv2_w": params["conv2_w"].reshape(oc2, -1).astype(compute_dtype),
        "conv2_b": params["conv2_b"].reshape(oc2, 1).astype(jnp.float32),
        # transposed fc head: y_T = W1 @ x_T, so PyTorch layout is used as-is
        "fc1_w": w1p.astype(compute_dtype),                   # (384, 640)
        "fc1_b": b1p.reshape(hp, 1),                          # (384, 1) f32
        "fc2_w": w2p.astype(compute_dtype),                   # (10, 384)
        "fc2_b": b2.reshape(-1, 1).astype(jnp.float32),       # (10, 1)
    }


# ----------------------------------------------------------------------------
# Net1 forward (inference)
# ----------------------------------------------------------------------------
def net1_forward(x_nchw, pp):
    cdt = pp["conv1_w"].dtype
    n = x_nchw.shape[0]

    # Channel-major (C,N,H,W) throughout; C=1 here so this is a free reshape.
    x = x_nchw.astype(cdt).transpose(1, 0, 2, 3)                # (1, N, 28, 28)

    # Conv2d(1,20,5) -> MaxPool2d(2) -> ReLU, fused into one kernel.
    p1, (_, ph, pw) = im2col_pooled_T(x, 5)                     # (4, 25, N*144)
    a1 = conv_pool_relu_T(p1, pp["conv1_w"], pp["conv1_b"],
                          out_dtype=cdt, lane_target=2048)      # (20, N*144)
    a1 = a1.reshape(20, n, ph, pw)                              # channel-major

    # Conv2d(20,40,5) -> MaxPool2d(2) -> Dropout2d(identity) -> ReLU, fused.
    # TODO(synk): fold this im2col into the kernel (25-tap loop) to remove the
    #             25x patch expansion in HBM at large batch.
    p2, (_, ph, pw) = im2col_pooled_T(a1, 5)                    # (4, 500, N*16)
    a2 = conv_pool_relu_T(p2, pp["conv2_w"], pp["conv2_b"],
                          out_dtype=cdt, lane_target=1024)      # (40, N*16)

    # x.view(-1, 640): feature order (c, h, w); batch moves to the lane axis
    # for the transposed fc head.  Only tiny (N*640-element) transpose left.
    x_t = a2.reshape(40, n, ph * pw).transpose(0, 2, 1).reshape(40 * ph * pw, n)

    # fc1 + ReLU + (dropout identity) + fc2 + log_softmax, one fused kernel,
    # lane-dense (10, N) output; transpose back to PyTorch's (N, 10).
    out_t = fc_head_T(x_t, pp["fc1_w"], pp["fc1_b"], pp["fc2_w"], pp["fc2_b"])
    return out_t.T


# ----------------------------------------------------------------------------
# Pure-JAX reference (same bf16 rounding points) for validation
# ----------------------------------------------------------------------------
def _maxpool2x2_nchw(x):
    n, c, h, w = x.shape
    return x.reshape(n, c, h // 2, 2, w // 2, 2).max(axis=(3, 5))


def net1_reference(x_nchw, params, compute_dtype=jnp.bfloat16):
    q = lambda a: a.astype(compute_dtype).astype(jnp.float32)

    def conv(x, w, b):
        y = jax.lax.conv_general_dilated(
            q(x), q(w), (1, 1), "VALID",
            dimension_numbers=("NCHW", "OIHW", "NCHW"))
        return y + b.reshape(1, -1, 1, 1)

    y = jax.nn.relu(_maxpool2x2_nchw(conv(x_nchw, params["conv1_w"], params["conv1_b"])))
    y = jax.nn.relu(_maxpool2x2_nchw(conv(y, params["conv2_w"], params["conv2_b"])))
    y = y.reshape(y.shape[0], -1)                               # (N, 640)
    h = jax.nn.relu(q(y) @ q(params["fc1_w"]).T + params["fc1_b"])
    z = q(h) @ q(params["fc2_w"]).T + params["fc2_b"]
    return jax.nn.log_softmax(z, axis=-1)


# ----------------------------------------------------------------------------
# Deterministic parameter init (PyTorch-default-like uniform bounds)
# ----------------------------------------------------------------------------
def init_params(key):
    ks = jax.random.split(key, 8)

    def uni(k, shape, fan_in):
        bound = 1.0 / float(fan_in) ** 0.5
        return jax.random.uniform(k, shape, jnp.float32, -bound, bound)

    return {
        "conv1_w": uni(ks[0], (20, 1, 5, 5), 1 * 5 * 5),
        "conv1_b": uni(ks[1], (20,), 1 * 5 * 5),
        "conv2_w": uni(ks[2], (40, 20, 5, 5), 20 * 5 * 5),
        "conv2_b": uni(ks[3], (40,), 20 * 5 * 5),
        "fc1_w": uni(ks[4], (300, 640), 640),
        "fc1_b": uni(ks[5], (300,), 640),
        "fc2_w": uni(ks[6], (10, 300), 300),
        "fc2_b": uni(ks[7], (10,), 300),
    }


if __name__ == "__main__":
    key = jax.random.PRNGKey(0)
    kx, kp = jax.random.split(key)
    # Net1's view(-1, 640) requires 28x28 inputs (40*4*4 = 640 features).
    # Batch 16 keeps shapes small while giving conv1 a real multi-step grid.
    n = 16
    x = jax.random.normal(kx, (n, 1, 28, 28), dtype=jnp.float32)
    params = init_params(kp)
    pp = prepare_params(params)          # one-time weight layout/dtype/pad prep

    fwd = jax.jit(net1_forward)
    out = jax.block_until_ready(fwd(x, pp))

    assert out.shape == (n, 10)
    assert bool(jnp.all(jnp.isfinite(out)))
    # log_softmax rows should exponentiate-sum to ~1 (computed in f32 in-kernel)
    assert bool(jnp.allclose(jnp.sum(jnp.exp(out), axis=-1), 1.0, atol=1e-4))
    # cross-check against a pure-JAX reference with matched bf16 rounding points
    ref = net1_reference(x, params)
    max_err = float(jnp.max(jnp.abs(out - ref)))
    assert max_err < 5e-2, max_err
    print("KERNEL_OK")
</pallas_src>

<mosaic_0001>
module attributes {stable_mosaic.version = 11 : i64} {
  func.func @_conv_pool_relu_kernel(%arg0: i32, %arg1: memref<20x25xbf16, #tpu.memory_space<vmem>>, %arg2: memref<4x25x1152xbf16, #tpu.memory_space<vmem>>, %arg3: memref<20x1xf32, #tpu.memory_space<vmem>>, %arg4: memref<20x1152xbf16, #tpu.memory_space<vmem>>) attributes {dimension_semantics = [#tpu.dimension_semantics<parallel>], iteration_bounds = array<i64: 2>, scalar_prefetch = 0 : i64, scratch_operands = 0 : i64, tpu.core_type = #tpu.core_type<tc>, window_params = [{pipeline_mode = #tpu.pipeline_mode<synchronous>, transform_indices = @transform_0, window_bounds = array<i64: 20, 25>}, {transform_indices = @transform_1, window_bounds = array<i64: 4, 25, 1152>}, {pipeline_mode = #tpu.pipeline_mode<synchronous>, transform_indices = @transform_2, window_bounds = array<i64: 20, 1>}, {transform_indices = @transform_3, window_bounds = array<i64: 20, 1152>}]} {
    %c0 = arith.constant 0 : index
    %c0_0 = arith.constant 0 : index
    %0 = vector.load %arg1[%c0, %c0_0] : memref<20x25xbf16, #tpu.memory_space<vmem>>, vector<20x25xbf16>
    %c0_1 = arith.constant 0 : index
    %c0_2 = arith.constant 0 : index
    %c0_3 = arith.constant 0 : index
    %1 = vector.load %arg2[%c0_1, %c0_2, %c0_3] : memref<4x25x1152xbf16, #tpu.memory_space<vmem>>, vector<1x25x1152xbf16>
    %2 = vector.shape_cast %1 : vector<1x25x1152xbf16> to vector<25x1152xbf16>
    %cst = arith.constant dense<0.000000e+00> : vector<20x1152xf32>
    %3 = tpu.matmul %0, %2, %cst {dimension_numbers = #tpu.dot_dimension_numbers<[1], [0], [0], [1], [0, 0, 1, 1], [], []>} : vector<20x25xbf16>, vector<25x1152xbf16>, vector<20x1152xf32> -> vector<20x1152xf32>
    %c1 = arith.constant 1 : index
    %c0_4 = arith.constant 0 : index
    %c0_5 = arith.constant 0 : index
    %4 = vector.load %arg2[%c1, %c0_4, %c0_5] : memref<4x25x1152xbf16, #tpu.memory_space<vmem>>, vector<1x25x1152xbf16>
    %5 = vector.shape_cast %4 : vector<1x25x1152xbf16> to vector<25x1152xbf16>
    %cst_6 = arith.constant dense<0.000000e+00> : vector<20x1152xf32>
    %6 = tpu.matmul %0, %5, %cst_6 {dimension_numbers = #tpu.dot_dimension_numbers<[1], [0], [0], [1], [0, 0, 1, 1], [], []>} : vector<20x25xbf16>, vector<25x1152xbf16>, vector<20x1152xf32> -> vector<20x1152xf32>
    %7 = arith.maximumf %3, %6 : vector<20x1152xf32>
    %c2 = arith.constant 2 : index
    %c0_7 = arith.constant 0 : index
    %c0_8 = arith.constant 0 : index
    %8 = vector.load %arg2[%c2, %c0_7, %c0_8] : memref<4x25x1152xbf16, #tpu.memory_space<vmem>>, vector<1x25x1152xbf16>
    %9 = vector.shape_cast %8 : vector<1x25x1152xbf16> to vector<25x1152xbf16>
    %cst_9 = arith.constant dense<0.000000e+00> : vector<20x1152xf32>
    %10 = tpu.matmul %0, %9, %cst_9 {dimension_numbers = #tpu.dot_dimension_numbers<[1], [0], [0], [1], [0, 0, 1, 1], [], []>} : vector<20x25xbf16>, vector<25x1152xbf16>, vector<20x1152xf32> -> vector<20x1152xf32>
    %11 = arith.maximumf %7, %10 : vector<20x1152xf32>
    %c3 = arith.constant 3 : index
    %c0_10 = arith.constant 0 : index
    %c0_11 = arith.constant 0 : index
    %12 = vector.load %arg2[%c3, %c0_10, %c0_11] : memref<4x25x1152xbf16, #tpu.memory_space<vmem>>, vector<1x25x1152xbf16>
    %13 = vector.shape_cast %12 : vector<1x25x1152xbf16> to vector<25x1152xbf16>
    %cst_12 = arith.constant dense<0.000000e+00> : vector<20x1152xf32>
    %14 = tpu.matmul %0, %13, %cst_12 {dimension_numbers = #tpu.dot_dimension_numbers<[1], [0], [0], [1], [0, 0, 1, 1], [], []>} : vector<20x25xbf16>, vector<25x1152xbf16>, vector<20x1152xf32> -> vector<20x1152xf32>
    %15 = arith.maximumf %11, %14 : vector<20x1152xf32>
    %c0_13 = arith.constant 0 : index
    %c0_14 = arith.constant 0 : index
    %16 = vector.load %arg3[%c0_13, %c0_14] : memref<20x1xf32, #tpu.memory_space<vmem>>, vector<20x1xf32>
    %17 = vector.broadcast %16 : vector<20x1xf32> to vector<20x1152xf32>
    %18 = arith.addf %15, %17 : vector<20x1152xf32>
    %cst_15 = arith.constant 0.000000e+00 : f32
    %19 = vector.broadcast %cst_15 : f32 to vector<20x1152xf32>
    %20 = arith.maximumf %18, %19 : vector<20x1152xf32>
    %21 = arith.truncf %20 : vector<20x1152xf32> to vector<20x1152xbf16>
    %c0_16 = arith.constant 0 : index
    %c0_17 = arith.constant 0 : index
    %22 = vector.load %arg4[%c0_16, %c0_17] : memref<20x1152xbf16, #tpu.memory_space<vmem>>, vector<20x1152xbf16>
    tpu.vector_store %arg4[%c0_16, %c0_17], %21 {strides = array<i32>} : memref<20x1152xbf16, #tpu.memory_space<vmem>>, vector<20x1152xbf16>,
    return
  }
  func.func @transform_0(%arg0: i32) -> (i32, i32) {
    %c0_i32 = arith.constant 0 : i32
    %c0_i32_0 = arith.constant 0 : i32
    %c0_i32_1 = arith.constant 0 : i32
    return %c0_i32, %c0_i32_0 : i32, i32
  }
  func.func @transform_1(%arg0: i32) -> (i32, i32, i32) {
    %c0_i32 = arith.constant 0 : i32
    %c0_i32_0 = arith.constant 0 : i32
    %c0_i32_1 = arith.constant 0 : i32
    return %c0_i32, %c0_i32_0, %arg0 : i32, i32, i32
  }
  func.func @transform_2(%arg0: i32) -> (i32, i32) {
    %c0_i32 = arith.constant 0 : i32
    %c0_i32_0 = arith.constant 0 : i32
    %c0_i32_1 = arith.constant 0 : i32
    return %c0_i32, %c0_i32_0 : i32, i32
  }
  func.func @transform_3(%arg0: i32) -> (i32, i32) {
    %c0_i32 = arith.constant 0 : i32
    %c0_i32_0 = arith.constant 0 : i32
    return %c0_i32, %arg0 : i32, i32
  }
}

module attributes {stable_mosaic.version = 11 : i64} {
  func.func @_conv_pool_relu_kernel(%arg0: i32, %arg1: memref<40x500xbf16, #tpu.memory_space<vmem>>, %arg2: memref<4x500x256xbf16, #tpu.memory_space<vmem>>, %arg3: memref<40x1xf32, #tpu.memory_space<vmem>>, %arg4: memref<40x256xbf16, #tpu.memory_space<vmem>>) attributes {dimension_semantics = [#tpu.dimension_semantics<parallel>], iteration_bounds = array<i64: 1>, scalar_prefetch = 0 : i64, scratch_operands = 0 : i64, tpu.core_type = #tpu.core_type<tc>, window_params = [{pipeline_mode = #tpu.pipeline_mode<synchronous>, transform_indices = @transform_0, window_bounds = array<i64: 40, 500>}, {transform_indices = @transform_1, window_bounds = array<i64: 4, 500, 256>}, {pipeline_mode = #tpu.pipeline_mode<synchronous>, transform_indices = @transform_2, window_bounds = array<i64: 40, 1>}, {transform_indices = @transform_3, window_bounds = array<i64: 40, 256>}]} {
    %c0 = arith.constant 0 : index
    %c0_0 = arith.constant 0 : index
    %0 = vector.load %arg1[%c0, %c0_0] : memref<40x500xbf16, #tpu.memory_space<vmem>>, vector<40x500xbf16>
    %c0_1 = arith.constant 0 : index
    %c0_2 = arith.constant 0 : index
    %c0_3 = arith.constant 0 : index
    %1 = vector.load %arg2[%c0_1, %c0_2, %c0_3] : memref<4x500x256xbf16, #tpu.memory_space<vmem>>, vector<1x500x256xbf16>
    %2 = vector.shape_cast %1 : vector<1x500x256xbf16> to vector<500x256xbf16>
    %cst = arith.constant dense<0.000000e+00> : vector<40x256xf32>
    %3 = tpu.matmul %0, %2, %cst {dimension_numbers = #tpu.dot_dimension_numbers<[1], [0], [0], [1], [0, 0, 1, 1], [], []>} : vector<40x500xbf16>, vector<500x256xbf16>, vector<40x256xf32> -> vector<40x256xf32>
    %c1 = arith.constant 1 : index
    %c0_4 = arith.constant 0 : index
    %c0_5 = arith.constant 0 : index
    %4 = vector.load %arg2[%c1, %c0_4, %c0_5] : memref<4x500x256xbf16, #tpu.memory_space<vmem>>, vector<1x500x256xbf16>
    %5 = vector.shape_cast %4 : vector<1x500x256xbf16> to vector<500x256xbf16>
    %cst_6 = arith.constant dense<0.000000e+00> : vector<40x256xf32>
    %6 = tpu.matmul %0, %5, %cst_6 {dimension_numbers = #tpu.dot_dimension_numbers<[1], [0], [0], [1], [0, 0, 1, 1], [], []>} : vector<40x500xbf16>, vector<500x256xbf16>, vector<40x256xf32> -> vector<40x256xf32>
    %7 = arith.maximumf %3, %6 : vector<40x256xf32>
    %c2 = arith.constant 2 : index
    %c0_7 = arith.constant 0 : index
    %c0_8 = arith.constant 0 : index
    %8 = vector.load %arg2[%c2, %c0_7, %c0_8] : memref<4x500x256xbf16, #tpu.memory_space<vmem>>, vector<1x500x256xbf16>
    %9 = vector.shape_cast %8 : vector<1x500x256xbf16> to vector<500x256xbf16>
    %cst_9 = arith.constant dense<0.000000e+00> : vector<40x256xf32>
    %10 = tpu.matmul %0, %9, %cst_9 {dimension_numbers = #tpu.dot_dimension_numbers<[1], [0], [0], [1], [0, 0, 1, 1], [], []>} : vector<40x500xbf16>, vector<500x256xbf16>, vector<40x256xf32> -> vector<40x256xf32>
    %11 = arith.maximumf %7, %10 : vector<40x256xf32>
    %c3 = arith.constant 3 : index
    %c0_10 = arith.constant 0 : index
    %c0_11 = arith.constant 0 : index
    %12 = vector.load %arg2[%c3, %c0_10, %c0_11] : memref<4x500x256xbf16, #tpu.memory_space<vmem>>, vector<1x500x256xbf16>
    %13 = vector.shape_cast %12 : vector<1x500x256xbf16> to vector<500x256xbf16>
    %cst_12 = arith.constant dense<0.000000e+00> : vector<40x256xf32>
    %14 = tpu.matmul %0, %13, %cst_12 {dimension_numbers = #tpu.dot_dimension_numbers<[1], [0], [0], [1], [0, 0, 1, 1], [], []>} : vector<40x500xbf16>, vector<500x256xbf16>, vector<40x256xf32> -> vector<40x256xf32>
    %15 = arith.maximumf %11, %14 : vector<40x256xf32>
    %c0_13 = arith.constant 0 : index
    %c0_14 = arith.constant 0 : index
    %16 = vector.load %arg3[%c0_13, %c0_14] : memref<40x1xf32, #tpu.memory_space<vmem>>, vector<40x1xf32>
    %17 = vector.broadcast %16 : vector<40x1xf32> to vector<40x256xf32>
    %18 = arith.addf %15, %17 : vector<40x256xf32>
    %cst_15 = arith.constant 0.000000e+00 : f32
    %19 = vector.broadcast %cst_15 : f32 to vector<40x256xf32>
    %20 = arith.maximumf %18, %19 : vector<40x256xf32>
    %21 = arith.truncf %20 : vector<40x256xf32> to vector<40x256xbf16>
    %c0_16 = arith.constant 0 : index
    %c0_17 = arith.constant 0 : index
    %22 = vector.load %arg4[%c0_16, %c0_17] : memref<40x256xbf16, #tpu.memory_space<vmem>>, vector<40x256xbf16>
    tpu.vector_store %arg4[%c0_16, %c0_17], %21 {strides = array<i32>} : memref<40x256xbf16, #tpu.memory_space<vmem>>, vector<40x256xbf16>,
    return
  }
  func.func @transform_0(%arg0: i32) -> (i32, i32) {
    %c0_i32 = arith.constant 0 : i32
    %c0_i32_0 = arith.constant 0 : i32
    %c0_i32_1 = arith.constant 0 : i32
    return %c0_i32, %c0_i32_0 : i32, i32
  }
  func.func @transform_1(%arg0: i32) -> (i32, i32, i32) {
    %c0_i32 = arith.constant 0 : i32
    %c0_i32_0 = arith.constant 0 : i32
    %c0_i32_1 = arith.constant 0 : i32
    return %c0_i32, %c0_i32_0, %arg0 : i32, i32, i32
  }
  func.func @transform_2(%arg0: i32) -> (i32, i32) {
    %c0_i32 = arith.constant 0 : i32
    %c0_i32_0 = arith.constant 0 : i32
    %c0_i32_1 = arith.constant 0 : i32
    return %c0_i32, %c0_i32_0 : i32, i32
  }
  func.func @transform_3(%arg0: i32) -> (i32, i32) {
    %c0_i32 = arith.constant 0 : i32
    %c0_i32_0 = arith.constant 0 : i32
    return %c0_i32, %arg0 : i32, i32
  }
}

module attributes {stable_mosaic.version = 11 : i64} {
  func.func @_fc_head_T_kernel(%arg0: i32, %arg1: memref<640x16xbf16, #tpu.memory_space<vmem>>, %arg2: memref<384x640xbf16, #tpu.memory_space<vmem>>, %arg3: memref<384x1xf32, #tpu.memory_space<vmem>>, %arg4: memref<10x384xbf16, #tpu.memory_space<vmem>>, %arg5: memref<10x1xf32, #tpu.memory_space<vmem>>, %arg6: memref<10x16xf32, #tpu.memory_space<vmem>>) attributes {dimension_semantics = [#tpu.dimension_semantics<parallel>], iteration_bounds = array<i64: 1>, scalar_prefetch = 0 : i64, scratch_operands = 0 : i64, tpu.core_type = #tpu.core_type<tc>, window_params = [{transform_indices = @transform_0, window_bounds = array<i64: 640, 16>}, {pipeline_mode = #tpu.pipeline_mode<synchronous>, transform_indices = @transform_1, window_bounds = array<i64: 384, 640>}, {pipeline_mode = #tpu.pipeline_mode<synchronous>, transform_indices = @transform_2, window_bounds = array<i64: 384, 1>}, {pipeline_mode = #tpu.pipeline_mode<synchronous>, transform_indices = @transform_3, window_bounds = array<i64: 10, 384>}, {pipeline_mode = #tpu.pipeline_mode<synchronous>, transform_indices = @transform_4, window_bounds = array<i64: 10, 1>}, {transform_indices = @transform_5, window_bounds = array<i64: 10, 16>}]} {
    %c0 = arith.constant 0 : index
    %c0_0 = arith.constant 0 : index
    %0 = vector.load %arg2[%c0, %c0_0] : memref<384x640xbf16, #tpu.memory_space<vmem>>, vector<384x640xbf16>
    %c0_1 = arith.constant 0 : index
    %c0_2 = arith.constant 0 : index
    %1 = vector.load %arg1[%c0_1, %c0_2] : memref<640x16xbf16, #tpu.memory_space<vmem>>, vector<640x16xbf16>
    %cst = arith.constant dense<0.000000e+00> : vector<384x16xf32>
    %2 = tpu.matmul %0, %1, %cst {dimension_numbers = #tpu.dot_dimension_numbers<[1], [0], [0], [1], [0, 0, 1, 1], [], []>} : vector<384x640xbf16>, vector<640x16xbf16>, vector<384x16xf32> -> vector<384x16xf32>
    %c0_3 = arith.constant 0 : index
    %c0_4 = arith.constant 0 : index
    %3 = vector.load %arg3[%c0_3, %c0_4] : memref<384x1xf32, #tpu.memory_space<vmem>>, vector<384x1xf32>
    %4 = vector.broadcast %3 : vector<384x1xf32> to vector<384x16xf32>
    %5 = arith.addf %2, %4 : vector<384x16xf32>
    %cst_5 = arith.constant 0.000000e+00 : f32
    %6 = vector.broadcast %cst_5 : f32 to vector<384x16xf32>
    %7 = arith.maximumf %5, %6 : vector<384x16xf32>
    %c0_6 = arith.constant 0 : index
    %c0_7 = arith.constant 0 : index
    %8 = vector.load %arg4[%c0_6, %c0_7] : memref<10x384xbf16, #tpu.memory_space<vmem>>, vector<10x384xbf16>
    %9 = arith.truncf %7 : vector<384x16xf32> to vector<384x16xbf16>
    %cst_8 = arith.constant dense<0.000000e+00> : vector<10x16xf32>
    %10 = tpu.matmul %8, %9, %cst_8 {dimension_numbers = #tpu.dot_dimension_numbers<[1], [0], [0], [1], [0, 0, 1, 1], [], []>} : vector<10x384xbf16>, vector<384x16xbf16>, vector<10x16xf32> -> vector<10x16xf32>
    %c0_9 = arith.constant 0 : index
    %c0_10 = arith.constant 0 : index
    %11 = vector.load %arg5[%c0_9, %c0_10] : memref<10x1xf32, #tpu.memory_space<vmem>>, vector<10x1xf32>
    %12 = vector.broadcast %11 : vector<10x1xf32> to vector<10x16xf32>
    %13 = arith.addf %10, %12 : vector<10x16xf32>
    %cst_11 = arith.constant dense<0xFF800000> : vector<16xf32>
    %14 = vector.multi_reduction <maximumf>, %13, %cst_11 [0] : vector<10x16xf32> to vector<16xf32>
    %15 = vector.shape_cast %14 : vector<16xf32> to vector<1x16xf32>
    %16 = vector.broadcast %15 : vector<1x16xf32> to vector<10x16xf32>
    %17 = arith.subf %13, %16 : vector<10x16xf32>
    %18 = math.exp %17 : vector<10x16xf32>
    %cst_12 = arith.constant dense<0.000000e+00> : vector<16xf32>
    %19 = vector.multi_reduction <add>, %18, %cst_12 [0] : vector<10x16xf32> to vector<16xf32>
    %20 = vector.shape_cast %19 : vector<16xf32> to vector<1x16xf32>
    %21 = math.log %20 : vector<1x16xf32>
    %22 = vector.broadcast %21 : vector<1x16xf32> to vector<10x16xf32>
    %23 = arith.subf %17, %22 : vector<10x16xf32>
    %c0_13 = arith.constant 0 : index
    %c0_14 = arith.constant 0 : index
    %24 = vector.load %arg6[%c0_13, %c0_14] : memref<10x16xf32, #tpu.memory_space<vmem>>, vector<10x16xf32>
    tpu.vector_store %arg6[%c0_13, %c0_14], %23 {strides = array<i32>} : memref<10x16xf32, #tpu.memory_space<vmem>>, vector<10x16xf32>,
    return
  }
  func.func @transform_0(%arg0: i32) -> (i32, i32) {
    %c0_i32 = arith.constant 0 : i32
    %c0_i32_0 = arith.constant 0 : i32
    return %c0_i32, %arg0 : i32, i32
  }
  func.func @transform_1(%arg0: i32) -> (i32, i32) {
    %c0_i32 = arith.constant 0 : i32
    %c0_i32_0 = arith.constant 0 : i32
    %c0_i32_1 = arith.constant 0 : i32
    return %c0_i32, %c0_i32_0 : i32, i32
  }
  func.func @transform_2(%arg0: i32) -> (i32, i32) {
    %c0_i32 = arith.constant 0 : i32
    %c0_i32_0 = arith.constant 0 : i32
    %c0_i32_1 = arith.constant 0 : i32
    return %c0_i32, %c0_i32_0 : i32, i32
  }
  func.func @transform_3(%arg0: i32) -> (i32, i32) {
    %c0_i32 = arith.constant 0 : i32
    %c0_i32_0 = arith.constant 0 : i32
    %c0_i32_1 = arith.constant 0 : i32
    return %c0_i32, %c0_i32_0 : i32, i32
  }
  func.func @transform_4(%arg0: i32) -> (i32, i32) {
    %c0_i32 = arith.constant 0 : i32
    %c0_i32_0 = arith.constant 0 : i32
    %c0_i32_1 = arith.constant 0 : i32
    return %c0_i32, %c0_i32_0 : i32, i32
  }
  func.func @transform_5(%arg0: i32) -> (i32, i32) {
    %c0_i32 = arith.constant 0 : i32
    %c0_i32_0 = arith.constant 0 : i32
    return %c0_i32, %arg0 : i32, i32
  }
}

</mosaic_0001>

<llo_original>
// kernel: net1_forward.3
$region0: #{net1_forward.3}
  #allocation0 [shape = 'u32[]', space=smem, size = 0x4, offset = 0x4, fixed_abs, tag = 'smem constant byte address 0x4 - core index']
  #allocation1 [shape = 'u32[144,128]{1,0:T(1,128)}', space=vmem, size = 0x12000, scoped, tag = 'internal scratch']
  %s0 = inlined_call_operand.vmem [shape: bf16[20,25], index: 0, kind: input, shape index: {}]
  %s1 = inlined_call_operand.vmem [shape: bf16[4,25,2304], index: 1, kind: input, shape index: {}]
  %s2 = inlined_call_operand.vmem [shape: f32[20,1], index: 2, kind: input, shape index: {}]
  %s3 = inlined_call_operand.vmem [shape: bf16[20,2304], index: 3, kind: output, shape index: {}]
  %s4 = sld [smem:[#allocation0]]
  $region93: #{net1_forward.3} parent=0
    _
  %s6 = ssub.s32 1, %s4
  %s7 = scalar_select 0, %s6, %s4
  $region1: #{net1_forward.3} parent=0
    #allocation2 [shape = 'u8[589824]{0}', space=vmem, size = 0x90000, scoped, tag = 'input window, operand 1']
    #allocation3 [shape = 'u8[110592]{0}', space=vmem, size = 0x1b000, scoped, tag = 'output window, operand 0']
    loop: start=0, step=1, limit=4
    $region2: #{net1_forward.3} parent=1 // loop_pre_header
      _
    $region3: #{net1_forward.3} parent=1 // loop_header
      %s9 = sphi 0, %s13
      %p10 = scmp.ge.s32.totalorder %s9, 4
      %s17 = sphi 0, %s17
      %s19 = sphi 0, %s17
      %s20 = sphi 0, %s19
      %s34 = sphi 0, %s20
      %s40 = sphi 0, %s42
      %s43 = sphi 0, %s40
      %s44 = sphi 0, %s43
      %s60 = sphi 0, %s44
      %s64 = sphi 0, %s64
      %s66 = sphi 0, %s64
      %s67 = sphi 0, %s66
      %s81 = sphi 0, %s67
      %s87 = sphi 0, %s89
      %s90 = sphi 0, %s87
      %s91 = sphi 0, %s90
      %s107 = sphi 0, %s91
    $region4: #{net1_forward.3} parent=1 // loop_header_branch
      %12 = sbr.rel (%p10) target = $region8
    $region5: #{net1_forward.3} parent=1 // loop_body
      %s14 = ssub.s32 %s9, 1
      %s15 = ssub.s32 %s9, 2
      %s16 = sadd.s32 %s9, 1
      %s18 = sadd.s32 %s17, 1
      %p21 = scmp.eq.s32.totalorder %s9, 1
      %p22 = scmp.ne.s32.totalorder %s17, %s19
      %p23 = scmp.eq.s32.totalorder %s9, 0
      %p24 = por %p22, %p23
      %p25 = scmp.ne.s32.totalorder %s17, %s19
      %p26 = scmp.eq.s32.totalorder %s14, 1
      %p27 = por %p25, %p26
      %p28 = scmp.ne.s32.totalorder %s19, %s20
      %p29 = scmp.eq.s32.totalorder %s14, 0
      %p30 = por %p28, %p29
      %p31 = scmp.ne.s32.totalorder %s19, %s20
      %p32 = scmp.eq.s32.totalorder %s15, 1
      %p33 = por %p31, %p32
      %p35 = scmp.ne.s32.totalorder %s20, %s34
      %p36 = scmp.eq.s32.totalorder %s15, 0
      %p37 = por %p35, %p36
      %s38 = ssub.s32 %s9, %s16
      %p39 = scmp.eq.s32.totalorder %s38, 0
      %s41 = sadd.s32 %s40, 1
      %s42 = scalar_select %p39, %s40, %s41
      %p45 = pneg %p39
      %p46 = scmp.eq.s32.totalorder %s9, 1
      %p47 = por %p45, %p46
      %p48 = scmp.ne.s32.totalorder %s40, %s43
      %p49 = scmp.eq.s32.totalorder %s9, 0
      %p50 = por %p48, %p49
      %p51 = scmp.ne.s32.totalorder %s40, %s43
      %p52 = scmp.eq.s32.totalorder %s14, 1
      %p53 = por %p51, %p52
      %p54 = scmp.ne.s32.totalorder %s43, %s44
      %p55 = scmp.eq.s32.totalorder %s14, 0
      %p56 = por %p54, %p55
      %p57 = scmp.ne.s32.totalorder %s43, %s44
      %p58 = scmp.eq.s32.totalorder %s15, 1
      %p59 = por %p57, %p58
      %p61 = scmp.ne.s32.totalorder %s44, %s60
      %p62 = scmp.eq.s32.totalorder %s15, 0
      %p63 = por %p61, %p62
      %s65 = sadd.s32 %s64, 1
      %p68 = scmp.eq.s32.totalorder %s9, 1
      %p69 = scmp.ne.s32.totalorder %s64, %s66
      %p70 = scmp.eq.s32.totalorder %s9, 0
      %p71 = por %p69, %p70
      %p72 = scmp.ne.s32.totalorder %s64, %s66
      %p73 = scmp.eq.s32.totalorder %s14, 1
      %p74 = por %p72, %p73
      %p75 = scmp.ne.s32.totalorder %s66, %s67
      %p76 = scmp.eq.s32.totalorder %s14, 0
      %p77 = por %p75, %p76
      %p78 = scmp.ne.s32.totalorder %s66, %s67
      %p79 = scmp.eq.s32.totalorder %s15, 1
      %p80 = por %p78, %p79
      %p82 = scmp.ne.s32.totalorder %s67, %s81
      %p83 = scmp.eq.s32.totalorder %s15, 0
      %p84 = por %p82, %p83
      %s85 = ssub.s32 %s9, %s16
      %p86 = scmp.eq.s32.totalorder %s85, 0
      %s88 = sadd.s32 %s87, 1
      %s89 = scalar_select %p86, %s87, %s88
      %p92 = pneg %p86
      %p93 = scmp.eq.s32.totalorder %s9, 1
      %p94 = por %p92, %p93
      %p95 = scmp.ne.s32.totalorder %s87, %s90
      %p96 = scmp.eq.s32.totalorder %s9, 0
      %p97 = por %p95, %p96
      %p98 = scmp.ne.s32.totalorder %s87, %s90
      %p99 = scmp.eq.s32.totalorder %s14, 1
      %p100 = por %p98, %p99
      %p101 = scmp.ne.s32.totalorder %s90, %s91
      %p102 = scmp.eq.s32.totalorder %s14, 0
      %p103 = por %p101, %p102
      %p104 = scmp.ne.s32.totalorder %s90, %s91
      %p105 = scmp.eq.s32.totalorder %s15, 1
      %p106 = por %p104, %p105
      %p108 = scmp.ne.s32.totalorder %s91, %s107
      %p109 = scmp.eq.s32.totalorder %s15, 0
      %p110 = por %p108, %p109
      %p111 = scmp.le.s32.totalorder 1, %s9
      %p112 = scmp.lt.s32.totalorder %s9, 3
      %p113 = pnand %p111, %p112
      %p114 = pneg %p113
      // Predicated region
      $region9: #{net1_forward.3} parent=5 // pred_check
        _
      $region10: #{net1_forward.3} parent=5 // pred_check_branch
        %116 = sbr.rel (%p113) target = $region12
      $region11: #{net1_forward.3} parent=5 // pred_region
        %s117 = ssub.s32 %s9, 1
        // Predicated region
        $region13: #{net1_forward.3} parent=11 // pred_check
          %p118 = pneg %p30
        $region14: #{net1_forward.3} parent=11 // pred_check_branch
          %120 = sbr.rel (%p118) target = $region16
        $region15: #{net1_forward.3} parent=11 // pred_region
          _
        $region16: #{net1_forward.3} parent=11 // pred_fallthru
          _
        // Predicated region
        $region17: #{net1_forward.3} parent=11 // pred_check
          %p121 = pneg %p77
        $region18: #{net1_forward.3} parent=11 // pred_check_branch
          %123 = sbr.rel (%p121) target = $region20
        $region19: #{net1_forward.3} parent=11 // pred_region
          _
        $region20: #{net1_forward.3} parent=11 // pred_fallthru
          _
      $region12: #{net1_forward.3} parent=5 // pred_fallthru
        _
      %p124 = scmp.lt.s32.totalorder %s9, 2
      // Predicated region
      $region21: #{net1_forward.3} parent=5 // pred_check
        %p125 = pneg %p124
      $region22: #{net1_forward.3} parent=5 // pred_check_branch
        %127 = sbr.rel (%p125) target = $region24
      $region23: #{net1_forward.3} parent=5 // pred_region
        // Predicated region
        $region25: #{net1_forward.3} parent=23 // pred_check
          %p128 = pneg %p50
        $region26: #{net1_forward.3} parent=23 // pred_check_branch
          %130 = sbr.rel (%p128) target = $region28
        $region27: #{net1_forward.3} parent=23 // pred_region
          %s131 = sand.u32 %s40, 1
          %s132 = sand.u32 %s40, 1
          %s133 = smul.addr %s132, 576
          %s134 = scalar_lea.vmem [#allocation2], %s133
          %s135 = smul.u32 9, %s9
          %s136 = smul.addr %s135, 4
          %s137 = scalar_lea.vmem %s1, %s136
          // Predicated region
          $region29: #{net1_forward.3} parent=27 // pred_check
            _
          $region30: #{net1_forward.3} parent=27 // pred_check_branch
            %139 = sbr.rel (0) target = $region32
          $region31: #{net1_forward.3} parent=27 // pred_region
            // Predicated region
            $region33: #{net1_forward.3} parent=31 // pred_check
              _
            $region34: #{net1_forward.3} parent=31 // pred_check_branch
              %141 = sbr.rel (0) target = $region36
            $region35: #{net1_forward.3} parent=31 // pred_region
              %s142 = scalar_lea.vmem %s137, 32
              %s143 = scalar_lea.vmem %s134, 32 [#allocation2]
              loop: start=0, step=1, limit=1
              $region37: #{net1_forward.3} parent=35 // loop_pre_header
                _
              $region38: #{net1_forward.3} parent=35 // loop_header
                %s145 = sphi 0, %s149
                %p146 = scmp.ge.s32.totalorder %s145, 1
                %s150 = sphi %s137, %s137
                %s151 = sphi %s134, %s134
              $region39: #{net1_forward.3} parent=35 // loop_header_branch
                %148 = sbr.rel (%p146) target = $region43
              $region40: #{net1_forward.3} parent=35 // loop_body
                %v152 = vld [vmem:[%s150] sm:$0xff]
                %153 = vst [vmem:[%s151] sm:$0xff] %v152
                %v154 = vld [vmem:[%s150 + $0x8] sm:$0xff]
                %155 = vst [vmem:[%s151 + $0x8] sm:$0xff] %v154
                %v156 = vld [vmem:[%s150 + $0x10] sm:$0xff]
                %157 = vst [vmem:[%s151 + $0x10] sm:$0xff] %v156
                %v158 = vld [vmem:[%s150 + $0x18] sm:$0xff]
                %159 = vst [vmem:[%s151 + $0x18] sm:$0xff] %v158
                %v160 = vld [vmem:[%s150 + $0x48] sm:$0xff]
                %161 = vst [vmem:[%s151 + $0x24] sm:$0xff] %v160
                %v162 = vld [vmem:[%s150 + $0x50] sm:$0xff]
                %163 = vst [vmem:[%s151 + $0x2c] sm:$0xff] %v162
                %v164 = vld [vmem:[%s150 + $0x58] sm:$0xff]
                %165 = vst [vmem:[%s151 + $0x34] sm:$0xff] %v164
                %v166 = vld [vmem:[%s150 + $0x60] sm:$0xff]
                %167 = vst [vmem:[%s151 + $0x3c] sm:$0xff] %v166
                %v168 = vld [vmem:[%s150 + $0x90] sm:$0xff]
                %169 = vst [vmem:[%s151 + $0x48] sm:$0xff] %v168
                %v170 = vld [vmem:[%s150 + $0x98] sm:$0xff]
                %171 = vst [vmem:[%s151 + $0x50] sm:$0xff] %v170
                %v172 = vld [vmem:[%s150 + $0xa0] sm:$0xff]
                %173 = vst [vmem:[%s151 + $0x58] sm:$0xff] %v172
                %v174 = vld [vmem:[%s150 + $0xa8] sm:$0xff]
                %175 = vst [vmem:[%s151 + $0x60] sm:$0xff] %v174
                %v176 = vld [vmem:[%s150 + $0xd8] sm:$0xff]
                %177 = vst [vmem:[%s151 + $0x6c] sm:$0xff] %v176
                %v178 = vld [vmem:[%s150 + $0xe0] sm:$0xff]
                %179 = vst [vmem:[%s151 + $0x74] sm:$0xff] %v178
                %v180 = vld [vmem:[%s150 + $0xe8] sm:$0xff]
                %181 = vst [vmem:[%s151 + $0x7c] sm:$0xff] %v180
                %v182 = vld [vmem:[%s150 + $0xf0] sm:$0xff]
                %183 = vst [vmem:[%s151 + $0x84] sm:$0xff] %v182
                %v184 = vld [vmem:[%s150 + $0x120] sm:$0xff]
                %185 = vst [vmem:[%s151 + $0x90] sm:$0xff] %v184
                %v186 = vld [vmem:[%s150 + $0x128] sm:$0xff]
                %187 = vst [vmem:[%s151 + $0x98] sm:$0xff] %v186
                %v188 = vld [vmem:[%s150 + $0x130] sm:$0xff]
                %189 = vst [vmem:[%s151 + $0xa0] sm:$0xff] %v188
                %v190 = vld [vmem:[%s150 + $0x138] sm:$0xff]
                %191 = vst [vmem:[%s151 + $0xa8] sm:$0xff] %v190
                %v192 = vld [vmem:[%s150 + $0x168] sm:$0xff]
                %193 = vst [vmem:[%s151 + $0xb4] sm:$0xff] %v192
                %v194 = vld [vmem:[%s150 + $0x170] sm:$0xff]
                %195 = vst [vmem:[%s151 + $0xbc] sm:$0xff] %v194
                %v196 = vld [vmem:[%s150 + $0x178] sm:$0xff]
                %197 = vst [vmem:[%s151 + $0xc4] sm:$0xff] %v196
                %v198 = vld [vmem:[%s150 + $0x180] sm:$0xff]
                %199 = vst [vmem:[%s151 + $0xcc] sm:$0xff] %v198
                %v200 = vld [vmem:[%s150 + $0x1b0] sm:$0xff]
                %201 = vst [vmem:[%s151 + $0xd8] sm:$0xff] %v200
                %v202 = vld [vmem:[%s150 + $0x1b8] sm:$0xff]
                %203 = vst [vmem:[%s151 + $0xe0] sm:$0xff] %v202
                %v204 = vld [vmem:[%s150 + $0x1c0] sm:$0xff]
                %205 = vst [vmem:[%s151 + $0xe8] sm:$0xff] %v204
                %v206 = vld [vmem:[%s150 + $0x1c8] sm:$0xff]
                %207 = vst [vmem:[%s151 + $0xf0] sm:$0xff] %v206
                %v208 = vld [vmem:[%s150 + $0x1f8] sm:$0xff]
                %209 = vst [vmem:[%s151 + $0xfc] sm:$0xff] %v208
                %v210 = vld [vmem:[%s150 + $0x200] sm:$0xff]
                %211 = vst [vmem:[%s151 + $0x104] sm:$0xff] %v210
                %v212 = vld [vmem:[%s150 + $0x208] sm:$0xff]
                %213 = vst [vmem:[%s151 + $0x10c] sm:$0xff] %v212
                %v214 = vld [vmem:[%s150 + $0x210] sm:$0xff]
                %215 = vst [vmem:[%s151 + $0x114] sm:$0xff] %v214
                %v216 = vld [vmem:[%s150 + $0x240] sm:$0xff]
                %217 = vst [vmem:[%s151 + $0x120] sm:$0xff] %v216
                %v218 = vld [vmem:[%s150 + $0x248] sm:$0xff]
                %219 = vst [vmem:[%s151 + $0x128] sm:$0xff] %v218
                %v220 = vld [vmem:[%s150 + $0x250] sm:$0xff]
                %221 = vst [vmem:[%s151 + $0x130] sm:$0xff] %v220
                %v222 = vld [vmem:[%s150 + $0x258] sm:$0xff]
                %223 = vst [vmem:[%s151 + $0x138] sm:$0xff] %v222
                %v224 = vld [vmem:[%s150 + $0x288] sm:$0xff]
                %225 = vst [vmem:[%s151 + $0x144] sm:$0xff] %v224
                %v226 = vld [vmem:[%s150 + $0x290] sm:$0xff]
                %227 = vst [vmem:[%s151 + $0x14c] sm:$0xff] %v226
                %v228 = vld [vmem:[%s150 + $0x298] sm:$0xff]
                %229 = vst [vmem:[%s151 + $0x154] sm:$0xff] %v228
                %v230 = vld [vmem:[%s150 + $0x2a0] sm:$0xff]
                %231 = vst [vmem:[%s151 + $0x15c] sm:$0xff] %v230
                %v232 = vld [vmem:[%s150 + $0x2d0] sm:$0xff]
                %233 = vst [vmem:[%s151 + $0x168] sm:$0xff] %v232
                %v234 = vld [vmem:[%s150 + $0x2d8] sm:$0xff]
                %235 = vst [vmem:[%s151 + $0x170] sm:$0xff] %v234
                %v236 = vld [vmem:[%s150 + $0x2e0] sm:$0xff]
                %237 = vst [vmem:[%s151 + $0x178] sm:$0xff] %v236
                %v238 = vld [vmem:[%s150 + $0x2e8] sm:$0xff]
                %239 = vst [vmem:[%s151 + $0x180] sm:$0xff] %v238
                %v240 = vld [vmem:[%s150 + $0x318] sm:$0xff]
                %241 = vst [vmem:[%s151 + $0x18c] sm:$0xff] %v240
                %v242 = vld [vmem:[%s150 + $0x320] sm:$0xff]
                %243 = vst [vmem:[%s151 + $0x194] sm:$0xff] %v242
                %v244 = vld [vmem:[%s150 + $0x328] sm:$0xff]
                %245 = vst [vmem:[%s151 + $0x19c] sm:$0xff] %v244
                %v246 = vld [vmem:[%s150 + $0x330] sm:$0xff]
                %247 = vst [vmem:[%s151 + $0x1a4] sm:$0xff] %v246
                %v248 = vld [vmem:[%s150 + $0x360] sm:$0xff]
                %249 = vst [vmem:[%s151 + $0x1b0] sm:$0xff] %v248
                %v250 = vld [vmem:[%s150 + $0x368] sm:$0xff]
                %251 = vst [vmem:[%s151 + $0x1b8] sm:$0xff] %v250
                %v252 = vld [vmem:[%s150 + $0x370] sm:$0xff]
                %253 = vst [vmem:[%s151 + $0x1c0] sm:$0xff] %v252
                %v254 = vld [vmem:[%s150 + $0x378] sm:$0xff]
                %255 = vst [vmem:[%s151 + $0x1c8] sm:$0xff] %v254
                %v256 = vld [vmem:[%s150 + $0x3a8] sm:$0xff]
                %257 = vst [vmem:[%s151 + $0x1d4] sm:$0xff] %v256
                %v258 = vld [vmem:[%s150 + $0x3b0] sm:$0xff]
                %259 = vst [vmem:[%s151 + $0x1dc] sm:$0xff] %v258
                %v260 = vld [vmem:[%s150 + $0x3b8] sm:$0xff]
                %261 = vst [vmem:[%s151 + $0x1e4] sm:$0xff] %v260
                %v262 = vld [vmem:[%s150 + $0x3c0] sm:$0xff]
                %263 = vst [vmem:[%s151 + $0x1ec] sm:$0xff] %v262
                %v264 = vld [vmem:[%s150 + $0x3f0] sm:$0xff]
                %265 = vst [vmem:[%s151 + $0x1f8] sm:$0xff] %v264
                %v266 = vld [vmem:[%s150 + $0x3f8] sm:$0xff]
                %267 = vst [vmem:[%s151 + $0x200] sm:$0xff] %v266
                %v268 = vld [vmem:[%s150 + $0x400] sm:$0xff]
                %269 = vst [vmem:[%s151 + $0x208] sm:$0xff] %v268
                %v270 = vld [vmem:[%s150 + $0x408] sm:$0xff]
                %271 = vst [vmem:[%s151 + $0x210] sm:$0xff] %v270
                %v272 = vld [vmem:[%s150 + $0x438] sm:$0xff]
                %273 = vst [vmem:[%s151 + $0x21c] sm:$0xff] %v272
                %v274 = vld [vmem:[%s150 + $0x440] sm:$0xff]
                %275 = vst [vmem:[%s151 + $0x224] sm:$0xff] %v274
                %v276 = vld [vmem:[%s150 + $0x448] sm:$0xff]
                %277 = vst [vmem:[%s151 + $0x22c] sm:$0xff] %v276
                %v278 = vld [vmem:[%s150 + $0x450] sm:$0xff]
                %279 = vst [vmem:[%s151 + $0x234] sm:$0xff] %v278
              $region41: #{net1_forward.3} parent=35 // loop_footer
                %s149 = sadd.s32 1, %s145
              $region42: #{net1_forward.3} parent=35 // loop_footer_branch
                %144 = sbr.rel target = $region38
              $region43: #{net1_forward.3} parent=35 // loop_exit
                _
              loop: start=0, step=1, limit=1
              $region44: #{net1_forward.3} parent=35 // loop_pre_header
                _
              $region45: #{net1_forward.3} parent=35 // loop_header
                %s282 = sphi 0, %s286
                %p283 = scmp.ge.s32.totalorder %s282, 1
                %s287 = sphi %s142, %s142
                %s288 = sphi %s143, %s143
              $region46: #{net1_forward.3} parent=35 // loop_header_branch
                %285 = sbr.rel (%p283) target = $region50
              $region47: #{net1_forward.3} parent=35 // loop_body
                %v289 = vld [vmem:[%s287] sm:$0xf]
                %290 = vst [vmem:[%s288] sm:$0xf] %v289
                %v291 = vld [vmem:[%s287 + $0x48] sm:$0xf]
                %292 = vst [vmem:[%s288 + $0x24] sm:$0xf] %v291
                %v293 = vld [vmem:[%s287 + $0x90] sm:$0xf]
                %294 = vst [vmem:[%s288 + $0x48] sm:$0xf] %v293
                %v295 = vld [vmem:[%s287 + $0xd8] sm:$0xf]
                %296 = vst [vmem:[%s288 + $0x6c] sm:$0xf] %v295
                %v297 = vld [vmem:[%s287 + $0x120] sm:$0xf]
                %298 = vst [vmem:[%s288 + $0x90] sm:$0xf] %v297
                %v299 = vld [vmem:[%s287 + $0x168] sm:$0xf]
                %300 = vst [vmem:[%s288 + $0xb4] sm:$0xf] %v299
                %v301 = vld [vmem:[%s287 + $0x1b0] sm:$0xf]
                %302 = vst [vmem:[%s288 + $0xd8] sm:$0xf] %v301
                %v303 = vld [vmem:[%s287 + $0x1f8] sm:$0xf]
                %304 = vst [vmem:[%s288 + $0xfc] sm:$0xf] %v303
                %v305 = vld [vmem:[%s287 + $0x240] sm:$0xf]
                %306 = vst [vmem:[%s288 + $0x120] sm:$0xf] %v305
                %v307 = vld [vmem:[%s287 + $0x288] sm:$0xf]
                %308 = vst [vmem:[%s288 + $0x144] sm:$0xf] %v307
                %v309 = vld [vmem:[%s287 + $0x2d0] sm:$0xf]
                %310 = vst [vmem:[%s288 + $0x168] sm:$0xf] %v309
                %v311 = vld [vmem:[%s287 + $0x318] sm:$0xf]
                %312 = vst [vmem:[%s288 + $0x18c] sm:$0xf] %v311
                %v313 = vld [vmem:[%s287 + $0x360] sm:$0xf]
                %314 = vst [vmem:[%s288 + $0x1b0] sm:$0xf] %v313
                %v315 = vld [vmem:[%s287 + $0x3a8] sm:$0xf]
                %316 = vst [vmem:[%s288 + $0x1d4] sm:$0xf] %v315
                %v317 = vld [vmem:[%s287 + $0x3f0] sm:$0xf]
                %318 = vst [vmem:[%s288 + $0x1f8] sm:$0xf] %v317
                %v319 = vld [vmem:[%s287 + $0x438] sm:$0xf]
                %320 = vst [vmem:[%s288 + $0x21c] sm:$0xf] %v319
              $region48: #{net1_forward.3} parent=35 // loop_footer
                %s286 = sadd.s32 1, %s282
              $region49: #{net1_forward.3} parent=35 // loop_footer_branch
                %281 = sbr.rel target = $region45
              $region50: #{net1_forward.3} parent=35 // loop_exit
                _
            $region36: #{net1_forward.3} parent=31 // pred_fallthru
              _
          $region32: #{net1_forward.3} parent=27 // pred_fallthru
            _
          %321 = vnop
        $region28: #{net1_forward.3} parent=23 // pred_fallthru
          _
      $region24: #{net1_forward.3} parent=5 // pred_fallthru
        _
      %p322 = scmp.le.s32.totalorder 1, %s9
      %p323 = scmp.lt.s32.totalorder %s9, 3
      %p324 = pnand %p322, %p323
      %p325 = pneg %p324
      // Predicated region
      $region51: #{net1_forward.3} parent=5 // pred_check
        _
      $region52: #{net1_forward.3} parent=5 // pred_check_branch
        %327 = sbr.rel (%p324) target = $region54
      $region53: #{net1_forward.3} parent=5 // pred_region
        %s328 = ssub.s32 %s9, 1
        %s329 = sand.u32 %s43, 1
        %s330 = sand.u32 %s43, 1
        %s331 = smul.addr %s330, 576
        %s332 = scalar_lea.vmem [#allocation2], %s331
        // Predicated region
        $region55: #{net1_forward.3} parent=53 // pred_check
          %p333 = pneg %p56
        $region56: #{net1_forward.3} parent=53 // pred_check_branch
          %335 = sbr.rel (%p333) target = $region58
        $region57: #{net1_forward.3} parent=53 // pred_region
          _
        $region58: #{net1_forward.3} parent=53 // pred_fallthru
          _
        %p336 = pneg %p30
        %p337 = pneg %p27
        %s338 = sand.u32 %s43, 1
        %s339 = sand.u32 %s43, 1
        %s340 = smul.addr %s339, 576
        %s341 = scalar_lea.vmem [#allocation2], %s340
        %p342 = pneg %p56
        %p343 = pneg %p53
        %p344 = pneg %p77
        %p345 = pneg %p74
        %p346 = pneg %p103
        %p347 = pneg %p100
        %s348 = sand.u32 %s90, 1
        %s349 = sand.u32 %s90, 1
        %s350 = smul.addr %s349, 108
        %s351 = scalar_lea.vmem [#allocation3], %s350
        %s352 = smul.u32 9, %s14
        %s353 = smul.u32 9, %s14
        %v355 = vld [vmem:[%s0] sm:$0xf]
        %v356 = vld [vmem:[%s0 + $0x4] sm:$0xf]
        %v357 = vld [vmem:[%s0 + $0x8] sm:$0x3]
        %v358 = vld [vmem:[%s332] sm:$0xff]
        %v359 = vld [vmem:[%s332 + $0x8] sm:$0xff]
        %v360 = vld [vmem:[%s332 + $0x10] sm:$0xff]
        %v361 = vld [vmem:[%s332 + $0x18] sm:$0xff]
        %v362 = vld [vmem:[%s332 + $0x20] sm:$0xf]
        %v363 = vld [vmem:[%s332 + $0x24] sm:$0xff]
        %v364 = vld [vmem:[%s332 + $0x2c] sm:$0xff]
        %v365 = vld [vmem:[%s332 + $0x34] sm:$0xff]
        %v366 = vld [vmem:[%s332 + $0x3c] sm:$0xff]
        %v367 = vld [vmem:[%s332 + $0x44] sm:$0xf]
        %v368 = vld [vmem:[%s332 + $0x48] sm:$0xff]
        %v369 = vld [vmem:[%s332 + $0x50] sm:$0xff]
        %v370 = vld [vmem:[%s332 + $0x58] sm:$0xff]
        %v371 = vld [vmem:[%s332 + $0x60] sm:$0xff]
        %v372 = vld [vmem:[%s332 + $0x68] sm:$0xf]
        %v373 = vld [vmem:[%s332 + $0x6c] sm:$0x11]
        %v374 = vld [vmem:[%s332 + $0x74] sm:$0x11]
        %v375 = vld [vmem:[%s332 + $0x7c] sm:$0x11]
        %v376 = vld [vmem:[%s332 + $0x84] sm:$0x11]
        %v377 = vld [vmem:[%s332 + $0x8c] sm:$0x1]
        %v381 = vunpack.c.l.b16 %v355
        %v382 = vunpack.c.l.b16 %v356
        %v383 = vunpack.c.l.b16 %v357
        %v384 = vpack.c.b16 %v382, %v381
        %v385 = vpack.c.b16 %v383, %v383
        %v406 = vunpack.c.l.b16 %v358
        %v407 = vunpack.c.h.b16 %v358
        %v408 = vunpack.c.l.b16 %v359
        %v409 = vunpack.c.h.b16 %v359
        %v410 = vunpack.c.l.b16 %v360
        %v411 = vunpack.c.h.b16 %v360
        %v412 = vunpack.c.l.b16 %v361
        %v413 = vunpack.c.h.b16 %v361
        %v414 = vunpack.c.l.b16 %v362
        %v415 = vunpack.c.l.b16 %v363
        %v416 = vunpack.c.h.b16 %v363
        %v417 = vunpack.c.l.b16 %v364
        %v418 = vunpack.c.h.b16 %v364
        %v419 = vunpack.c.l.b16 %v365
        %v420 = vunpack.c.h.b16 %v365
        %v421 = vunpack.c.l.b16 %v366
        %v422 = vunpack.c.h.b16 %v366
        %v423 = vunpack.c.l.b16 %v367
        %v424 = vunpack.c.l.b16 %v368
        %v425 = vunpack.c.h.b16 %v368
        %v426 = vunpack.c.l.b16 %v369
        %v427 = vunpack.c.h.b16 %v369
        %v428 = vunpack.c.l.b16 %v370
        %v429 = vunpack.c.h.b16 %v370
        %v430 = vunpack.c.l.b16 %v371
        %v431 = vunpack.c.h.b16 %v371
        %v432 = vunpack.c.l.b16 %v372
        %v433 = vunpack.c.l.b16 %v373
        %v434 = vunpack.c.h.b16 %v373
        %v435 = vunpack.c.l.b16 %v374
        %v436 = vunpack.c.h.b16 %v374
        %v437 = vunpack.c.l.b16 %v375
        %v438 = vunpack.c.h.b16 %v375
        %v439 = vunpack.c.l.b16 %v376
        %v440 = vunpack.c.h.b16 %v376
        %v441 = vunpack.c.l.b16 %v377
        %v442 = vpack.c.b16 %v415, %v406
        %v443 = vpack.c.b16 %v416, %v407
        %v444 = vpack.c.b16 %v417, %v408
        %v445 = vpack.c.b16 %v418, %v409
        %v446 = vpack.c.b16 %v419, %v410
        %v447 = vpack.c.b16 %v420, %v411
        %v448 = vpack.c.b16 %v421, %v412
        %v449 = vpack.c.b16 %v422, %v413
        %v450 = vpack.c.b16 %v423, %v414
        %v451 = vpack.c.b16 %v433, %v424
        %v452 = vpack.c.b16 %v434, %v425
        %v453 = vpack.c.b16 %v435, %v426
        %v454 = vpack.c.b16 %v436, %v427
        %v455 = vpack.c.b16 %v437, %v428
        %v456 = vpack.c.b16 %v438, %v429
        %v457 = vpack.c.b16 %v439, %v430
        %v458 = vpack.c.b16 %v440, %v431
        %v459 = vpack.c.b16 %v441, %v432
        %vm469 = vcmask 203776
        %v471 = vsel %vm469, %v384, 0
        %v474 = vsel %vm469, %v385, 0
        %vm476 = vcmask 1043456
        %vm477 = vcmask 1044480
        %v478 = vsel %vm476, 4294967295, 65535
        %v479 = vsel %vm477, %v478, 0
        %v481 = vand.u32 %v451, %v479
        %v484 = vand.u32 %v452, %v479
        %v487 = vand.u32 %v453, %v479
        %v490 = vand.u32 %v454, %v479
        %v493 = vand.u32 %v455, %v479
        %v496 = vand.u32 %v456, %v479
        %v499 = vand.u32 %v457, %v479
        %v502 = vand.u32 %v458, %v479
        %v505 = vand.u32 %v459, %v479
        %507 = vmatprep.subr.bf16.mxu0 %v443
        %508 = vmatpush1.bf16.msra.mxu0 %v442
        %509 = vmatprep.subr.bf16.mxu0 %v484
        %510 = vmatpush1.bf16.msra.mxu0 %v481
        %511 = vmatprep.subr.bf16.mxu0 0
        %512 = vmatpush1.bf16.msra.mxu0 0
        %513 = vmatprep.subr.bf16.mxu0 0
        %514 = vmatpush1.bf16.msra.mxu0 0
        %515 = vmatprep.subr.bf16.mxu0 0
        %516 = vmatpush1.bf16.msra.mxu0 0
        %517 = vmatprep.subr.bf16.mxu0 0
        %518 = vmatpush1.bf16.msra.mxu0 0
        %519 = vmatprep.subr.bf16.mxu0 0
        %520 = vmatpush1.bf16.msra.mxu0 0
        %521 = vmatprep.subr.bf16.mxu0 0
        %522 = vmatpush1.bf16.msra.mxu0 0
        %523 = vmatprep.subr.bf16.mxu0 0
        %524 = vmatpush1.bf16.msra.mxu0 0
        %525 = vmatprep.subr.bf16.mxu0 0
        %526 = vmatpush1.bf16.msra.mxu0 0
        %527 = vmatprep.subr.bf16.mxu0 0
        %528 = vmatpush1.bf16.msra.mxu0 0
        %529 = vmatprep.subr.bf16.mxu0 0
        %530 = vmatpush1.bf16.msra.mxu0 0
        %531 = vmatprep.subr.bf16.mxu0 0
        %532 = vmatpush1.bf16.msra.mxu0 0
        %533 = vmatprep.subr.bf16.mxu0 0
        %534 = vmatpush1.bf16.msra.mxu0 0
        %535 = vmatprep.subr.bf16.mxu0 0
        %536 = vmatpush1.bf16.msra.mxu0 0
        %537 = vmatprep.subr.bf16.mxu0 0
        %538 = vmatpush1.bf16.msra.mxu0 0
        %539 = vmatprep.mubr.bf16.mxu0 0
        %540 = vmatmul.mubr.bf16.gmra.mrb[0].mxu0 %v471
        %v541 = vpop.f32.mrb[0].mxu0
        %v542 = vadd.f32 0.0, %v541
        %v543 = vpop.f32.mrb[0].mxu0
        %v544 = vadd.f32 0.0, %v543
        %v545 = vpop.f32.mrb[0].mxu0
        %v546 = vadd.f32 0.0, %v545
        %v547 = vpop.f32.mrb[0].mxu0
        %v548 = vadd.f32 0.0, %v547
        %549 = vmatprep.mubr.bf16.mxu0 0
        %550 = vmatmul.mubr.bf16.gmra.mrb[0].mxu0 %v474
        %v551 = vpop.f32.mrb[0].mxu0
        %v552 = vadd.f32 0.0, %v551
        %v553 = vpop.f32.mrb[0].mxu0
        %v554 = vadd.f32 0.0, %v553
        %v555 = vpop.f32.mrb[0].mxu0
        %v556 = vpop.f32.mrb[0].mxu0
        %557 = vdwg.mxu0
        %558 = vmatprep.subr.bf16.mxu0 %v445
        %559 = vmatpush1.bf16.msra.mxu0 %v444
        %560 = vmatprep.subr.bf16.mxu0 %v490
        %561 = vmatpush1.bf16.msra.mxu0 %v487
        %562 = vmatprep.subr.bf16.mxu0 0
        %563 = vmatpush1.bf16.msra.mxu0 0
        %564 = vmatprep.subr.bf16.mxu0 0
        %565 = vmatpush1.bf16.msra.mxu0 0
        %566 = vmatprep.subr.bf16.mxu0 0
        %567 = vmatpush1.bf16.msra.mxu0 0
        %568 = vmatprep.subr.bf16.mxu0 0
        %569 = vmatpush1.bf16.msra.mxu0 0
        %570 = vmatprep.subr.bf16.mxu0 0
        %571 = vmatpush1.bf16.msra.mxu0 0
        %572 = vmatprep.subr.bf16.mxu0 0
        %573 = vmatpush1.bf16.msra.mxu0 0
        %574 = vmatprep.subr.bf16.mxu0 0
        %575 = vmatpush1.bf16.msra.mxu0 0
        %576 = vmatprep.subr.bf16.mxu0 0
        %577 = vmatpush1.bf16.msra.mxu0 0
        %578 = vmatprep.subr.bf16.mxu0 0
        %579 = vmatpush1.bf16.msra.mxu0 0
        %580 = vmatprep.subr.bf16.mxu0 0
        %581 = vmatpush1.bf16.msra.mxu0 0
        %582 = vmatprep.subr.bf16.mxu0 0
        %583 = vmatpush1.bf16.msra.mxu0 0
        %584 = vmatprep.subr.bf16.mxu0 0
        %585 = vmatpush1.bf16.msra.mxu0 0
        %586 = vmatprep.subr.bf16.mxu0 0
        %587 = vmatpush1.bf16.msra.mxu0 0
        %588 = vmatprep.subr.bf16.mxu0 0
        %589 = vmatpush1.bf16.msra.mxu0 0
        %590 = vmatprep.mubr.bf16.mxu0 0
        %591 = vmatmul.mubr.bf16.gmra.mrb[0].mxu0 %v471
        %v592 = vpop.f32.mrb[0].mxu0
        %v593 = vadd.f32 0.0, %v592
        %v594 = vpop.f32.mrb[0].mxu0
        %v595 = vadd.f32 0.0, %v594
        %v596 = vpop.f32.mrb[0].mxu0
        %v597 = vadd.f32 0.0, %v596
        %v598 = vpop.f32.mrb[0].mxu0
        %v599 = vadd.f32 0.0, %v598
        %600 = vmatprep.mubr.bf16.mxu0 0
        %601 = vmatmul.mubr.bf16.gmra.mrb[0].mxu0 %v474
        %v602 = vpop.f32.mrb[0].mxu0
        %v603 = vadd.f32 0.0, %v602
        %v604 = vpop.f32.mrb[0].mxu0
        %v605 = vadd.f32 0.0, %v604
        %v606 = vpop.f32.mrb[0].mxu0
        %v607 = vpop.f32.mrb[0].mxu0
        %608 = vdwg.mxu0
        %609 = vmatprep.subr.bf16.mxu0 %v447
        %610 = vmatpush1.bf16.msra.mxu0 %v446
        %611 = vmatprep.subr.bf16.mxu0 %v496
        %612 = vmatpush1.bf16.msra.mxu0 %v493
        %613 = vmatprep.subr.bf16.mxu0 0
        %614 = vmatpush1.bf16.msra.mxu0 0
        %615 = vmatprep.subr.bf16.mxu0 0
        %616 = vmatpush1.bf16.msra.mxu0 0
        %617 = vmatprep.subr.bf16.mxu0 0
        %618 = vmatpush1.bf16.msra.mxu0 0
        %619 = vmatprep.subr.bf16.mxu0 0
        %620 = vmatpush1.bf16.msra.mxu0 0
        %621 = vmatprep.subr.bf16.mxu0 0
        %622 = vmatpush1.bf16.msra.mxu0 0
        %623 = vmatprep.subr.bf16.mxu0 0
        %624 = vmatpush1.bf16.msra.mxu0 0
        %625 = vmatprep.subr.bf16.mxu0 0
        %626 = vmatpush1.bf16.msra.mxu0 0
        %627 = vmatprep.subr.bf16.mxu0 0
        %628 = vmatpush1.bf16.msra.mxu0 0
        %629 = vmatprep.subr.bf16.mxu0 0
        %630 = vmatpush1.bf16.msra.mxu0 0
        %631 = vmatprep.subr.bf16.mxu0 0
        %632 = vmatpush1.bf16.msra.mxu0 0
        %633 = vmatprep.subr.bf16.mxu0 0
        %634 = vmatpush1.bf16.msra.mxu0 0
        %635 = vmatprep.subr.bf16.mxu0 0
        %636 = vmatpush1.bf16.msra.mxu0 0
        %637 = vmatprep.subr.bf16.mxu0 0
        %638 = vmatpush1.bf16.msra.mxu0 0
        %639 = vmatprep.subr.bf16.mxu0 0
        %640 = vmatpush1.bf16.msra.mxu0 0
        %641 = vmatprep.mubr.bf16.mxu0 0
        %642 = vmatmul.mubr.bf16.gmra.mrb[0].mxu0 %v471
        %v643 = vpop.f32.mrb[0].mxu0
        %v644 = vadd.f32 0.0, %v643
        %v645 = vpop.f32.mrb[0].mxu0
        %v646 = vadd.f32 0.0, %v645
        %v647 = vpop.f32.mrb[0].mxu0
        %v648 = vadd.f32 0.0, %v647
        %v649 = vpop.f32.mrb[0].mxu0
        %v650 = vadd.f32 0.0, %v649
        %651 = vmatprep.mubr.bf16.mxu0 0
        %652 = vmatmul.mubr.bf16.gmra.mrb[0].mxu0 %v474
        %v653 = vpop.f32.mrb[0].mxu0
        %v654 = vadd.f32 0.0, %v653
        %v655 = vpop.f32.mrb[0].mxu0
        %v656 = vadd.f32 0.0, %v655
        %v657 = vpop.f32.mrb[0].mxu0
        %v658 = vpop.f32.mrb[0].mxu0
        %659 = vdwg.mxu0
        %660 = vmatprep.subr.bf16.mxu0 %v449
        %661 = vmatpush1.bf16.msra.mxu0 %v448
        %662 = vmatprep.subr.bf16.mxu0 %v502
        %663 = vmatpush1.bf16.msra.mxu0 %v499
        %664 = vmatprep.subr.bf16.mxu0 0
        %665 = vmatpush1.bf16.msra.mxu0 0
        %666 = vmatprep.subr.bf16.mxu0 0
        %667 = vmatpush1.bf16.msra.mxu0 0
        %668 = vmatprep.subr.bf16.mxu0 0
        %669 = vmatpush1.bf16.msra.mxu0 0
        %670 = vmatprep.subr.bf16.mxu0 0
        %671 = vmatpush1.bf16.msra.mxu0 0
        %672 = vmatprep.subr.bf16.mxu0 0
        %673 = vmatpush1.bf16.msra.mxu0 0
        %674 = vmatprep.subr.bf16.mxu0 0
        %675 = vmatpush1.bf16.msra.mxu0 0
        %676 = vmatprep.subr.bf16.mxu0 0
        %677 = vmatpush1.bf16.msra.mxu0 0
        %678 = vmatprep.subr.bf16.mxu0 0
        %679 = vmatpush1.bf16.msra.mxu0 0
        %680 = vmatprep.subr.bf16.mxu0 0
        %681 = vmatpush1.bf16.msra.mxu0 0
        %682 = vmatprep.subr.bf16.mxu0 0
        %683 = vmatpush1.bf16.msra.mxu0 0
        %684 = vmatprep.subr.bf16.mxu0 0
        %685 = vmatpush1.bf16.msra.mxu0 0
        %686 = vmatprep.subr.bf16.mxu0 0
        %687 = vmatpush1.bf16.msra.mxu0 0
        %688 = vmatprep.subr.bf16.mxu0 0
        %689 = vmatpush1.bf16.msra.mxu0 0
        %690 = vmatprep.subr.bf16.mxu0 0
        %691 = vmatpush1.bf16.msra.mxu0 0
        %692 = vmatprep.mubr.bf16.mxu0 0
        %693 = vmatmul.mubr.bf16.gmra.mrb[0].mxu0 %v471
        %v694 = vpop.f32.mrb[0].mxu0
        %v695 = vadd.f32 0.0, %v694
        %v696 = vpop.f32.mrb[0].mxu0
        %v697 = vadd.f32 0.0, %v696
        %v698 = vpop.f32.mrb[0].mxu0
        %v699 = vadd.f32 0.0, %v698
        %v700 = vpop.f32.mrb[0].mxu0
        %v701 = vadd.f32 0.0, %v700
        %702 = vmatprep.mubr.bf16.mxu0 0
        %703 = vmatmul.mubr.bf16.gmra.mrb[0].mxu0 %v474
        %v704 = vpop.f32.mrb[0].mxu0
        %v705 = vadd.f32 0.0, %v704
        %v706 = vpop.f32.mrb[0].mxu0
        %v707 = vadd.f32 0.0, %v706
        %v708 = vpop.f32.mrb[0].mxu0
        %v709 = vpop.f32.mrb[0].mxu0
        %710 = vdwg.mxu0
        %711 = vmatprep.subr.bf16.mxu0 0
        %712 = vmatpush1.bf16.msra.mxu0 %v450
        %713 = vmatprep.subr.bf16.mxu0 0
        %714 = vmatpush1.bf16.msra.mxu0 %v505
        %715 = vmatprep.subr.bf16.mxu0 0
        %716 = vmatpush1.bf16.msra.mxu0 0
        %717 = vmatprep.subr.bf16.mxu0 0
        %718 = vmatpush1.bf16.msra.mxu0 0
        %719 = vmatprep.subr.bf16.mxu0 0
        %720 = vmatpush1.bf16.msra.mxu0 0
        %721 = vmatprep.subr.bf16.mxu0 0
        %722 = vmatpush1.bf16.msra.mxu0 0
        %723 = vmatprep.subr.bf16.mxu0 0
        %724 = vmatpush1.bf16.msra.mxu0 0
        %725 = vmatprep.subr.bf16.mxu0 0
        %726 = vmatpush1.bf16.msra.mxu0 0
        %727 = vmatprep.subr.bf16.mxu0 0
        %728 = vmatpush1.bf16.msra.mxu0 0
        %729 = vmatprep.subr.bf16.mxu0 0
        %730 = vmatpush1.bf16.msra.mxu0 0
        %731 = vmatprep.subr.bf16.mxu0 0
        %732 = vmatpush1.bf16.msra.mxu0 0
        %733 = vmatprep.subr.bf16.mxu0 0
        %734 = vmatpush1.bf16.msra.mxu0 0
        %735 = vmatprep.subr.bf16.mxu0 0
        %736 = vmatpush1.bf16.msra.mxu0 0
        %737 = vmatprep.subr.bf16.mxu0 0
        %738 = vmatpush1.bf16.msra.mxu0 0
        %739 = vmatprep.subr.bf16.mxu0 0
        %740 = vmatpush1.bf16.msra.mxu0 0
        %741 = vmatprep.subr.bf16.mxu0 0
        %742 = vmatpush1.bf16.msra.mxu0 0
        %743 = vmatprep.mubr.bf16.mxu0 0
        %744 = vmatmul.mubr.bf16.gmra.mrb[0].mxu0 %v471
        %v745 = vpop.f32.mrb[0].mxu0
        %v746 = vadd.f32 0.0, %v745
        %v747 = vpop.f32.mrb[0].mxu0
        %v748 = vpop.f32.mrb[0].mxu0
        %v749 = vadd.f32 0.0, %v748
        %v750 = vpop.f32.mrb[0].mxu0
        %751 = vmatprep.mubr.bf16.mxu0 0
        %752 = vmatmul.mubr.bf16.gmra.mrb[0].mxu0 %v474
        %v753 = vpop.f32.mrb[0].mxu0
        %v754 = vadd.f32 0.0, %v753
        %v755 = vpop.f32.mrb[0].mxu0
        %v756 = vpop.f32.mrb[0].mxu0
        %v757 = vpop.f32.mrb[0].mxu0
        %758 = vdwg.mxu0
        %s759 = scalar_lea.vmem %s332, 144 [#allocation2]
        %v760 = vld [vmem:[%s759] sm:$0xff]
        %v761 = vld [vmem:[%s759 + $0x8] sm:$0xff]
        %v762 = vld [vmem:[%s759 + $0x10] sm:$0xff]
        %v763 = vld [vmem:[%s759 + $0x18] sm:$0xff]
        %v764 = vld [vmem:[%s759 + $0x20] sm:$0xf]
        %v765 = vld [vmem:[%s759 + $0x24] sm:$0xff]
        %v766 = vld [vmem:[%s759 + $0x2c] sm:$0xff]
        %v767 = vld [vmem:[%s759 + $0x34] sm:$0xff]
        %v768 = vld [vmem:[%s759 + $0x3c] sm:$0xff]
        %v769 = vld [vmem:[%s759 + $0x44] sm:$0xf]
        %v770 = vld [vmem:[%s759 + $0x48] sm:$0xff]
        %v771 = vld [vmem:[%s759 + $0x50] sm:$0xff]
        %v772 = vld [vmem:[%s759 + $0x58] sm:$0xff]
        %v773 = vld [vmem:[%s759 + $0x60] sm:$0xff]
        %v774 = vld [vmem:[%s759 + $0x68] sm:$0xf]
        %v775 = vld [vmem:[%s759 + $0x6c] sm:$0x11]
        %v776 = vld [vmem:[%s759 + $0x74] sm:$0x11]
        %v777 = vld [vmem:[%s759 + $0x7c] sm:$0x11]
        %v778 = vld [vmem:[%s759 + $0x84] sm:$0x11]
        %v779 = vld [vmem:[%s759 + $0x8c] sm:$0x1]
        %v800 = vunpack.c.l.b16 %v760
        %v801 = vunpack.c.h.b16 %v760
        %v802 = vunpack.c.l.b16 %v761
        %v803 = vunpack.c.h.b16 %v761
        %v804 = vunpack.c.l.b16 %v762
        %v805 = vunpack.c.h.b16 %v762
        %v806 = vunpack.c.l.b16 %v763
        %v807 = vunpack.c.h.b16 %v763
        %v808 = vunpack.c.l.b16 %v764
        %v809 = vunpack.c.l.b16 %v765
        %v810 = vunpack.c.h.b16 %v765
        %v811 = vunpack.c.l.b16 %v766
        %v812 = vunpack.c.h.b16 %v766
        %v813 = vunpack.c.l.b16 %v767
        %v814 = vunpack.c.h.b16 %v767
        %v815 = vunpack.c.l.b16 %v768
        %v816 = vunpack.c.h.b16 %v768
        %v817 = vunpack.c.l.b16 %v769
        %v818 = vunpack.c.l.b16 %v770
        %v819 = vunpack.c.h.b16 %v770
        %v820 = vunpack.c.l.b16 %v771
        %v821 = vunpack.c.h.b16 %v771
        %v822 = vunpack.c.l.b16 %v772
        %v823 = vunpack.c.h.b16 %v772
        %v824 = vunpack.c.l.b16 %v773
        %v825 = vunpack.c.h.b16 %v773
        %v826 = vunpack.c.l.b16 %v774
        %v827 = vunpack.c.l.b16 %v775
        %v828 = vunpack.c.h.b16 %v775
        %v829 = vunpack.c.l.b16 %v776
        %v830 = vunpack.c.h.b16 %v776
        %v831 = vunpack.c.l.b16 %v777
        %v832 = vunpack.c.h.b16 %v777
        %v833 = vunpack.c.l.b16 %v778
        %v834 = vunpack.c.h.b16 %v778
        %v835 = vunpack.c.l.b16 %v779
        %v836 = vpack.c.b16 %v809, %v800
        %v837 = vpack.c.b16 %v810, %v801
        %v838 = vpack.c.b16 %v811, %v802
        %v839 = vpack.c.b16 %v812, %v803
        %v840 = vpack.c.b16 %v813, %v804
        %v841 = vpack.c.b16 %v814, %v805
        %v842 = vpack.c.b16 %v815, %v806
        %v843 = vpack.c.b16 %v816, %v807
        %v844 = vpack.c.b16 %v817, %v808
        %v845 = vpack.c.b16 %v827, %v818
        %v846 = vpack.c.b16 %v828, %v819
        %v847 = vpack.c.b16 %v829, %v820
        %v848 = vpack.c.b16 %v830, %v821
        %v849 = vpack.c.b16 %v831, %v822
        %v850 = vpack.c.b16 %v832, %v823
        %v851 = vpack.c.b16 %v833, %v824
        %v852 = vpack.c.b16 %v834, %v825
        %v853 = vpack.c.b16 %v835, %v826
        %v864 = vand.u32 %v845, %v479
        %v867 = vand.u32 %v846, %v479
        %v870 = vand.u32 %v847, %v479
        %v873 = vand.u32 %v848, %v479
        %v876 = vand.u32 %v849, %v479
        %v879 = vand.u32 %v850, %v479
        %v882 = vand.u32 %v851, %v479
        %v885 = vand.u32 %v852, %v479
        %v888 = vand.u32 %v853, %v479
        %890 = vmatprep.subr.bf16.mxu0 %v837
        %891 = vmatpush1.bf16.msra.mxu0 %v836
        %892 = vmatprep.subr.bf16.mxu0 %v867
        %893 = vmatpush1.bf16.msra.mxu0 %v864
        %894 = vmatprep.subr.bf16.mxu0 0
        %895 = vmatpush1.bf16.msra.mxu0 0
        %896 = vmatprep.subr.bf16.mxu0 0
        %897 = vmatpush1.bf16.msra.mxu0 0
        %898 = vmatprep.subr.bf16.mxu0 0
        %899 = vmatpush1.bf16.msra.mxu0 0
        %900 = vmatprep.subr.bf16.mxu0 0
        %901 = vmatpush1.bf16.msra.mxu0 0
        %902 = vmatprep.subr.bf16.mxu0 0
        %903 = vmatpush1.bf16.msra.mxu0 0
        %904 = vmatprep.subr.bf16.mxu0 0
        %905 = vmatpush1.bf16.msra.mxu0 0
        %906 = vmatprep.subr.bf16.mxu0 0
        %907 = vmatpush1.bf16.msra.mxu0 0
        %908 = vmatprep.subr.bf16.mxu0 0
        %909 = vmatpush1.bf16.msra.mxu0 0
        %910 = vmatprep.subr.bf16.mxu0 0
        %911 = vmatpush1.bf16.msra.mxu0 0
        %912 = vmatprep.subr.bf16.mxu0 0
        %913 = vmatpush1.bf16.msra.mxu0 0
        %914 = vmatprep.subr.bf16.mxu0 0
        %915 = vmatpush1.bf16.msra.mxu0 0
        %916 = vmatprep.subr.bf16.mxu0 0
        %917 = vmatpush1.bf16.msra.mxu0 0
        %918 = vmatprep.subr.bf16.mxu0 0
        %919 = vmatpush1.bf16.msra.mxu0 0
        %920 = vmatprep.subr.bf16.mxu0 0
        %921 = vmatpush1.bf16.msra.mxu0 0
        %922 = vmatprep.mubr.bf16.mxu0 0
        %923 = vmatmul.mubr.bf16.gmra.mrb[0].mxu0 %v471
        %v924 = vpop.f32.mrb[0].mxu0
        %v925 = vadd.f32 0.0, %v924
        %v926 = vpop.f32.mrb[0].mxu0
        %v927 = vadd.f32 0.0, %v926
        %v928 = vpop.f32.mrb[0].mxu0
        %v929 = vadd.f32 0.0, %v928
        %v930 = vpop.f32.mrb[0].mxu0
        %v931 = vadd.f32 0.0, %v930
        %932 = vmatprep.mubr.bf16.mxu0 0
        %933 = vmatmul.mubr.bf16.gmra.mrb[0].mxu0 %v474
        %v934 = vpop.f32.mrb[0].mxu0
        %v935 = vadd.f32 0.0, %v934
        %v936 = vpop.f32.mrb[0].mxu0
        %v937 = vadd.f32 0.0, %v936
        %v938 = vpop.f32.mrb[0].mxu0
        %v939 = vpop.f32.mrb[0].mxu0
        %940 = vdwg.mxu0
        %941 = vmatprep.subr.bf16.mxu0 %v839
        %942 = vmatpush1.bf16.msra.mxu0 %v838
        %943 = vmatprep.subr.bf16.mxu0 %v873
        %944 = vmatpush1.bf16.msra.mxu0 %v870
        %945 = vmatprep.subr.bf16.mxu0 0
        %946 = vmatpush1.bf16.msra.mxu0 0
        %947 = vmatprep.subr.bf16.mxu0 0
        %948 = vmatpush1.bf16.msra.mxu0 0
        %949 = vmatprep.subr.bf16.mxu0 0
        %950 = vmatpush1.bf16.msra.mxu0 0
        %951 = vmatprep.subr.bf16.mxu0 0
        %952 = vmatpush1.bf16.msra.mxu0 0
        %953 = vmatprep.subr.bf16.mxu0 0
        %954 = vmatpush1.bf16.msra.mxu0 0
        %955 = vmatprep.subr.bf16.mxu0 0
        %956 = vmatpush1.bf16.msra.mxu0 0
        %957 = vmatprep.subr.bf16.mxu0 0
        %958 = vmatpush1.bf16.msra.mxu0 0
        %959 = vmatprep.subr.bf16.mxu0 0
        %960 = vmatpush1.bf16.msra.mxu0 0
        %961 = vmatprep.subr.bf16.mxu0 0
        %962 = vmatpush1.bf16.msra.mxu0 0
        %963 = vmatprep.subr.bf16.mxu0 0
        %964 = vmatpush1.bf16.msra.mxu0 0
        %965 = vmatprep.subr.bf16.mxu0 0
        %966 = vmatpush1.bf16.msra.mxu0 0
        %967 = vmatprep.subr.bf16.mxu0 0
        %968 = vmatpush1.bf16.msra.mxu0 0
        %969 = vmatprep.subr.bf16.mxu0 0
        %970 = vmatpush1.bf16.msra.mxu0 0
        %971 = vmatprep.subr.bf16.mxu0 0
        %972 = vmatpush1.bf16.msra.mxu0 0
        %973 = vmatprep.mubr.bf16.mxu0 0
        %974 = vmatmul.mubr.bf16.gmra.mrb[0].mxu0 %v471
        %v975 = vpop.f32.mrb[0].mxu0
        %v976 = vadd.f32 0.0, %v975
        %v977 = vpop.f32.mrb[0].mxu0
        %v978 = vadd.f32 0.0, %v977
        %v979 = vpop.f32.mrb[0].mxu0
        %v980 = vadd.f32 0.0, %v979
        %v981 = vpop.f32.mrb[0].mxu0
        %v982 = vadd.f32 0.0, %v981
        %983 = vmatprep.mubr.bf16.mxu0 0
        %984 = vmatmul.mubr.bf16.gmra.mrb[0].mxu0 %v474
        %v985 = vpop.f32.mrb[0].mxu0
        %v986 = vadd.f32 0.0, %v985
        %v987 = vpop.f32.mrb[0].mxu0
        %v988 = vadd.f32 0.0, %v987
        %v989 = vpop.f32.mrb[0].mxu0
        %v990 = vpop.f32.mrb[0].mxu0
        %991 = vdwg.mxu0
        %992 = vmatprep.subr.bf16.mxu0 %v841
        %993 = vmatpush1.bf16.msra.mxu0 %v840
        %994 = vmatprep.subr.bf16.mxu0 %v879
        %995 = vmatpush1.bf16.msra.mxu0 %v876
        %996 = vmatprep.subr.bf16.mxu0 0
        %997 = vmatpush1.bf16.msra.mxu0 0
        %998 = vmatprep.subr.bf16.mxu0 0
        %999 = vmatpush1.bf16.msra.mxu0 0
        %1000 = vmatprep.subr.bf16.mxu0 0
        %1001 = vmatpush1.bf16.msra.mxu0 0
        %1002 = vmatprep.subr.bf16.mxu0 0
        %1003 = vmatpush1.bf16.msra.mxu0 0
        %1004 = vmatprep.subr.bf16.mxu0 0
        %1005 = vmatpush1.bf16.msra.mxu0 0
        %1006 = vmatprep.subr.bf16.mxu0 0
        %1007 = vmatpush1.bf16.msra.mxu0 0
        %1008 = vmatprep.subr.bf16.mxu0 0
        %1009 = vmatpush1.bf16.msra.mxu0 0
        %1010 = vmatprep.subr.bf16.mxu0 0
        %1011 = vmatpush1.bf16.msra.mxu0 0
        %1012 = vmatprep.subr.bf16.mxu0 0
        %1013 = vmatpush1.bf16.msra.mxu0 0
        %1014 = vmatprep.subr.bf16.mxu0 0
        %1015 = vmatpush1.bf16.msra.mxu0 0
        %1016 = vmatprep.subr.bf16.mxu0 0
        %1017 = vmatpush1.bf16.msra.mxu0 0
        %1018 = vmatprep.subr.bf16.mxu0 0
        %1019 = vmatpush1.bf16.msra.mxu0 0
        %1020 = vmatprep.subr.bf16.mxu0 0
        %1021 = vmatpush1.bf16.msra.mxu0 0
        %1022 = vmatprep.subr.bf16.mxu0 0
        %1023 = vmatpush1.bf16.msra.mxu0 0
        %1024 = vmatprep.mubr.bf16.mxu0 0
        %1025 = vmatmul.mubr.bf16.gmra.mrb[0].mxu0 %v471
        %v1026 = vpop.f32.mrb[0].mxu0
        %v1027 = vadd.f32 0.0, %v1026
        %v1028 = vpop.f32.mrb[0].mxu0
        %v1029 = vadd.f32 0.0, %v1028
        %v1030 = vpop.f32.mrb[0].mxu0
        %v1031 = vadd.f32 0.0, %v1030
        %v1032 = vpop.f32.mrb[0].mxu0
        %v1033 = vadd.f32 0.0, %v1032
        %1034 = vmatprep.mubr.bf16.mxu0 0
        %1035 = vmatmul.mubr.bf16.gmra.mrb[0].mxu0 %v474
        %v1036 = vpop.f32.mrb[0].mxu0
        %v1037 = vadd.f32 0.0, %v1036
        %v1038 = vpop.f32.mrb[0].mxu0
        %v1039 = vadd.f32 0.0, %v1038
        %v1040 = vpop.f32.mrb[0].mxu0
        %v1041 = vpop.f32.mrb[0].mxu0
        %1042 = vdwg.mxu0
        %1043 = vmatprep.subr.bf16.mxu0 %v843
        %1044 = vmatpush1.bf16.msra.mxu0 %v842
        %1045 = vmatprep.subr.bf16.mxu0 %v885
        %1046 = vmatpush1.bf16.msra.mxu0 %v882
        %1047 = vmatprep.subr.bf16.mxu0 0
        %1048 = vmatpush1.bf16.msra.mxu0 0
        %1049 = vmatprep.subr.bf16.mxu0 0
        %1050 = vmatpush1.bf16.msra.mxu0 0
        %1051 = vmatprep.subr.bf16.mxu0 0
        %1052 = vmatpush1.bf16.msra.mxu0 0
        %1053 = vmatprep.subr.bf16.mxu0 0
        %1054 = vmatpush1.bf16.msra.mxu0 0
        %1055 = vmatprep.subr.bf16.mxu0 0
        %1056 = vmatpush1.bf16.msra.mxu0 0
        %1057 = vmatprep.subr.bf16.mxu0 0
        %1058 = vmatpush1.bf16.msra.mxu0 0
        %1059 = vmatprep.subr.bf16.mxu0 0
        %1060 = vmatpush1.bf16.msra.mxu0 0
        %1061 = vmatprep.subr.bf16.mxu0 0
        %1062 = vmatpush1.bf16.msra.mxu0 0
        %1063 = vmatprep.subr.bf16.mxu0 0
        %1064 = vmatpush1.bf16.msra.mxu0 0
        %1065 = vmatprep.subr.bf16.mxu0 0
        %1066 = vmatpush1.bf16.msra.mxu0 0
        %1067 = vmatprep.subr.bf16.mxu0 0
        %1068 = vmatpush1.bf16.msra.mxu0 0
        %1069 = vmatprep.subr.bf16.mxu0 0
        %1070 = vmatpush1.bf16.msra.mxu0 0
        %1071 = vmatprep.subr.bf16.mxu0 0
        %1072 = vmatpush1.bf16.msra.mxu0 0
        %1073 = vmatprep.subr.bf16.mxu0 0
        %1074 = vmatpush1.bf16.msra.mxu0 0
        %1075 = vmatprep.mubr.bf16.mxu0 0
        %1076 = vmatmul.mubr.bf16.gmra.mrb[0].mxu0 %v471
        %v1077 = vpop.f32.mrb[0].mxu0
        %v1078 = vadd.f32 0.0, %v1077
        %v1079 = vpop.f32.mrb[0].mxu0
        %v1080 = vadd.f32 0.0, %v1079
        %v1081 = vpop.f32.mrb[0].mxu0
        %v1082 = vadd.f32 0.0, %v1081
        %v1083 = vpop.f32.mrb[0].mxu0
        %v1084 = vadd.f32 0.0, %v1083
        %1085 = vmatprep.mubr.bf16.mxu0 0
        %1086 = vmatmul.mubr.bf16.gmra.mrb[0].mxu0 %v474
        %v1087 = vpop.f32.mrb[0].mxu0
        %v1088 = vadd.f32 0.0, %v1087
        %v1089 = vpop.f32.mrb[0].mxu0
        %v1090 = vadd.f32 0.0, %v1089
        %v1091 = vpop.f32.mrb[0].mxu0
        %v1092 = vpop.f32.mrb[0].mxu0
        %1093 = vdwg.mxu0
        %1094 = vmatprep.subr.bf16.mxu0 0
        %1095 = vmatpush1.bf16.msra.mxu0 %v844
        %1096 = vmatprep.subr.bf16.mxu0 0
        %1097 = vmatpush1.bf16.msra.mxu0 %v888
        %1098 = vmatprep.subr.bf16.mxu0 0
        %1099 = vmatpush1.bf16.msra.mxu0 0
        %1100 = vmatprep.subr.bf16.mxu0 0
        %1101 = vmatpush1.bf16.msra.mxu0 0
        %1102 = vmatprep.subr.bf16.mxu0 0
        %1103 = vmatpush1.bf16.msra.mxu0 0
        %1104 = vmatprep.subr.bf16.mxu0 0
        %1105 = vmatpush1.bf16.msra.mxu0 0
        %1106 = vmatprep.subr.bf16.mxu0 0
        %1107 = vmatpush1.bf16.msra.mxu0 0
        %1108 = vmatprep.subr.bf16.mxu0 0
        %1109 = vmatpush1.bf16.msra.mxu0 0
        %1110 = vmatprep.subr.bf16.mxu0 0
        %1111 = vmatpush1.bf16.msra.mxu0 0
        %1112 = vmatprep.subr.bf16.mxu0 0
        %1113 = vmatpush1.bf16.msra.mxu0 0
        %1114 = vmatprep.subr.bf16.mxu0 0
        %1115 = vmatpush1.bf16.msra.mxu0 0
        %1116 = vmatprep.subr.bf16.mxu0 0
        %1117 = vmatpush1.bf16.msra.mxu0 0
        %1118 = vmatprep.subr.bf16.mxu0 0
        %1119 = vmatpush1.bf16.msra.mxu0 0
        %1120 = vmatprep.subr.bf16.mxu0 0
        %1121 = vmatpush1.bf16.msra.mxu0 0
        %1122 = vmatprep.subr.bf16.mxu0 0
        %1123 = vmatpush1.bf16.msra.mxu0 0
        %1124 = vmatprep.subr.bf16.mxu0 0
        %1125 = vmatpush1.bf16.msra.mxu0 0
        %1126 = vmatprep.mubr.bf16.mxu0 0
        %1127 = vmatmul.mubr.bf16.gmra.mrb[0].mxu0 %v471
        %v1128 = vpop.f32.mrb[0].mxu0
        %v1129 = vadd.f32 0.0, %v1128
        %v1130 = vpop.f32.mrb[0].mxu0
        %v1131 = vpop.f32.mrb[0].mxu0
        %v1132 = vadd.f32 0.0, %v1131
        %v1133 = vpop.f32.mrb[0].mxu0
        %1134 = vmatprep.mubr.bf16.mxu0 0
        %1135 = vmatmul.mubr.bf16.gmra.mrb[0].mxu0 %v474
        %v1136 = vpop.f32.mrb[0].mxu0
        %v1137 = vadd.f32 0.0, %v1136
        %v1138 = vpop.f32.mrb[0].mxu0
        %v1139 = vpop.f32.mrb[0].mxu0
        %v1140 = vpop.f32.mrb[0].mxu0
        %1141 = vdwg.mxu0
        %v1142 = vmax.f32 %v542, %v925
        %v1143 = vmax.f32 %v544, %v927
        %v1144 = vmax.f32 %v593, %v976
        %v1145 = vmax.f32 %v595, %v978
        %v1146 = vmax.f32 %v644, %v1027
        %v1147 = vmax.f32 %v646, %v1029
        %v1148 = vmax.f32 %v695, %v1078
        %v1149 = vmax.f32 %v697, %v1080
        %v1150 = vmax.f32 %v746, %v1129
        %v1151 = vmax.f32 %v546, %v929
        %v1152 = vmax.f32 %v548, %v931
        %v1153 = vmax.f32 %v597, %v980
        %v1154 = vmax.f32 %v599, %v982
        %v1155 = vmax.f32 %v648, %v1031
        %v1156 = vmax.f32 %v650, %v1033
        %v1157 = vmax.f32 %v699, %v1082
        %v1158 = vmax.f32 %v701, %v1084
        %v1159 = vmax.f32 %v749, %v1132
        %v1160 = vmax.f32 %v552, %v935
        %v1161 = vmax.f32 %v554, %v937
        %v1162 = vmax.f32 %v603, %v986
        %v1163 = vmax.f32 %v605, %v988
        %v1164 = vmax.f32 %v654, %v1037
        %v1165 = vmax.f32 %v656, %v1039
        %v1166 = vmax.f32 %v705, %v1088
        %v1167 = vmax.f32 %v707, %v1090
        %v1168 = vmax.f32 %v754, %v1137
        %s1169 = scalar_lea.vmem %s332, 288 [#allocation2]
        %v1170 = vld [vmem:[%s1169] sm:$0xff]
        %v1171 = vld [vmem:[%s1169 + $0x8] sm:$0xff]
        %v1172 = vld [vmem:[%s1169 + $0x10] sm:$0xff]
        %v1173 = vld [vmem:[%s1169 + $0x18] sm:$0xff]
        %v1174 = vld [vmem:[%s1169 + $0x20] sm:$0xf]
        %v1175 = vld [vmem:[%s1169 + $0x24] sm:$0xff]
        %v1176 = vld [vmem:[%s1169 + $0x2c] sm:$0xff]
        %v1177 = vld [vmem:[%s1169 + $0x34] sm:$0xff]
        %v1178 = vld [vmem:[%s1169 + $0x3c] sm:$0xff]
        %v1179 = vld [vmem:[%s1169 + $0x44] sm:$0xf]
        %v1180 = vld [vmem:[%s1169 + $0x48] sm:$0xff]
        %v1181 = vld [vmem:[%s1169 + $0x50] sm:$0xff]
        %v1182 = vld [vmem:[%s1169 + $0x58] sm:$0xff]
        %v1183 = vld [vmem:[%s1169 + $0x60] sm:$0xff]
        %v1184 = vld [vmem:[%s1169 + $0x68] sm:$0xf]
        %v1185 = vld [vmem:[%s1169 + $0x6c] sm:$0x11]
        %v1186 = vld [vmem:[%s1169 + $0x74] sm:$0x11]
        %v1187 = vld [vmem:[%s1169 + $0x7c] sm:$0x11]
        %v1188 = vld [vmem:[%s1169 + $0x84] sm:$0x11]
        %v1189 = vld [vmem:[%s1169 + $0x8c] sm:$0x1]
        %v1210 = vunpack.c.l.b16 %v1170
        %v1211 = vunpack.c.h.b16 %v1170
        %v1212 = vunpack.c.l.b16 %v1171
        %v1213 = vunpack.c.h.b16 %v1171
        %v1214 = vunpack.c.l.b16 %v1172
        %v1215 = vunpack.c.h.b16 %v1172
        %v1216 = vunpack.c.l.b16 %v1173
        %v1217 = vunpack.c.h.b16 %v1173
        %v1218 = vunpack.c.l.b16 %v1174
        %v1219 = vunpack.c.l.b16 %v1175
        %v1220 = vunpack.c.h.b16 %v1175
        %v1221 = vunpack.c.l.b16 %v1176
        %v1222 = vunpack.c.h.b16 %v1176
        %v1223 = vunpack.c.l.b16 %v1177
        %v1224 = vunpack.c.h.b16 %v1177
        %v1225 = vunpack.c.l.b16 %v1178
        %v1226 = vunpack.c.h.b16 %v1178
        %v1227 = vunpack.c.l.b16 %v1179
        %v1228 = vunpack.c.l.b16 %v1180
        %v1229 = vunpack.c.h.b16 %v1180
        %v1230 = vunpack.c.l.b16 %v1181
        %v1231 = vunpack.c.h.b16 %v1181
        %v1232 = vunpack.c.l.b16 %v1182
        %v1233 = vunpack.c.h.b16 %v1182
        %v1234 = vunpack.c.l.b16 %v1183
        %v1235 = vunpack.c.h.b16 %v1183
        %v1236 = vunpack.c.l.b16 %v1184
        %v1237 = vunpack.c.l.b16 %v1185
        %v1238 = vunpack.c.h.b16 %v1185
        %v1239 = vunpack.c.l.b16 %v1186
        %v1240 = vunpack.c.h.b16 %v1186
        %v1241 = vunpack.c.l.b16 %v1187
        %v1242 = vunpack.c.h.b16 %v1187
        %v1243 = vunpack.c.l.b16 %v1188
        %v1244 = vunpack.c.h.b16 %v1188
        %v1245 = vunpack.c.l.b16 %v1189
        %v1246 = vpack.c.b16 %v1219, %v1210
        %v1247 = vpack.c.b16 %v1220, %v1211
        %v1248 = vpack.c.b16 %v1221, %v1212
        %v1249 = vpack.c.b16 %v1222, %v1213
        %v1250 = vpack.c.b16 %v1223, %v1214
        %v1251 = vpack.c.b16 %v1224, %v1215
        %v1252 = vpack.c.b16 %v1225, %v1216
        %v1253 = vpack.c.b16 %v1226, %v1217
        %v1254 = vpack.c.b16 %v1227, %v1218
        %v1255 = vpack.c.b16 %v1237, %v1228
        %v1256 = vpack.c.b16 %v1238, %v1229
        %v1257 = vpack.c.b16 %v1239, %v1230
        %v1258 = vpack.c.b16 %v1240, %v1231
        %v1259 = vpack.c.b16 %v1241, %v1232
        %v1260 = vpack.c.b16 %v1242, %v1233
        %v1261 = vpack.c.b16 %v1243, %v1234
        %v1262 = vpack.c.b16 %v1244, %v1235
        %v1263 = vpack.c.b16 %v1245, %v1236
        %v1274 = vand.u32 %v1255, %v479
        %v1277 = vand.u32 %v1256, %v479
        %v1280 = vand.u32 %v1257, %v479
        %v1283 = vand.u32 %v1258, %v479
        %v1286 = vand.u32 %v1259, %v479
        %v1289 = vand.u32 %v1260, %v479
        %v1292 = vand.u32 %v1261, %v479
        %v1295 = vand.u32 %v1262, %v479
        %v1298 = vand.u32 %v1263, %v479
        %1300 = vmatprep.subr.bf16.mxu0 %v1247
        %1301 = vmatpush1.bf16.msra.mxu0 %v1246
        %1302 = vmatprep.subr.bf16.mxu0 %v1277
        %1303 = vmatpush1.bf16.msra.mxu0 %v1274
        %1304 = vmatprep.subr.bf16.mxu0 0
        %1305 = vmatpush1.bf16.msra.mxu0 0
        %1306 = vmatprep.subr.bf16.mxu0 0
        %1307 = vmatpush1.bf16.msra.mxu0 0
        %1308 = vmatprep.subr.bf16.mxu0 0
        %1309 = vmatpush1.bf16.msra.mxu0 0
        %1310 = vmatprep.subr.bf16.mxu0 0
        %1311 = vmatpush1.bf16.msra.mxu0 0
        %1312 = vmatprep.subr.bf16.mxu0 0
        %1313 = vmatpush1.bf16.msra.mxu0 0
        %1314 = vmatprep.subr.bf16.mxu0 0
        %1315 = vmatpush1.bf16.msra.mxu0 0
        %1316 = vmatprep.subr.bf16.mxu0 0
        %1317 = vmatpush1.bf16.msra.mxu0 0
        %1318 = vmatprep.subr.bf16.mxu0 0
        %1319 = vmatpush1.bf16.msra.mxu0 0
        %1320 = vmatprep.subr.bf16.mxu0 0
        %1321 = vmatpush1.bf16.msra.mxu0 0
        %1322 = vmatprep.subr.bf16.mxu0 0
        %1323 = vmatpush1.bf16.msra.mxu0 0
        %1324 = vmatprep.subr.bf16.mxu0 0
        %1325 = vmatpush1.bf16.msra.mxu0 0
        %1326 = vmatprep.subr.bf16.mxu0 0
        %1327 = vmatpush1.bf16.msra.mxu0 0
        %1328 = vmatprep.subr.bf16.mxu0 0
        %1329 = vmatpush1.bf16.msra.mxu0 0
        %1330 = vmatprep.subr.bf16.mxu0 0
        %1331 = vmatpush1.bf16.msra.mxu0 0
        %1332 = vmatprep.mubr.bf16.mxu0 0
        %1333 = vmatmul.mubr.bf16.gmra.mrb[0].mxu0 %v471
        %v1334 = vpop.f32.mrb[0].mxu0
        %v1335 = vadd.f32 0.0, %v1334
        %v1336 = vpop.f32.mrb[0].mxu0
        %v1337 = vadd.f32 0.0, %v1336
        %v1338 = vpop.f32.mrb[0].mxu0
        %v1339 = vadd.f32 0.0, %v1338
        %v1340 = vpop.f32.mrb[0].mxu0
        %v1341 = vadd.f32 0.0, %v1340
        %1342 = vmatprep.mubr.bf16.mxu0 0
        %1343 = vmatmul.mubr.bf16.gmra.mrb[0].mxu0 %v474
        %v1344 = vpop.f32.mrb[0].mxu0
        %v1345 = vadd.f32 0.0, %v1344
        %v1346 = vpop.f32.mrb[0].mxu0
        %v1347 = vadd.f32 0.0, %v1346
        %v1348 = vpop.f32.mrb[0].mxu0
        %v1349 = vpop.f32.mrb[0].mxu0
        %1350 = vdwg.mxu0
        %1351 = vmatprep.subr.bf16.mxu0 %v1249
        %1352 = vmatpush1.bf16.msra.mxu0 %v1248
        %1353 = vmatprep.subr.bf16.mxu0 %v1283
        %1354 = vmatpush1.bf16.msra.mxu0 %v1280
        %1355 = vmatprep.subr.bf16.mxu0 0
        %1356 = vmatpush1.bf16.msra.mxu0 0
        %1357 = vmatprep.subr.bf16.mxu0 0
        %1358 = vmatpush1.bf16.msra.mxu0 0
        %1359 = vmatprep.subr.bf16.mxu0 0
        %1360 = vmatpush1.bf16.msra.mxu0 0
        %1361 = vmatprep.subr.bf16.mxu0 0
        %1362 = vmatpush1.bf16.msra.mxu0 0
        %1363 = vmatprep.subr.bf16.mxu0 0
        %1364 = vmatpush1.bf16.msra.mxu0 0
        %1365 = vmatprep.subr.bf16.mxu0 0
        %1366 = vmatpush1.bf16.msra.mxu0 0
        %1367 = vmatprep.subr.bf16.mxu0 0
        %1368 = vmatpush1.bf16.msra.mxu0 0
        %1369 = vmatprep.subr.bf16.mxu0 0
        %1370 = vmatpush1.bf16.msra.mxu0 0
        %1371 = vmatprep.subr.bf16.mxu0 0
        %1372 = vmatpush1.bf16.msra.mxu0 0
        %1373 = vmatprep.subr.bf16.mxu0 0
        %1374 = vmatpush1.bf16.msra.mxu0 0
        %1375 = vmatprep.subr.bf16.mxu0 0
        %1376 = vmatpush1.bf16.msra.mxu0 0
        %1377 = vmatprep.subr.bf16.mxu0 0
        %1378 = vmatpush1.bf16.msra.mxu0 0
        %1379 = vmatprep.subr.bf16.mxu0 0
        %1380 = vmatpush1.bf16.msra.mxu0 0
        %1381 = vmatprep.subr.bf16.mxu0 0
        %1382 = vmatpush1.bf16.msra.mxu0 0
        %1383 = vmatprep.mubr.bf16.mxu0 0
        %1384 = vmatmul.mubr.bf16.gmra.mrb[0].mxu0 %v471
        %v1385 = vpop.f32.mrb[0].mxu0
        %v1386 = vadd.f32 0.0, %v1385
        %v1387 = vpop.f32.mrb[0].mxu0
        %v1388 = vadd.f32 0.0, %v1387
        %v1389 = vpop.f32.mrb[0].mxu0
        %v1390 = vadd.f32 0.0, %v1389
        %v1391 = vpop.f32.mrb[0].mxu0
        %v1392 = vadd.f32 0.0, %v1391
        %1393 = vmatprep.mubr.bf16.mxu0 0
        %1394 = vmatmul.mubr.bf16.gmra.mrb[0].mxu0 %v474
        %v1395 = vpop.f32.mrb[0].mxu0
        %v1396 = vadd.f32 0.0, %v1395
        %v1397 = vpop.f32.mrb[0].mxu0
        %v1398 = vadd.f32 0.0, %v1397
        %v1399 = vpop.f32.mrb[0].mxu0
        %v1400 = vpop.f32.mrb[0].mxu0
        %1401 = vdwg.mxu0
        %1402 = vmatprep.subr.bf16.mxu0 %v1251
        %1403 = vmatpush1.bf16.msra.mxu0 %v1250
        %1404 = vmatprep.subr.bf16.mxu0 %v1289
        %1405 = vmatpush1.bf16.msra.mxu0 %v1286
        %1406 = vmatprep.subr.bf16.mxu0 0
        %1407 = vmatpush1.bf16.msra.mxu0 0
        %1408 = vmatprep.subr.bf16.mxu0 0
        %1409 = vmatpush1.bf16.msra.mxu0 0
        %1410 = vmatprep.subr.bf16.mxu0 0
        %1411 = vmatpush1.bf16.msra.mxu0 0
        %1412 = vmatprep.subr.bf16.mxu0 0
        %1413 = vmatpush1.bf16.msra.mxu0 0
        %1414 = vmatprep.subr.bf16.mxu0 0
        %1415 = vmatpush1.bf16.msra.mxu0 0
        %1416 = vmatprep.subr.bf16.mxu0 0
        %1417 = vmatpush1.bf16.msra.mxu0 0
        %1418 = vmatprep.subr.bf16.mxu0 0
        %1419 = vmatpush1.bf16.msra.mxu0 0
        %1420 = vmatprep.subr.bf16.mxu0 0
        %1421 = vmatpush1.bf16.msra.mxu0 0
        %1422 = vmatprep.subr.bf16.mxu0 0
        %1423 = vmatpush1.bf16.msra.mxu0 0
        %1424 = vmatprep.subr.bf16.mxu0 0
        %1425 = vmatpush1.bf16.msra.mxu0 0
        %1426 = vmatprep.subr.bf16.mxu0 0
        %1427 = vmatpush1.bf16.msra.mxu0 0
        %1428 = vmatprep.subr.bf16.mxu0 0
        %1429 = vmatpush1.bf16.msra.mxu0 0
        %1430 = vmatprep.subr.bf16.mxu0 0
        %1431 = vmatpush1.bf16.msra.mxu0 0
        %1432 = vmatprep.subr.bf16.mxu0 0
        %1433 = vmatpush1.bf16.msra.mxu0 0
        %1434 = vmatprep.mubr.bf16.mxu0 0
        %1435 = vmatmul.mubr.bf16.gmra.mrb[0].mxu0 %v471
        %v1436 = vpop.f32.mrb[0].mxu0
        %v1437 = vadd.f32 0.0, %v1436
        %v1438 = vpop.f32.mrb[0].mxu0
        %v1439 = vadd.f32 0.0, %v1438
        %v1440 = vpop.f32.mrb[0].mxu0
        %v1441 = vadd.f32 0.0, %v1440
        %v1442 = vpop.f32.mrb[0].mxu0
        %v1443 = vadd.f32 0.0, %v1442
        %1444 = vmatprep.mubr.bf16.mxu0 0
        %1445 = vmatmul.mubr.bf16.gmra.mrb[0].mxu0 %v474
        %v1446 = vpop.f32.mrb[0].mxu0
        %v1447 = vadd.f32 0.0, %v1446
        %v1448 = vpop.f32.mrb[0].mxu0
        %v1449 = vadd.f32 0.0, %v1448
        %v1450 = vpop.f32.mrb[0].mxu0
        %v1451 = vpop.f32.mrb[0].mxu0
        %1452 = vdwg.mxu0
        %1453 = vmatprep.subr.bf16.mxu0 %v1253
        %1454 = vmatpush1.bf16.msra.mxu0 %v1252
        %1455 = vmatprep.subr.bf16.mxu0 %v1295
        %1456 = vmatpush1.bf16.msra.mxu0 %v1292
        %1457 = vmatprep.subr.bf16.mxu0 0
        %1458 = vmatpush1.bf16.msra.mxu0 0
        %1459 = vmatprep.subr.bf16.mxu0 0
        %1460 = vmatpush1.bf16.msra.mxu0 0
        %1461 = vmatprep.subr.bf16.mxu0 0
        %1462 = vmatpush1.bf16.msra.mxu0 0
        %1463 = vmatprep.subr.bf16.mxu0 0
        %1464 = vmatpush1.bf16.msra.mxu0 0
        %1465 = vmatprep.subr.bf16.mxu0 0
        %1466 = vmatpush1.bf16.msra.mxu0 0
        %1467 = vmatprep.subr.bf16.mxu0 0
        %1468 = vmatpush1.bf16.msra.mxu0 0
        %1469 = vmatprep.subr.bf16.mxu0 0
        %1470 = vmatpush1.bf16.msra.mxu0 0
        %1471 = vmatprep.subr.bf16.mxu0 0
        %1472 = vmatpush1.bf16.msra.mxu0 0
        %1473 = vmatprep.subr.bf16.mxu0 0
        %1474 = vmatpush1.bf16.msra.mxu0 0
        %1475 = vmatprep.subr.bf16.mxu0 0
        %1476 = vmatpush1.bf16.msra.mxu0 0
        %1477 = vmatprep.subr.bf16.mxu0 0
        %1478 = vmatpush1.bf16.msra.mxu0 0
        %1479 = vmatprep.subr.bf16.mxu0 0
        %1480 = vmatpush1.bf16.msra.mxu0 0
        %1481 = vmatprep.subr.bf16.mxu0 0
        %1482 = vmatpush1.bf16.msra.mxu0 0
        %1483 = vmatprep.subr.bf16.mxu0 0
        %1484 = vmatpush1.bf16.msra.mxu0 0
        %1485 = vmatprep.mubr.bf16.mxu0 0
        %1486 = vmatmul.mubr.bf16.gmra.mrb[0].mxu0 %v471
        %v1487 = vpop.f32.mrb[0].mxu0
        %v1488 = vadd.f32 0.0, %v1487
        %v1489 = vpop.f32.mrb[0].mxu0
        %v1490 = vadd.f32 0.0, %v1489
        %v1491 = vpop.f32.mrb[0].mxu0
        %v1492 = vadd.f32 0.0, %v1491
        %v1493 = vpop.f32.mrb[0].mxu0
        %v1494 = vadd.f32 0.0, %v1493
        %1495 = vmatprep.mubr.bf16.mxu0 0
        %1496 = vmatmul.mubr.bf16.gmra.mrb[0].mxu0 %v474
        %v1497 = vpop.f32.mrb[0].mxu0
        %v1498 = vadd.f32 0.0, %v1497
        %v1499 = vpop.f32.mrb[0].mxu0
        %v1500 = vadd.f32 0.0, %v1499
        %v1501 = vpop.f32.mrb[0].mxu0
        %v1502 = vpop.f32.mrb[0].mxu0
        %1503 = vdwg.mxu0
        %1504 = vmatprep.subr.bf16.mxu0 0
        %1505 = vmatpush1.bf16.msra.mxu0 %v1254
        %1506 = vmatprep.subr.bf16.mxu0 0
        %1507 = vmatpush1.bf16.msra.mxu0 %v1298
        %1508 = vmatprep.subr.bf16.mxu0 0
        %1509 = vmatpush1.bf16.msra.mxu0 0
        %1510 = vmatprep.subr.bf16.mxu0 0
        %1511 = vmatpush1.bf16.msra.mxu0 0
        %1512 = vmatprep.subr.bf16.mxu0 0
        %1513 = vmatpush1.bf16.msra.mxu0 0
        %1514 = vmatprep.subr.bf16.mxu0 0
        %1515 = vmatpush1.bf16.msra.mxu0 0
        %1516 = vmatprep.subr.bf16.mxu0 0
        %1517 = vmatpush1.bf16.msra.mxu0 0
        %1518 = vmatprep.subr.bf16.mxu0 0
        %1519 = vmatpush1.bf16.msra.mxu0 0
        %1520 = vmatprep.subr.bf16.mxu0 0
        %1521 = vmatpush1.bf16.msra.mxu0 0
        %1522 = vmatprep.subr.bf16.mxu0 0
        %1523 = vmatpush1.bf16.msra.mxu0 0
        %1524 = vmatprep.subr.bf16.mxu0 0
        %1525 = vmatpush1.bf16.msra.mxu0 0
        %1526 = vmatprep.subr.bf16.mxu0 0
        %1527 = vmatpush1.bf16.msra.mxu0 0
        %1528 = vmatprep.subr.bf16.mxu0 0
        %1529 = vmatpush1.bf16.msra.mxu0 0
        %1530 = vmatprep.subr.bf16.mxu0 0
        %1531 = vmatpush1.bf16.msra.mxu0 0
        %1532 = vmatprep.subr.bf16.mxu0 0
        %1533 = vmatpush1.bf16.msra.mxu0 0
        %1534 = vmatprep.subr.bf16.mxu0 0
        %1535 = vmatpush1.bf16.msra.mxu0 0
        %1536 = vmatprep.mubr.bf16.mxu0 0
        %1537 = vmatmul.mubr.bf16.gmra.mrb[0].mxu0 %v471
        %v1538 = vpop.f32.mrb[0].mxu0
        %v1539 = vadd.f32 0.0, %v1538
        %v1540 = vpop.f32.mrb[0].mxu0
        %v1541 = vpop.f32.mrb[0].mxu0
        %v1542 = vadd.f32 0.0, %v1541
        %v1543 = vpop.f32.mrb[0].mxu0
        %1544 = vmatprep.mubr.bf16.mxu0 0
        %1545 = vmatmul.mubr.bf16.gmra.mrb[0].mxu0 %v474
        %v1546 = vpop.f32.mrb[0].mxu0
        %v1547 = vadd.f32 0.0, %v1546
        %v1548 = vpop.f32.mrb[0].mxu0
        %v1549 = vpop.f32.mrb[0].mxu0
        %v1550 = vpop.f32.mrb[0].mxu0
        %1551 = vdwg.mxu0
        %v1552 = vmax.f32 %v1142, %v1335
        %v1553 = vmax.f32 %v1143, %v1337
        %v1554 = vmax.f32 %v1144, %v1386
        %v1555 = vmax.f32 %v1145, %v1388
        %v1556 = vmax.f32 %v1146, %v1437
        %v1557 = vmax.f32 %v1147, %v1439
        %v1558 = vmax.f32 %v1148, %v1488
        %v1559 = vmax.f32 %v1149, %v1490
        %v1560 = vmax.f32 %v1150, %v1539
        %v1561 = vmax.f32 %v1151, %v1339
        %v1562 = vmax.f32 %v1152, %v1341
        %v1563 = vmax.f32 %v1153, %v1390
        %v1564 = vmax.f32 %v1154, %v1392
        %v1565 = vmax.f32 %v1155, %v1441
        %v1566 = vmax.f32 %v1156, %v1443
        %v1567 = vmax.f32 %v1157, %v1492
        %v1568 = vmax.f32 %v1158, %v1494
        %v1569 = vmax.f32 %v1159, %v1542
        %v1570 = vmax.f32 %v1160, %v1345
        %v1571 = vmax.f32 %v1161, %v1347
        %v1572 = vmax.f32 %v1162, %v1396
        %v1573 = vmax.f32 %v1163, %v1398
        %v1574 = vmax.f32 %v1164, %v1447
        %v1575 = vmax.f32 %v1165, %v1449
        %v1576 = vmax.f32 %v1166, %v1498
        %v1577 = vmax.f32 %v1167, %v1500
        %v1578 = vmax.f32 %v1168, %v1547
        %s1579 = scalar_lea.vmem %s332, 432 [#allocation2]
        %v1580 = vld [vmem:[%s1579] sm:$0xff]
        %v1581 = vld [vmem:[%s1579 + $0x8] sm:$0xff]
        %v1582 = vld [vmem:[%s1579 + $0x10] sm:$0xff]
        %v1583 = vld [vmem:[%s1579 + $0x18] sm:$0xff]
        %v1584 = vld [vmem:[%s1579 + $0x20] sm:$0xf]
        %v1585 = vld [vmem:[%s1579 + $0x24] sm:$0xff]
        %v1586 = vld [vmem:[%s1579 + $0x2c] sm:$0xff]
        %v1587 = vld [vmem:[%s1579 + $0x34] sm:$0xff]
        %v1588 = vld [vmem:[%s1579 + $0x3c] sm:$0xff]
        %v1589 = vld [vmem:[%s1579 + $0x44] sm:$0xf]
        %v1590 = vld [vmem:[%s1579 + $0x48] sm:$0xff]
        %v1591 = vld [vmem:[%s1579 + $0x50] sm:$0xff]
        %v1592 = vld [vmem:[%s1579 + $0x58] sm:$0xff]
        %v1593 = vld [vmem:[%s1579 + $0x60] sm:$0xff]
        %v1594 = vld [vmem:[%s1579 + $0x68] sm:$0xf]
        %v1595 = vld [vmem:[%s1579 + $0x6c] sm:$0x11]
        %v1596 = vld [vmem:[%s1579 + $0x74] sm:$0x11]
        %v1597 = vld [vmem:[%s1579 + $0x7c] sm:$0x11]
        %v1598 = vld [vmem:[%s1579 + $0x84] sm:$0x11]
        %v1599 = vld [vmem:[%s1579 + $0x8c] sm:$0x1]
        %v1620 = vunpack.c.l.b16 %v1580
        %v1621 = vunpack.c.h.b16 %v1580
        %v1622 = vunpack.c.l.b16 %v1581
        %v1623 = vunpack.c.h.b16 %v1581
        %v1624 = vunpack.c.l.b16 %v1582
        %v1625 = vunpack.c.h.b16 %v1582
        %v1626 = vunpack.c.l.b16 %v1583
        %v1627 = vunpack.c.h.b16 %v1583
        %v1628 = vunpack.c.l.b16 %v1584
        %v1629 = vunpack.c.l.b16 %v1585
        %v1630 = vunpack.c.h.b16 %v1585
        %v1631 = vunpack.c.l.b16 %v1586
        %v1632 = vunpack.c.h.b16 %v1586
        %v1633 = vunpack.c.l.b16 %v1587
        %v1634 = vunpack.c.h.b16 %v1587
        %v1635 = vunpack.c.l.b16 %v1588
        %v1636 = vunpack.c.h.b16 %v1588
        %v1637 = vunpack.c.l.b16 %v1589
        %v1638 = vunpack.c.l.b16 %v1590
        %v1639 = vunpack.c.h.b16 %v1590
        %v1640 = vunpack.c.l.b16 %v1591
        %v1641 = vunpack.c.h.b16 %v1591
        %v1642 = vunpack.c.l.b16 %v1592
        %v1643 = vunpack.c.h.b16 %v1592
        %v1644 = vunpack.c.l.b16 %v1593
        %v1645 = vunpack.c.h.b16 %v1593
        %v1646 = vunpack.c.l.b16 %v1594
        %v1647 = vunpack.c.l.b16 %v1595
        %v1648 = vunpack.c.h.b16 %v1595
        %v1649 = vunpack.c.l.b16 %v1596
        %v1650 = vunpack.c.h.b16 %v1596
        %v1651 = vunpack.c.l.b16 %v1597
        %v1652 = vunpack.c.h.b16 %v1597
        %v1653 = vunpack.c.l.b16 %v1598
        %v1654 = vunpack.c.h.b16 %v1598
        %v1655 = vunpack.c.l.b16 %v1599
        %v1656 = vpack.c.b16 %v1629, %v1620
        %v1657 = vpack.c.b16 %v1630, %v1621
        %v1658 = vpack.c.b16 %v1631, %v1622
        %v1659 = vpack.c.b16 %v1632, %v1623
        %v1660 = vpack.c.b16 %v1633, %v1624
        %v1661 = vpack.c.b16 %v1634, %v1625
        %v1662 = vpack.c.b16 %v1635, %v1626
        %v1663 = vpack.c.b16 %v1636, %v1627
        %v1664 = vpack.c.b16 %v1637, %v1628
        %v1665 = vpack.c.b16 %v1647, %v1638
        %v1666 = vpack.c.b16 %v1648, %v1639
        %v1667 = vpack.c.b16 %v1649, %v1640
        %v1668 = vpack.c.b16 %v1650, %v1641
        %v1669 = vpack.c.b16 %v1651, %v1642
        %v1670 = vpack.c.b16 %v1652, %v1643
        %v1671 = vpack.c.b16 %v1653, %v1644
        %v1672 = vpack.c.b16 %v1654, %v1645
        %v1673 = vpack.c.b16 %v1655, %v1646
        %v1684 = vand.u32 %v1665, %v479
        %v1687 = vand.u32 %v1666, %v479
        %v1690 = vand.u32 %v1667, %v479
        %v1693 = vand.u32 %v1668, %v479
        %v1696 = vand.u32 %v1669, %v479
        %v1699 = vand.u32 %v1670, %v479
        %v1702 = vand.u32 %v1671, %v479
        %v1705 = vand.u32 %v1672, %v479
        %v1708 = vand.u32 %v1673, %v479
        %1710 = vmatprep.subr.bf16.mxu0 %v1657
        %1711 = vmatpush1.bf16.msra.mxu0 %v1656
        %1712 = vmatprep.subr.bf16.mxu0 %v1687
        %1713 = vmatpush1.bf16.msra.mxu0 %v1684
        %1714 = vmatprep.subr.bf16.mxu0 0
        %1715 = vmatpush1.bf16.msra.mxu0 0
        %1716 = vmatprep.subr.bf16.mxu0 0
        %1717 = vmatpush1.bf16.msra.mxu0 0
        %1718 = vmatprep.subr.bf16.mxu0 0
        %1719 = vmatpush1.bf16.msra.mxu0 0
        %1720 = vmatprep.subr.bf16.mxu0 0
        %1721 = vmatpush1.bf16.msra.mxu0 0
        %1722 = vmatprep.subr.bf16.mxu0 0
        %1723 = vmatpush1.bf16.msra.mxu0 0
        %1724 = vmatprep.subr.bf16.mxu0 0
        %1725 = vmatpush1.bf16.msra.mxu0 0
        %1726 = vmatprep.subr.bf16.mxu0 0
        %1727 = vmatpush1.bf16.msra.mxu0 0
        %1728 = vmatprep.subr.bf16.mxu0 0
        %1729 = vmatpush1.bf16.msra.mxu0 0
        %1730 = vmatprep.subr.bf16.mxu0 0
        %1731 = vmatpush1.bf16.msra.mxu0 0
        %1732 = vmatprep.subr.bf16.mxu0 0
        %1733 = vmatpush1.bf16.msra.mxu0 0
        %1734 = vmatprep.subr.bf16.mxu0 0
        %1735 = vmatpush1.bf16.msra.mxu0 0
        %1736 = vmatprep.subr.bf16.mxu0 0
        %1737 = vmatpush1.bf16.msra.mxu0 0
        %1738 = vmatprep.subr.bf16.mxu0 0
        %1739 = vmatpush1.bf16.msra.mxu0 0
        %1740 = vmatprep.subr.bf16.mxu0 0
        %1741 = vmatpush1.bf16.msra.mxu0 0
        %1742 = vmatprep.mubr.bf16.mxu0 0
        %1743 = vmatmul.mubr.bf16.gmra.mrb[0].mxu0 %v471
        %v1744 = vpop.f32.mrb[0].mxu0
        %v1745 = vadd.f32 0.0, %v1744
        %v1746 = vpop.f32.mrb[0].mxu0
        %v1747 = vadd.f32 0.0, %v1746
        %v1748 = vpop.f32.mrb[0].mxu0
        %v1749 = vadd.f32 0.0, %v1748
        %v1750 = vpop.f32.mrb[0].mxu0
        %v1751 = vadd.f32 0.0, %v1750
        %1752 = vmatprep.mubr.bf16.mxu0 0
        %1753 = vmatmul.mubr.bf16.gmra.mrb[0].mxu0 %v474
        %v1754 = vpop.f32.mrb[0].mxu0
        %v1755 = vadd.f32 0.0, %v1754
        %v1756 = vpop.f32.mrb[0].mxu0
        %v1757 = vadd.f32 0.0, %v1756
        %v1758 = vpop.f32.mrb[0].mxu0
        %v1759 = vpop.f32.mrb[0].mxu0
        %1760 = vdwg.mxu0
        %1761 = vmatprep.subr.bf16.mxu0 %v1659
        %1762 = vmatpush1.bf16.msra.mxu0 %v1658
        %1763 = vmatprep.subr.bf16.mxu0 %v1693
        %1764 = vmatpush1.bf16.msra.mxu0 %v1690
        %1765 = vmatprep.subr.bf16.mxu0 0
        %1766 = vmatpush1.bf16.msra.mxu0 0
        %1767 = vmatprep.subr.bf16.mxu0 0
        %1768 = vmatpush1.bf16.msra.mxu0 0
        %1769 = vmatprep.subr.bf16.mxu0 0
        %1770 = vmatpush1.bf16.msra.mxu0 0
        %1771 = vmatprep.subr.bf16.mxu0 0
        %1772 = vmatpush1.bf16.msra.mxu0 0
        %1773 = vmatprep.subr.bf16.mxu0 0
        %1774 = vmatpush1.bf16.msra.mxu0 0
        %1775 = vmatprep.subr.bf16.mxu0 0
        %1776 = vmatpush1.bf16.msra.mxu0 0
        %1777 = vmatprep.subr.bf16.mxu0 0
        %1778 = vmatpush1.bf16.msra.mxu0 0
        %1779 = vmatprep.subr.bf16.mxu0 0
        %1780 = vmatpush1.bf16.msra.mxu0 0
        %1781 = vmatprep.subr.bf16.mxu0 0
        %1782 = vmatpush1.bf16.msra.mxu0 0
        %1783 = vmatprep.subr.bf16.mxu0 0
        %1784 = vmatpush1.bf16.msra.mxu0 0
        %1785 = vmatprep.subr.bf16.mxu0 0
        %1786 = vmatpush1.bf16.msra.mxu0 0
        %1787 = vmatprep.subr.bf16.mxu0 0
        %1788 = vmatpush1.bf16.msra.mxu0 0
        %1789 = vmatprep.subr.bf16.mxu0 0
        %1790 = vmatpush1.bf16.msra.mxu0 0
        %1791 = vmatprep.subr.bf16.mxu0 0
        %1792 = vmatpush1.bf16.msra.mxu0 0
        %1793 = vmatprep.mubr.bf16.mxu0 0
        %1794 = vmatmul.mubr.bf16.gmra.mrb[0].mxu0 %v471
        %v1795 = vpop.f32.mrb[0].mxu0
        %v1796 = vadd.f32 0.0, %v1795
        %v1797 = vpop.f32.mrb[0].mxu0
        %v1798 = vadd.f32 0.0, %v1797
        %v1799 = vpop.f32.mrb[0].mxu0
        %v1800 = vadd.f32 0.0, %v1799
        %v1801 = vpop.f32.mrb[0].mxu0
        %v1802 = vadd.f32 0.0, %v1801
        %1803 = vmatprep.mubr.bf16.mxu0 0
        %1804 = vmatmul.mubr.bf16.gmra.mrb[0].mxu0 %v474
        %v1805 = vpop.f32.mrb[0].mxu0
        %v1806 = vadd.f32 0.0, %v1805
        %v1807 = vpop.f32.mrb[0].mxu0
        %v1808 = vadd.f32 0.0, %v1807
        %v1809 = vpop.f32.mrb[0].mxu0
        %v1810 = vpop.f32.mrb[0].mxu0
        %1811 = vdwg.mxu0
        %1812 = vmatprep.subr.bf16.mxu0 %v1661
        %1813 = vmatpush1.bf16.msra.mxu0 %v1660
        %1814 = vmatprep.subr.bf16.mxu0 %v1699
        %1815 = vmatpush1.bf16.msra.mxu0 %v1696
        %1816 = vmatprep.subr.bf16.mxu0 0
        %1817 = vmatpush1.bf16.msra.mxu0 0
        %1818 = vmatprep.subr.bf16.mxu0 0
        %1819 = vmatpush1.bf16.msra.mxu0 0
        %1820 = vmatprep.subr.bf16.mxu0 0
        %1821 = vmatpush1.bf16.msra.mxu0 0
        %1822 = vmatprep.subr.bf16.mxu0 0
        %1823 = vmatpush1.bf16.msra.mxu0 0
        %1824 = vmatprep.subr.bf16.mxu0 0
        %1825 = vmatpush1.bf16.msra.mxu0 0
        %1826 = vmatprep.subr.bf16.mxu0 0
        %1827 = vmatpush1.bf16.msra.mxu0 0
        %1828 = vmatprep.subr.bf16.mxu0 0
        %1829 = vmatpush1.bf16.msra.mxu0 0
        %1830 = vmatprep.subr.bf16.mxu0 0
        %1831 = vmatpush1.bf16.msra.mxu0 0
        %1832 = vmatprep.subr.bf16.mxu0 0
        %1833 = vmatpush1.bf16.msra.mxu0 0
        %1834 = vmatprep.subr.bf16.mxu0 0
        %1835 = vmatpush1.bf16.msra.mxu0 0
        %1836 = vmatprep.subr.bf16.mxu0 0
        %1837 = vmatpush1.bf16.msra.mxu0 0
        %1838 = vmatprep.subr.bf16.mxu0 0
        %1839 = vmatpush1.bf16.msra.mxu0 0
        %1840 = vmatprep.subr.bf16.mxu0 0
        %1841 = vmatpush1.bf16.msra.mxu0 0
        %1842 = vmatprep.subr.bf16.mxu0 0
        %1843 = vmatpush1.bf16.msra.mxu0 0
        %1844 = vmatprep.mubr.bf16.mxu0 0
        %1845 = vmatmul.mubr.bf16.gmra.mrb[0].mxu0 %v471
        %v1846 = vpop.f32.mrb[0].mxu0
        %v1847 = vadd.f32 0.0, %v1846
        %v1848 = vpop.f32.mrb[0].mxu0
        %v1849 = vadd.f32 0.0, %v1848
        %v1850 = vpop.f32.mrb[0].mxu0
        %v1851 = vadd.f32 0.0, %v1850
        %v1852 = vpop.f32.mrb[0].mxu0
        %v1853 = vadd.f32 0.0, %v1852
        %1854 = vmatprep.mubr.bf16.mxu0 0
        %1855 = vmatmul.mubr.bf16.gmra.mrb[0].mxu0 %v474
        %v1856 = vpop.f32.mrb[0].mxu0
        %v1857 = vadd.f32 0.0, %v1856
        %v1858 = vpop.f32.mrb[0].mxu0
        %v1859 = vadd.f32 0.0, %v1858
        %v1860 = vpop.f32.mrb[0].mxu0
        %v1861 = vpop.f32.mrb[0].mxu0
        %1862 = vdwg.mxu0
        %1863 = vmatprep.subr.bf16.mxu0 %v1663
        %1864 = vmatpush1.bf16.msra.mxu0 %v1662
        %1865 = vmatprep.subr.bf16.mxu0 %v1705
        %1866 = vmatpush1.bf16.msra.mxu0 %v1702
        %1867 = vmatprep.subr.bf16.mxu0 0
        %1868 = vmatpush1.bf16.msra.mxu0 0
        %1869 = vmatprep.subr.bf16.mxu0 0
        %1870 = vmatpush1.bf16.msra.mxu0 0
        %1871 = vmatprep.subr.bf16.mxu0 0
        %1872 = vmatpush1.bf16.msra.mxu0 0
        %1873 = vmatprep.subr.bf16.mxu0 0
        %1874 = vmatpush1.bf16.msra.mxu0 0
        %1875 = vmatprep.subr.bf16.mxu0 0
        %1876 = vmatpush1.bf16.msra.mxu0 0
        %1877 = vmatprep.subr.bf16.mxu0 0
        %1878 = vmatpush1.bf16.msra.mxu0 0
        %1879 = vmatprep.subr.bf16.mxu0 0
        %1880 = vmatpush1.bf16.msra.mxu0 0
        %1881 = vmatprep.subr.bf16.mxu0 0
        %1882 = vmatpush1.bf16.msra.mxu0 0
        %1883 = vmatprep.subr.bf16.mxu0 0
        %1884 = vmatpush1.bf16.msra.mxu0 0
        %1885 = vmatprep.subr.bf16.mxu0 0
        %1886 = vmatpush1.bf16.msra.mxu0 0
        %1887 = vmatprep.subr.bf16.mxu0 0
        %1888 = vmatpush1.bf16.msra.mxu0 0
        %1889 = vmatprep.subr.bf16.mxu0 0
        %1890 = vmatpush1.bf16.msra.mxu0 0
        %1891 = vmatprep.subr.bf16.mxu0 0
        %1892 = vmatpush1.bf16.msra.mxu0 0
        %1893 = vmatprep.subr.bf16.mxu0 0
        %1894 = vmatpush1.bf16.msra.mxu0 0
        %1895 = vmatprep.mubr.bf16.mxu0 0
        %1896 = vmatmul.mubr.bf16.gmra.mrb[0].mxu0 %v471
        %v1897 = vpop.f32.mrb[0].mxu0
        %v1898 = vadd.f32 0.0, %v1897
        %v1899 = vpop.f32.mrb[0].mxu0
        %v1900 = vadd.f32 0.0, %v1899
        %v1901 = vpop.f32.mrb[0].mxu0
        %v1902 = vadd.f32 0.0, %v1901
        %v1903 = vpop.f32.mrb[0].mxu0
        %v1904 = vadd.f32 0.0, %v1903
        %1905 = vmatprep.mubr.bf16.mxu0 0
        %1906 = vmatmul.mubr.bf16.gmra.mrb[0].mxu0 %v474
        %v1907 = vpop.f32.mrb[0].mxu0
        %v1908 = vadd.f32 0.0, %v1907
        %v1909 = vpop.f32.mrb[0].mxu0
        %v1910 = vadd.f32 0.0, %v1909
        %v1911 = vpop.f32.mrb[0].mxu0
        %v1912 = vpop.f32.mrb[0].mxu0
        %1913 = vdwg.mxu0
        %1914 = vmatprep.subr.bf16.mxu0 0
        %1915 = vmatpush1.bf16.msra.mxu0 %v1664
        %1916 = vmatprep.subr.bf16.mxu0 0
        %1917 = vmatpush1.bf16.msra.mxu0 %v1708
        %1918 = vmatprep.subr.bf16.mxu0 0
        %1919 = vmatpush1.bf16.msra.mxu0 0
        %1920 = vmatprep.subr.bf16.mxu0 0
        %1921 = vmatpush1.bf16.msra.mxu0 0
        %1922 = vmatprep.subr.bf16.mxu0 0
        %1923 = vmatpush1.bf16.msra.mxu0 0
        %1924 = vmatprep.subr.bf16.mxu0 0
        %1925 = vmatpush1.bf16.msra.mxu0 0
        %1926 = vmatprep.subr.bf16.mxu0 0
        %1927 = vmatpush1.bf16.msra.mxu0 0
        %1928 = vmatprep.subr.bf16.mxu0 0
        %1929 = vmatpush1.bf16.msra.mxu0 0
        %1930 = vmatprep.subr.bf16.mxu0 0
        %1931 = vmatpush1.bf16.msra.mxu0 0
        %1932 = vmatprep.subr.bf16.mxu0 0
        %1933 = vmatpush1.bf16.msra.mxu0 0
        %1934 = vmatprep.subr.bf16.mxu0 0
        %1935 = vmatpush1.bf16.msra.mxu0 0
        %1936 = vmatprep.subr.bf16.mxu0 0
        %1937 = vmatpush1.bf16.msra.mxu0 0
        %1938 = vmatprep.subr.bf16.mxu0 0
        %1939 = vmatpush1.bf16.msra.mxu0 0
        %1940 = vmatprep.subr.bf16.mxu0 0
        %1941 = vmatpush1.bf16.msra.mxu0 0
        %1942 = vmatprep.subr.bf16.mxu0 0
        %1943 = vmatpush1.bf16.msra.mxu0 0
        %1944 = vmatprep.subr.bf16.mxu0 0
        %1945 = vmatpush1.bf16.msra.mxu0 0
        %1946 = vmatprep.mubr.bf16.mxu0 0
        %1947 = vmatmul.mubr.bf16.gmra.mrb[0].mxu0 %v471
        %v1948 = vpop.f32.mrb[0].mxu0
        %v1949 = vadd.f32 0.0, %v1948
        %v1950 = vpop.f32.mrb[0].mxu0
        %v1951 = vpop.f32.mrb[0].mxu0
        %v1952 = vadd.f32 0.0, %v1951
        %v1953 = vpop.f32.mrb[0].mxu0
        %1954 = vmatprep.mubr.bf16.mxu0 0
        %1955 = vmatmul.mubr.bf16.gmra.mrb[0].mxu0 %v474
        %v1956 = vpop.f32.mrb[0].mxu0
        %v1957 = vadd.f32 0.0, %v1956
        %v1958 = vpop.f32.mrb[0].mxu0
        %v1959 = vpop.f32.mrb[0].mxu0
        %v1960 = vpop.f32.mrb[0].mxu0
        %1961 = vdwg.mxu0
        %v1962 = vmax.f32 %v1552, %v1745
        %v1963 = vmax.f32 %v1553, %v1747
        %v1964 = vmax.f32 %v1554, %v1796
        %v1965 = vmax.f32 %v1555, %v1798
        %v1966 = vmax.f32 %v1556, %v1847
        %v1967 = vmax.f32 %v1557, %v1849
        %v1968 = vmax.f32 %v1558, %v1898
        %v1969 = vmax.f32 %v1559, %v1900
        %v1970 = vmax.f32 %v1560, %v1949
        %v1971 = vmax.f32 %v1561, %v1749
        %v1972 = vmax.f32 %v1562, %v1751
        %v1973 = vmax.f32 %v1563, %v1800
        %v1974 = vmax.f32 %v1564, %v1802
        %v1975 = vmax.f32 %v1565, %v1851
        %v1976 = vmax.f32 %v1566, %v1853
        %v1977 = vmax.f32 %v1567, %v1902
        %v1978 = vmax.f32 %v1568, %v1904
        %v1979 = vmax.f32 %v1569, %v1952
        %v1980 = vmax.f32 %v1570, %v1755
        %v1981 = vmax.f32 %v1571, %v1757
        %v1982 = vmax.f32 %v1572, %v1806
        %v1983 = vmax.f32 %v1573, %v1808
        %v1984 = vmax.f32 %v1574, %v1857
        %v1985 = vmax.f32 %v1575, %v1859
        %v1986 = vmax.f32 %v1576, %v1908
        %v1987 = vmax.f32 %v1577, %v1910
        %v1988 = vmax.f32 %v1578, %v1957
        %v1989 = vld [vmem:[%s2] sm:$0xff]
        %v1990 = vld [vmem:[%s2 + $0x8] sm:$0xff]
        %v1991 = vld [vmem:[%s2 + $0x10] sm:$0xf]
        %1993 = vset.pattern.permute.xlu0 0
        %1994 = vperm.xlu0 %1993, %v1989
        %v1995 = vpop.permute.xlu0 %1994
        %1998 = vset.pattern.permute.xlu0 0
        %1999 = vperm.xlu0 %1998, %v1990
        %v2000 = vpop.permute.xlu0 %1999
        %2003 = vset.pattern.permute.xlu0 0
        %2004 = vperm.xlu0 %2003, %v1991
        %v2005 = vpop.permute.xlu0 %2004
        %v2007 = vadd.f32 %v1962, %v1995
        %v2008 = vadd.f32 %v1963, %v1995
        %v2009 = vadd.f32 %v1964, %v1995
        %v2010 = vadd.f32 %v1965, %v1995
        %v2011 = vadd.f32 %v1966, %v1995
        %v2012 = vadd.f32 %v1967, %v1995
        %v2013 = vadd.f32 %v1968, %v1995
        %v2014 = vadd.f32 %v1969, %v1995
        %v2015 = vadd.f32 %v1970, %v1995
        %v2016 = vadd.f32 %v1971, %v2000
        %v2017 = vadd.f32 %v1972, %v2000
        %v2018 = vadd.f32 %v1973, %v2000
        %v2019 = vadd.f32 %v1974, %v2000
        %v2020 = vadd.f32 %v1975, %v2000
        %v2021 = vadd.f32 %v1976, %v2000
        %v2022 = vadd.f32 %v1977, %v2000
        %v2023 = vadd.f32 %v1978, %v2000
        %v2024 = vadd.f32 %v1979, %v2000
        %v2025 = vadd.f32 %v1980, %v2005
        %v2026 = vadd.f32 %v1981, %v2005
        %v2027 = vadd.f32 %v1982, %v2005
        %v2028 = vadd.f32 %v1983, %v2005
        %v2029 = vadd.f32 %v1984, %v2005
        %v2030 = vadd.f32 %v1985, %v2005
        %v2031 = vadd.f32 %v1986, %v2005
        %v2032 = vadd.f32 %v1987, %v2005
        %v2033 = vadd.f32 %v1988, %v2005
        %v2034 = vmax.f32 %v2007, 0.0
        %v2035 = vmax.f32 %v2008, 0.0
        %v2036 = vmax.f32 %v2009, 0.0
        %v2037 = vmax.f32 %v2010, 0.0
        %v2038 = vmax.f32 %v2011, 0.0
        %v2039 = vmax.f32 %v2012, 0.0
        %v2040 = vmax.f32 %v2013, 0.0
        %v2041 = vmax.f32 %v2014, 0.0
        %v2042 = vmax.f32 %v2015, 0.0
        %v2043 = vmax.f32 %v2016, 0.0
        %v2044 = vmax.f32 %v2017, 0.0
        %v2045 = vmax.f32 %v2018, 0.0
        %v2046 = vmax.f32 %v2019, 0.0
        %v2047 = vmax.f32 %v2020, 0.0
        %v2048 = vmax.f32 %v2021, 0.0
        %v2049 = vmax.f32 %v2022, 0.0
        %v2050 = vmax.f32 %v2023, 0.0
        %v2051 = vmax.f32 %v2024, 0.0
        %v2052 = vmax.f32 %v2025, 0.0
        %v2053 = vmax.f32 %v2026, 0.0
        %v2054 = vmax.f32 %v2027, 0.0
        %v2055 = vmax.f32 %v2028, 0.0
        %v2056 = vmax.f32 %v2029, 0.0
        %v2057 = vmax.f32 %v2030, 0.0
        %v2058 = vmax.f32 %v2031, 0.0
        %v2059 = vmax.f32 %v2032, 0.0
        %v2060 = vmax.f32 %v2033, 0.0
        %v2061 = vpack.c.bf16 %v2043, %v2034
        %v2062 = vpack.c.bf16 %v2044, %v2035
        %v2063 = vpack.c.bf16 %v2045, %v2036
        %v2064 = vpack.c.bf16 %v2046, %v2037
        %v2065 = vpack.c.bf16 %v2047, %v2038
        %v2066 = vpack.c.bf16 %v2048, %v2039
        %v2067 = vpack.c.bf16 %v2049, %v2040
        %v2068 = vpack.c.bf16 %v2050, %v2041
        %v2069 = vpack.c.bf16 %v2051, %v2042
        %v2070 = vpack.c.bf16 %v2052, %v2052
        %v2071 = vpack.c.bf16 %v2053, %v2053
        %v2072 = vpack.c.bf16 %v2054, %v2054
        %v2073 = vpack.c.bf16 %v2055, %v2055
        %v2074 = vpack.c.bf16 %v2056, %v2056
        %v2075 = vpack.c.bf16 %v2057, %v2057
        %v2076 = vpack.c.bf16 %v2058, %v2058
        %v2077 = vpack.c.bf16 %v2059, %v2059
        %v2078 = vpack.c.bf16 %v2060, %v2060
        %v2097 = vunpack.c.l.b16 %v2061
        %v2098 = vunpack.c.l.b16 %v2062
        %v2099 = vunpack.c.l.b16 %v2063
        %v2100 = vunpack.c.l.b16 %v2064
        %v2101 = vunpack.c.l.b16 %v2065
        %v2102 = vunpack.c.l.b16 %v2066
        %v2103 = vunpack.c.l.b16 %v2067
        %v2104 = vunpack.c.l.b16 %v2068
        %v2105 = vunpack.c.l.b16 %v2069
        %v2106 = vunpack.c.h.b16 %v2061
        %v2107 = vunpack.c.h.b16 %v2062
        %v2108 = vunpack.c.h.b16 %v2063
        %v2109 = vunpack.c.h.b16 %v2064
        %v2110 = vunpack.c.h.b16 %v2065
        %v2111 = vunpack.c.h.b16 %v2066
        %v2112 = vunpack.c.h.b16 %v2067
        %v2113 = vunpack.c.h.b16 %v2068
        %v2114 = vunpack.c.h.b16 %v2069
        %v2115 = vunpack.c.l.b16 %v2070
        %v2116 = vunpack.c.l.b16 %v2071
        %v2117 = vunpack.c.l.b16 %v2072
        %v2118 = vunpack.c.l.b16 %v2073
        %v2119 = vunpack.c.l.b16 %v2074
        %v2120 = vunpack.c.l.b16 %v2075
        %v2121 = vunpack.c.l.b16 %v2076
        %v2122 = vunpack.c.l.b16 %v2077
        %v2123 = vunpack.c.l.b16 %v2078
        %v2124 = vpack.c.b16 %v2098, %v2097
        %v2125 = vpack.c.b16 %v2100, %v2099
        %v2126 = vpack.c.b16 %v2102, %v2101
        %v2127 = vpack.c.b16 %v2104, %v2103
        %v2128 = vpack.c.b16 %v2105, %v2105
        %v2129 = vpack.c.b16 %v2107, %v2106
        %v2130 = vpack.c.b16 %v2109, %v2108
        %v2131 = vpack.c.b16 %v2111, %v2110
        %v2132 = vpack.c.b16 %v2113, %v2112
        %v2133 = vpack.c.b16 %v2114, %v2114
        %v2134 = vpack.c.b16 %v2116, %v2115
        %v2135 = vpack.c.b16 %v2118, %v2117
        %v2136 = vpack.c.b16 %v2120, %v2119
        %v2137 = vpack.c.b16 %v2122, %v2121
        %v2138 = vpack.c.b16 %v2123, %v2123
        %2154 = vst [vmem:[%s351] sm:$0xff] %v2124
        %2155 = vst [vmem:[%s351 + $0x8] sm:$0xff] %v2125
        %2156 = vst [vmem:[%s351 + $0x10] sm:$0xff] %v2126
        %2157 = vst [vmem:[%s351 + $0x18] sm:$0xff] %v2127
        %2158 = vst [vmem:[%s351 + $0x20] sm:$0xf] %v2128
        %2159 = vst [vmem:[%s351 + $0x24] sm:$0xff] %v2129
        %2160 = vst [vmem:[%s351 + $0x2c] sm:$0xff] %v2130
        %2161 = vst [vmem:[%s351 + $0x34] sm:$0xff] %v2131
        %2162 = vst [vmem:[%s351 + $0x3c] sm:$0xff] %v2132
        %2163 = vst [vmem:[%s351 + $0x44] sm:$0xf] %v2133
        %2164 = vst [vmem:[%s351 + $0x48] sm:$0x33] %v2134
        %2165 = vst [vmem:[%s351 + $0x50] sm:$0x33] %v2135
        %2166 = vst [vmem:[%s351 + $0x58] sm:$0x33] %v2136
        %2167 = vst [vmem:[%s351 + $0x60] sm:$0x33] %v2137
        %2168 = vst [vmem:[%s351 + $0x68] sm:$0x3] %v2138
        %s2169 = sand.u32 %s90, 1
        %s2170 = sand.u32 %s90, 1
        %s2171 = smul.addr %s2170, 108
        %s2172 = scalar_lea.vmem [#allocation3], %s2171
        // Predicated region
        $region59: #{net1_forward.3} parent=53 // pred_check
          %p2173 = pneg %p100
        $region60: #{net1_forward.3} parent=53 // pred_check_branch
          %2175 = sbr.rel (%p2173) target = $region62
        $region61: #{net1_forward.3} parent=53 // pred_region
          %s2176 = smul.u32 9, %s14
          %s2177 = smul.addr %s2176, 4
          %s2178 = scalar_lea.vmem %s3, %s2177
          // Predicated region
          $region63: #{net1_forward.3} parent=61 // pred_check
            _
          $region64: #{net1_forward.3} parent=61 // pred_check_branch
            %2180 = sbr.rel (0) target = $region66
          $region65: #{net1_forward.3} parent=61 // pred_region
            // Predicated region
            $region67: #{net1_forward.3} parent=65 // pred_check
              _
            $region68: #{net1_forward.3} parent=65 // pred_check_branch
              %2182 = sbr.rel (0) target = $region70
            $region69: #{net1_forward.3} parent=65 // pred_region
              %s2183 = scalar_lea.vmem %s2172, 32 [#allocation3]
              %s2184 = scalar_lea.vmem %s2178, 32
              loop: start=0, step=1, limit=1
              $region71: #{net1_forward.3} parent=69 // loop_pre_header
                _
              $region72: #{net1_forward.3} parent=69 // loop_header
                %s2186 = sphi 0, %s2190
                %p2187 = scmp.ge.s32.totalorder %s2186, 1
                %s2191 = sphi %s2172, %s2172
                %s2192 = sphi %s2178, %s2178
              $region73: #{net1_forward.3} parent=69 // loop_header_branch
                %2189 = sbr.rel (%p2187) target = $region77
              $region74: #{net1_forward.3} parent=69 // loop_body
                %v2193 = vld [vmem:[%s2191] sm:$0xff]
                %2194 = vst [vmem:[%s2192] sm:$0xff] %v2193
                %v2195 = vld [vmem:[%s2191 + $0x8] sm:$0xff]
                %2196 = vst [vmem:[%s2192 + $0x8] sm:$0xff] %v2195
                %v2197 = vld [vmem:[%s2191 + $0x10] sm:$0xff]
                %2198 = vst [vmem:[%s2192 + $0x10] sm:$0xff] %v2197
                %v2199 = vld [vmem:[%s2191 + $0x18] sm:$0xff]
                %2200 = vst [vmem:[%s2192 + $0x18] sm:$0xff] %v2199
                %v2201 = vld [vmem:[%s2191 + $0x24] sm:$0xff]
                %2202 = vst [vmem:[%s2192 + $0x48] sm:$0xff] %v2201
                %v2203 = vld [vmem:[%s2191 + $0x2c] sm:$0xff]
                %2204 = vst [vmem:[%s2192 + $0x50] sm:$0xff] %v2203
                %v2205 = vld [vmem:[%s2191 + $0x34] sm:$0xff]
                %2206 = vst [vmem:[%s2192 + $0x58] sm:$0xff] %v2205
                %v2207 = vld [vmem:[%s2191 + $0x3c] sm:$0xff]
                %2208 = vst [vmem:[%s2192 + $0x60] sm:$0xff] %v2207
                %v2209 = vld [vmem:[%s2191 + $0x48] sm:$0xff]
                %2210 = vst [vmem:[%s2192 + $0x90] sm:$0xff] %v2209
                %v2211 = vld [vmem:[%s2191 + $0x50] sm:$0xff]
                %2212 = vst [vmem:[%s2192 + $0x98] sm:$0xff] %v2211
                %v2213 = vld [vmem:[%s2191 + $0x58] sm:$0xff]
                %2214 = vst [vmem:[%s2192 + $0xa0] sm:$0xff] %v2213
                %v2215 = vld [vmem:[%s2191 + $0x60] sm:$0xff]
                %2216 = vst [vmem:[%s2192 + $0xa8] sm:$0xff] %v2215
              $region75: #{net1_forward.3} parent=69 // loop_footer
                %s2190 = sadd.s32 1, %s2186
              $region76: #{net1_forward.3} parent=69 // loop_footer_branch
                %2185 = sbr.rel target = $region72
              $region77: #{net1_forward.3} parent=69 // loop_exit
                _
              loop: start=0, step=1, limit=1
              $region78: #{net1_forward.3} parent=69 // loop_pre_header
                _
              $region79: #{net1_forward.3} parent=69 // loop_header
                %s2219 = sphi 0, %s2223
                %p2220 = scmp.ge.s32.totalorder %s2219, 1
                %s2224 = sphi %s2183, %s2183
                %s2225 = sphi %s2184, %s2184
              $region80: #{net1_forward.3} parent=69 // loop_header_branch
                %2222 = sbr.rel (%p2220) target = $region84
              $region81: #{net1_forward.3} parent=69 // loop_body
                %v2226 = vld [vmem:[%s2224] sm:$0xf]
                %2227 = vst [vmem:[%s2225] sm:$0xf] %v2226
                %v2228 = vld [vmem:[%s2224 + $0x24] sm:$0xf]
                %2229 = vst [vmem:[%s2225 + $0x48] sm:$0xf] %v2228
                %v2230 = vld [vmem:[%s2224 + $0x48] sm:$0xf]
                %2231 = vst [vmem:[%s2225 + $0x90] sm:$0xf] %v2230
              $region82: #{net1_forward.3} parent=69 // loop_footer
                %s2223 = sadd.s32 1, %s2219
              $region83: #{net1_forward.3} parent=69 // loop_footer_branch
                %2218 = sbr.rel target = $region79
              $region84: #{net1_forward.3} parent=69 // loop_exit
                _
            $region70: #{net1_forward.3} parent=65 // pred_fallthru
              _
          $region66: #{net1_forward.3} parent=61 // pred_fallthru
            _
          %2232 = vnop
        $region62: #{net1_forward.3} parent=53 // pred_fallthru
          _
      $region54: #{net1_forward.3} parent=5 // pred_fallthru
        _
      %p2233 = scmp.le.s32.totalorder 2, %s9
      // Predicated region
      $region85: #{net1_forward.3} parent=5 // pred_check
        %p2234 = pneg %p2233
      $region86: #{net1_forward.3} parent=5 // pred_check_branch
        %2236 = sbr.rel (%p2234) target = $region88
      $region87: #{net1_forward.3} parent=5 // pred_region
        %s2237 = ssub.s32 %s9, 2
        // Predicated region
        $region89: #{net1_forward.3} parent=87 // pred_check
          %p2238 = pneg %p106
        $region90: #{net1_forward.3} parent=87 // pred_check_branch
          %2240 = sbr.rel (%p2238) target = $region92
        $region91: #{net1_forward.3} parent=87 // pred_region
          %s2241 = sand.u32 %s91, 1
          %s2242 = sand.u32 %s91, 1
          %s2243 = smul.addr %s2242, 108
          %s2244 = scalar_lea.vmem [#allocation3], %s2243
        $region92: #{net1_forward.3} parent=87 // pred_fallthru
          _
      $region88: #{net1_forward.3} parent=5 // pred_fallthru
        _
    $region6: #{net1_forward.3} parent=1 // loop_footer
      %s13 = sadd.s32 1, %s9
    $region7: #{net1_forward.3} parent=1 // loop_footer_branch
      %8 = sbr.rel target = $region3
    $region8: #{net1_forward.3} parent=1 // loop_exit
      _

// kernel: net1_forward.4
$region0: #{net1_forward.4}
  #allocation0 [shape = 'u32[]', space=smem, size = 0x4, offset = 0x4, fixed_abs, tag = 'smem constant byte address 0x4 - core index']
  #allocation1 [shape = 'u32[144,128]{1,0:T(1,128)}', space=vmem, size = 0x12000, scoped, tag = 'internal scratch']
  %s0 = inlined_call_operand.vmem [shape: bf16[40,500], index: 0, kind: input, shape index: {}]
  %s1 = inlined_call_operand.vmem [shape: bf16[4,500,256], index: 1, kind: input, shape index: {}]
  %s2 = inlined_call_operand.vmem [shape: f32[40,1], index: 2, kind: input, shape index: {}]
  %s3 = inlined_call_operand.vmem [shape: bf16[40,256], index: 3, kind: output, shape index: {}]
  %s4 = sld [smem:[#allocation0]]
  $region22: #{net1_forward.4} parent=0
    _
  %s6 = ssub.s32 1, %s4
  %s7 = scalar_select 0, %s6, %s4
  // Predicated region
  $region2: #{net1_forward.4} parent=0 // pred_check
    _
  $region3: #{net1_forward.4} parent=0 // pred_check_branch
    %9 = sbr.rel (0) target = $region5
  $region4: #{net1_forward.4} parent=0 // pred_region
    _
  $region5: #{net1_forward.4} parent=0 // pred_fallthru
    _
  // Predicated region
  $region6: #{net1_forward.4} parent=0 // pred_check
    _
  $region7: #{net1_forward.4} parent=0 // pred_check_branch
    %11 = sbr.rel (0) target = $region9
  $region8: #{net1_forward.4} parent=0 // pred_region
    _
  $region9: #{net1_forward.4} parent=0 // pred_fallthru
    _
  // Predicated region
  $region10: #{net1_forward.4} parent=0 // pred_check
    _
  $region11: #{net1_forward.4} parent=0 // pred_check_branch
    %13 = sbr.rel (0) target = $region13
  $region12: #{net1_forward.4} parent=0 // pred_region
    _
  $region13: #{net1_forward.4} parent=0 // pred_fallthru
    _
  %v14 = vld [vmem:[%s0] sm:$0xff]
  %v15 = vld [vmem:[%s0 + $0x8] sm:$0xff]
  %v16 = vld [vmem:[%s0 + $0x10] sm:$0xff]
  %v17 = vld [vmem:[%s0 + $0x18] sm:$0xff]
  %v18 = vld [vmem:[%s0 + $0x20] sm:$0xff]
  %v19 = vld [vmem:[%s0 + $0x28] sm:$0xff]
  %v20 = vld [vmem:[%s0 + $0x30] sm:$0xff]
  %v21 = vld [vmem:[%s0 + $0x38] sm:$0xff]
  %v22 = vld [vmem:[%s0 + $0x40] sm:$0xff]
  %v23 = vld [vmem:[%s0 + $0x48] sm:$0xff]
  %v24 = vld [vmem:[%s1] sm:$0xff]
  %v25 = vld [vmem:[%s1 + $0x8] sm:$0xff]
  %v26 = vld [vmem:[%s1 + $0x10] sm:$0xff]
  %v27 = vld [vmem:[%s1 + $0x18] sm:$0xff]
  %v28 = vld [vmem:[%s1 + $0x20] sm:$0xff]
  %v29 = vld [vmem:[%s1 + $0x28] sm:$0xff]
  %v30 = vld [vmem:[%s1 + $0x30] sm:$0xff]
  %v31 = vld [vmem:[%s1 + $0x38] sm:$0xff]
  %v32 = vld [vmem:[%s1 + $0x40] sm:$0xff]
  %v33 = vld [vmem:[%s1 + $0x48] sm:$0xff]
  %v34 = vld [vmem:[%s1 + $0x50] sm:$0xff]
  %v35 = vld [vmem:[%s1 + $0x58] sm:$0xff]
  %v36 = vld [vmem:[%s1 + $0x60] sm:$0xff]
  %v37 = vld [vmem:[%s1 + $0x68] sm:$0xff]
  %v38 = vld [vmem:[%s1 + $0x70] sm:$0xff]
  %v39 = vld [vmem:[%s1 + $0x78] sm:$0xff]
  %v40 = vld [vmem:[%s1 + $0x80] sm:$0xff]
  %v41 = vld [vmem:[%s1 + $0x88] sm:$0xff]
  %v42 = vld [vmem:[%s1 + $0x90] sm:$0xff]
  %v43 = vld [vmem:[%s1 + $0x98] sm:$0xff]
  %v44 = vld [vmem:[%s1 + $0xa0] sm:$0xff]
  %v45 = vld [vmem:[%s1 + $0xa8] sm:$0xff]
  %v46 = vld [vmem:[%s1 + $0xb0] sm:$0xff]
  %v47 = vld [vmem:[%s1 + $0xb8] sm:$0xff]
  %v48 = vld [vmem:[%s1 + $0xc0] sm:$0xff]
  %v49 = vld [vmem:[%s1 + $0xc8] sm:$0xff]
  %v50 = vld [vmem:[%s1 + $0xd0] sm:$0xff]
  %v51 = vld [vmem:[%s1 + $0xd8] sm:$0xff]
  %v52 = vld [vmem:[%s1 + $0xe0] sm:$0xff]
  %v53 = vld [vmem:[%s1 + $0xe8] sm:$0xff]
  %v54 = vld [vmem:[%s1 + $0xf0] sm:$0xff]
  %v55 = vld [vmem:[%s1 + $0xf8] sm:$0xff]
  %v56 = vld [vmem:[%s1 + $0x100] sm:$0xff]
  %v57 = vld [vmem:[%s1 + $0x108] sm:$0xff]
  %v58 = vld [vmem:[%s1 + $0x110] sm:$0xff]
  %v59 = vld [vmem:[%s1 + $0x118] sm:$0xff]
  %v60 = vld [vmem:[%s1 + $0x120] sm:$0xff]
  %v61 = vld [vmem:[%s1 + $0x128] sm:$0xff]
  %v62 = vld [vmem:[%s1 + $0x130] sm:$0xff]
  %v63 = vld [vmem:[%s1 + $0x138] sm:$0xff]
  %v64 = vld [vmem:[%s1 + $0x140] sm:$0xff]
  %v65 = vld [vmem:[%s1 + $0x148] sm:$0xff]
  %v66 = vld [vmem:[%s1 + $0x150] sm:$0xff]
  %v67 = vld [vmem:[%s1 + $0x158] sm:$0xff]
  %v68 = vld [vmem:[%s1 + $0x160] sm:$0xff]
  %v69 = vld [vmem:[%s1 + $0x168] sm:$0xff]
  %v70 = vld [vmem:[%s1 + $0x170] sm:$0xff]
  %v71 = vld [vmem:[%s1 + $0x178] sm:$0xff]
  %v72 = vld [vmem:[%s1 + $0x180] sm:$0xff]
  %v73 = vld [vmem:[%s1 + $0x188] sm:$0xff]
  %v74 = vld [vmem:[%s1 + $0x190] sm:$0xff]
  %v75 = vld [vmem:[%s1 + $0x198] sm:$0xff]
  %v76 = vld [vmem:[%s1 + $0x1a0] sm:$0xff]
  %v77 = vld [vmem:[%s1 + $0x1a8] sm:$0xff]
  %v78 = vld [vmem:[%s1 + $0x1b0] sm:$0xff]
  %v79 = vld [vmem:[%s1 + $0x1b8] sm:$0xff]
  %v80 = vld [vmem:[%s1 + $0x1c0] sm:$0xff]
  %v81 = vld [vmem:[%s1 + $0x1c8] sm:$0xff]
  %v82 = vld [vmem:[%s1 + $0x1d0] sm:$0xff]
  %v83 = vld [vmem:[%s1 + $0x1d8] sm:$0xff]
  %v84 = vld [vmem:[%s1 + $0x1e0] sm:$0xff]
  %v85 = vld [vmem:[%s1 + $0x1e8] sm:$0xff]
  %v86 = vld [vmem:[%s1 + $0x1f0] sm:$0x33]
  %v97 = vunpack.c.l.b16 %v14
  %v98 = vunpack.c.h.b16 %v14
  %v99 = vunpack.c.l.b16 %v15
  %v100 = vunpack.c.h.b16 %v15
  %v101 = vunpack.c.l.b16 %v16
  %v102 = vunpack.c.h.b16 %v16
  %v103 = vunpack.c.l.b16 %v17
  %v104 = vunpack.c.h.b16 %v17
  %v105 = vunpack.c.l.b16 %v18
  %v106 = vunpack.c.h.b16 %v18
  %v107 = vunpack.c.l.b16 %v19
  %v108 = vunpack.c.h.b16 %v19
  %v109 = vunpack.c.l.b16 %v20
  %v110 = vunpack.c.h.b16 %v20
  %v111 = vunpack.c.l.b16 %v21
  %v112 = vunpack.c.h.b16 %v21
  %v113 = vunpack.c.l.b16 %v22
  %v114 = vunpack.c.h.b16 %v22
  %v115 = vunpack.c.l.b16 %v23
  %v116 = vunpack.c.h.b16 %v23
  %v117 = vpack.c.b16 %v101, %v97
  %v118 = vpack.c.b16 %v102, %v98
  %v119 = vpack.c.b16 %v103, %v99
  %v120 = vpack.c.b16 %v104, %v100
  %v121 = vpack.c.b16 %v109, %v105
  %v122 = vpack.c.b16 %v110, %v106
  %v123 = vpack.c.b16 %v111, %v107
  %v124 = vpack.c.b16 %v112, %v108
  %v125 = vpack.c.b16 %v113, %v113
  %v126 = vpack.c.b16 %v114, %v114
  %v127 = vpack.c.b16 %v115, %v115
  %v128 = vpack.c.b16 %v116, %v116
  %v201 = vunpack.c.l.b16 %v24
  %v202 = vunpack.c.h.b16 %v24
  %v203 = vunpack.c.l.b16 %v25
  %v204 = vunpack.c.h.b16 %v25
  %v205 = vunpack.c.l.b16 %v26
  %v206 = vunpack.c.h.b16 %v26
  %v207 = vunpack.c.l.b16 %v27
  %v208 = vunpack.c.h.b16 %v27
  %v209 = vunpack.c.l.b16 %v28
  %v210 = vunpack.c.h.b16 %v28
  %v211 = vunpack.c.l.b16 %v29
  %v212 = vunpack.c.h.b16 %v29
  %v213 = vunpack.c.l.b16 %v30
  %v214 = vunpack.c.h.b16 %v30
  %v215 = vunpack.c.l.b16 %v31
  %v216 = vunpack.c.h.b16 %v31
  %v217 = vunpack.c.l.b16 %v32
  %v218 = vunpack.c.h.b16 %v32
  %v219 = vunpack.c.l.b16 %v33
  %v220 = vunpack.c.h.b16 %v33
  %v221 = vunpack.c.l.b16 %v34
  %v222 = vunpack.c.h.b16 %v34
  %v223 = vunpack.c.l.b16 %v35
  %v224 = vunpack.c.h.b16 %v35
  %v225 = vunpack.c.l.b16 %v36
  %v226 = vunpack.c.h.b16 %v36
  %v227 = vunpack.c.l.b16 %v37
  %v228 = vunpack.c.h.b16 %v37
  %v229 = vunpack.c.l.b16 %v38
  %v230 = vunpack.c.h.b16 %v38
  %v231 = vunpack.c.l.b16 %v39
  %v232 = vunpack.c.h.b16 %v39
  %v233 = vunpack.c.l.b16 %v40
  %v234 = vunpack.c.h.b16 %v40
  %v235 = vunpack.c.l.b16 %v41
  %v236 = vunpack.c.h.b16 %v41
  %v237 = vunpack.c.l.b16 %v42
  %v238 = vunpack.c.h.b16 %v42
  %v239 = vunpack.c.l.b16 %v43
  %v240 = vunpack.c.h.b16 %v43
  %v241 = vunpack.c.l.b16 %v44
  %v242 = vunpack.c.h.b16 %v44
  %v243 = vunpack.c.l.b16 %v45
  %v244 = vunpack.c.h.b16 %v45
  %v245 = vunpack.c.l.b16 %v46
  %v246 = vunpack.c.h.b16 %v46
  %v247 = vunpack.c.l.b16 %v47
  %v248 = vunpack.c.h.b16 %v47
  %v249 = vunpack.c.l.b16 %v48
  %v250 = vunpack.c.h.b16 %v48
  %v251 = vunpack.c.l.b16 %v49
  %v252 = vunpack.c.h.b16 %v49
  %v253 = vunpack.c.l.b16 %v50
  %v254 = vunpack.c.h.b16 %v50
  %v255 = vunpack.c.l.b16 %v51
  %v256 = vunpack.c.h.b16 %v51
  %v257 = vunpack.c.l.b16 %v52
  %v258 = vunpack.c.h.b16 %v52
  %v259 = vunpack.c.l.b16 %v53
  %v260 = vunpack.c.h.b16 %v53
  %v261 = vunpack.c.l.b16 %v54
  %v262 = vunpack.c.h.b16 %v54
  %v263 = vunpack.c.l.b16 %v55
  %v264 = vunpack.c.h.b16 %v55
  %v265 = vunpack.c.l.b16 %v56
  %v266 = vunpack.c.h.b16 %v56
  %v267 = vunpack.c.l.b16 %v57
  %v268 = vunpack.c.h.b16 %v57
  %v269 = vunpack.c.l.b16 %v58
  %v270 = vunpack.c.h.b16 %v58
  %v271 = vunpack.c.l.b16 %v59
  %v272 = vunpack.c.h.b16 %v59
  %v273 = vunpack.c.l.b16 %v60
  %v274 = vunpack.c.h.b16 %v60
  %v275 = vunpack.c.l.b16 %v61
  %v276 = vunpack.c.h.b16 %v61
  %v277 = vunpack.c.l.b16 %v62
  %v278 = vunpack.c.h.b16 %v62
  %v279 = vunpack.c.l.b16 %v63
  %v280 = vunpack.c.h.b16 %v63
  %v281 = vunpack.c.l.b16 %v64
  %v282 = vunpack.c.h.b16 %v64
  %v283 = vunpack.c.l.b16 %v65
  %v284 = vunpack.c.h.b16 %v65
  %v285 = vunpack.c.l.b16 %v66
  %v286 = vunpack.c.h.b16 %v66
  %v287 = vunpack.c.l.b16 %v67
  %v288 = vunpack.c.h.b16 %v67
  %v289 = vunpack.c.l.b16 %v68
  %v290 = vunpack.c.h.b16 %v68
  %v291 = vunpack.c.l.b16 %v69
  %v292 = vunpack.c.h.b16 %v69
  %v293 = vunpack.c.l.b16 %v70
  %v294 = vunpack.c.h.b16 %v70
  %v295 = vunpack.c.l.b16 %v71
  %v296 = vunpack.c.h.b16 %v71
  %v297 = vunpack.c.l.b16 %v72
  %v298 = vunpack.c.h.b16 %v72
  %v299 = vunpack.c.l.b16 %v73
  %v300 = vunpack.c.h.b16 %v73
  %v301 = vunpack.c.l.b16 %v74
  %v302 = vunpack.c.h.b16 %v74
  %v303 = vunpack.c.l.b16 %v75
  %v304 = vunpack.c.h.b16 %v75
  %v305 = vunpack.c.l.b16 %v76
  %v306 = vunpack.c.h.b16 %v76
  %v307 = vunpack.c.l.b16 %v77
  %v308 = vunpack.c.h.b16 %v77
  %v309 = vunpack.c.l.b16 %v78
  %v310 = vunpack.c.h.b16 %v78
  %v311 = vunpack.c.l.b16 %v79
  %v312 = vunpack.c.h.b16 %v79
  %v313 = vunpack.c.l.b16 %v80
  %v314 = vunpack.c.h.b16 %v80
  %v315 = vunpack.c.l.b16 %v81
  %v316 = vunpack.c.h.b16 %v81
  %v317 = vunpack.c.l.b16 %v82
  %v318 = vunpack.c.h.b16 %v82
  %v319 = vunpack.c.l.b16 %v83
  %v320 = vunpack.c.h.b16 %v83
  %v321 = vunpack.c.l.b16 %v84
  %v322 = vunpack.c.h.b16 %v84
  %v323 = vunpack.c.l.b16 %v85
  %v324 = vunpack.c.h.b16 %v85
  %v325 = vunpack.c.l.b16 %v86
  %v326 = vunpack.c.h.b16 %v86
  %v327 = vpack.c.b16 %v203, %v201
  %v328 = vpack.c.b16 %v204, %v202
  %v329 = vpack.c.b16 %v207, %v205
  %v330 = vpack.c.b16 %v208, %v206
  %v331 = vpack.c.b16 %v211, %v209
  %v332 = vpack.c.b16 %v212, %v210
  %v333 = vpack.c.b16 %v215, %v213
  %v334 = vpack.c.b16 %v216, %v214
  %v335 = vpack.c.b16 %v219, %v217
  %v336 = vpack.c.b16 %v220, %v218
  %v337 = vpack.c.b16 %v223, %v221
  %v338 = vpack.c.b16 %v224, %v222
  %v339 = vpack.c.b16 %v227, %v225
  %v340 = vpack.c.b16 %v228, %v226
  %v341 = vpack.c.b16 %v231, %v229
  %v342 = vpack.c.b16 %v232, %v230
  %v343 = vpack.c.b16 %v235, %v233
  %v344 = vpack.c.b16 %v236, %v234
  %v345 = vpack.c.b16 %v239, %v237
  %v346 = vpack.c.b16 %v240, %v238
  %v347 = vpack.c.b16 %v243, %v241
  %v348 = vpack.c.b16 %v244, %v242
  %v349 = vpack.c.b16 %v247, %v245
  %v350 = vpack.c.b16 %v248, %v246
  %v351 = vpack.c.b16 %v251, %v249
  %v352 = vpack.c.b16 %v252, %v250
  %v353 = vpack.c.b16 %v255, %v253
  %v354 = vpack.c.b16 %v256, %v254
  %v355 = vpack.c.b16 %v259, %v257
  %v356 = vpack.c.b16 %v260, %v258
  %v357 = vpack.c.b16 %v263, %v261
  %v358 = vpack.c.b16 %v264, %v262
  %v359 = vpack.c.b16 %v267, %v265
  %v360 = vpack.c.b16 %v268, %v266
  %v361 = vpack.c.b16 %v271, %v269
  %v362 = vpack.c.b16 %v272, %v270
  %v363 = vpack.c.b16 %v275, %v273
  %v364 = vpack.c.b16 %v276, %v274
  %v365 = vpack.c.b16 %v279, %v277
  %v366 = vpack.c.b16 %v280, %v278
  %v367 = vpack.c.b16 %v283, %v281
  %v368 = vpack.c.b16 %v284, %v282
  %v369 = vpack.c.b16 %v287, %v285
  %v370 = vpack.c.b16 %v288, %v286
  %v371 = vpack.c.b16 %v291, %v289
  %v372 = vpack.c.b16 %v292, %v290
  %v373 = vpack.c.b16 %v295, %v293
  %v374 = vpack.c.b16 %v296, %v294
  %v375 = vpack.c.b16 %v299, %v297
  %v376 = vpack.c.b16 %v300, %v298
  %v377 = vpack.c.b16 %v303, %v301
  %v378 = vpack.c.b16 %v304, %v302
  %v379 = vpack.c.b16 %v307, %v305
  %v380 = vpack.c.b16 %v308, %v306
  %v381 = vpack.c.b16 %v311, %v309
  %v382 = vpack.c.b16 %v312, %v310
  %v383 = vpack.c.b16 %v315, %v313
  %v384 = vpack.c.b16 %v316, %v314
  %v385 = vpack.c.b16 %v319, %v317
  %v386 = vpack.c.b16 %v320, %v318
  %v387 = vpack.c.b16 %v323, %v321
  %v388 = vpack.c.b16 %v324, %v322
  %v389 = vpack.c.b16 %v325, %v325
  %v390 = vpack.c.b16 %v326, %v326
  %vm453 = vcmask 949248
  %v455 = vsel %vm453, %v120, 0
  %v458 = vsel %vm453, %v124, 0
  %v461 = vsel %vm453, %v128, 0
  %vm463 = vcmask 1041408
  %v465 = vsel %vm463, %v389, 0
  %v468 = vsel %vm463, %v390, 0
  %470 = vmatprep.subr.bf16.mxu0 %v328
  %471 = vmatpush1.bf16.msra.mxu0 %v327
  %472 = vmatprep.subr.bf16.mxu0 %v330
  %473 = vmatpush1.bf16.msra.mxu0 %v329
  %474 = vmatprep.subr.bf16.mxu0 %v332
  %475 = vmatpush1.bf16.msra.mxu0 %v331
  %476 = vmatprep.subr.bf16.mxu0 %v334
  %477 = vmatpush1.bf16.msra.mxu0 %v333
  %478 = vmatprep.subr.bf16.mxu0 %v336
  %479 = vmatpush1.bf16.msra.mxu0 %v335
  %480 = vmatprep.subr.bf16.mxu0 %v338
  %481 = vmatpush1.bf16.msra.mxu0 %v337
  %482 = vmatprep.subr.bf16.mxu0 %v340
  %483 = vmatpush1.bf16.msra.mxu0 %v339
  %484 = vmatprep.subr.bf16.mxu0 %v342
  %485 = vmatpush1.bf16.msra.mxu0 %v341
  %486 = vmatprep.subr.bf16.mxu0 %v344
  %487 = vmatpush1.bf16.msra.mxu0 %v343
  %488 = vmatprep.subr.bf16.mxu0 %v346
  %489 = vmatpush1.bf16.msra.mxu0 %v345
  %490 = vmatprep.subr.bf16.mxu0 %v348
  %491 = vmatpush1.bf16.msra.mxu0 %v347
  %492 = vmatprep.subr.bf16.mxu0 %v350
  %493 = vmatpush1.bf16.msra.mxu0 %v349
  %494 = vmatprep.subr.bf16.mxu0 %v352
  %495 = vmatpush1.bf16.msra.mxu0 %v351
  %496 = vmatprep.subr.bf16.mxu0 %v354
  %497 = vmatpush1.bf16.msra.mxu0 %v353
  %498 = vmatprep.subr.bf16.mxu0 %v356
  %499 = vmatpush1.bf16.msra.mxu0 %v355
  %500 = vmatprep.subr.bf16.mxu0 %v358
  %501 = vmatpush1.bf16.msra.mxu0 %v357
  %502 = vmatprep.mubr.bf16.mxu0 %v118
  %503 = vmatmul.mubr.bf16.gmra.mrb[0].mxu0 %v117
  %v504 = vpop.f32.mrb[0].mxu0
  %v505 = vadd.f32 0.0, %v504
  %v506 = vpop.f32.mrb[0].mxu0
  %v507 = vadd.f32 0.0, %v506
  %v508 = vpop.f32.mrb[0].mxu0
  %v509 = vadd.f32 0.0, %v508
  %v510 = vpop.f32.mrb[0].mxu0
  %v511 = vadd.f32 0.0, %v510
  %512 = vmatprep.mubr.bf16.mxu0 %v122
  %513 = vmatmul.mubr.bf16.gmra.mrb[0].mxu0 %v121
  %v514 = vpop.f32.mrb[0].mxu0
  %v515 = vadd.f32 0.0, %v514
  %v516 = vpop.f32.mrb[0].mxu0
  %v517 = vadd.f32 0.0, %v516
  %v518 = vpop.f32.mrb[0].mxu0
  %v519 = vadd.f32 0.0, %v518
  %v520 = vpop.f32.mrb[0].mxu0
  %v521 = vadd.f32 0.0, %v520
  %522 = vmatprep.mubr.bf16.mxu0 %v126
  %523 = vmatmul.mubr.bf16.gmra.mrb[0].mxu0 %v125
  %v524 = vpop.f32.mrb[0].mxu0
  %v525 = vadd.f32 0.0, %v524
  %v526 = vpop.f32.mrb[0].mxu0
  %v527 = vadd.f32 0.0, %v526
  %v528 = vpop.f32.mrb[0].mxu0
  %v529 = vpop.f32.mrb[0].mxu0
  %530 = vdwg.mxu0
  %531 = vmatprep.subr.bf16.mxu0 %v360
  %532 = vmatpush1.bf16.msra.mxu0 %v359
  %533 = vmatprep.subr.bf16.mxu0 %v362
  %534 = vmatpush1.bf16.msra.mxu0 %v361
  %535 = vmatprep.subr.bf16.mxu0 %v364
  %536 = vmatpush1.bf16.msra.mxu0 %v363
  %537 = vmatprep.subr.bf16.mxu0 %v366
  %538 = vmatpush1.bf16.msra.mxu0 %v365
  %539 = vmatprep.subr.bf16.mxu0 %v368
  %540 = vmatpush1.bf16.msra.mxu0 %v367
  %541 = vmatprep.subr.bf16.mxu0 %v370
  %542 = vmatpush1.bf16.msra.mxu0 %v369
  %543 = vmatprep.subr.bf16.mxu0 %v372
  %544 = vmatpush1.bf16.msra.mxu0 %v371
  %545 = vmatprep.subr.bf16.mxu0 %v374
  %546 = vmatpush1.bf16.msra.mxu0 %v373
  %547 = vmatprep.subr.bf16.mxu0 %v376
  %548 = vmatpush1.bf16.msra.mxu0 %v375
  %549 = vmatprep.subr.bf16.mxu0 %v378
  %550 = vmatpush1.bf16.msra.mxu0 %v377
  %551 = vmatprep.subr.bf16.mxu0 %v380
  %552 = vmatpush1.bf16.msra.mxu0 %v379
  %553 = vmatprep.subr.bf16.mxu0 %v382
  %554 = vmatpush1.bf16.msra.mxu0 %v381
  %555 = vmatprep.subr.bf16.mxu0 %v384
  %556 = vmatpush1.bf16.msra.mxu0 %v383
  %557 = vmatprep.subr.bf16.mxu0 %v386
  %558 = vmatpush1.bf16.msra.mxu0 %v385
  %559 = vmatprep.subr.bf16.mxu0 %v388
  %560 = vmatpush1.bf16.msra.mxu0 %v387
  %561 = vmatprep.subr.bf16.mxu0 %v468
  %562 = vmatpush1.bf16.msra.mxu0 %v465
  %563 = vmatprep.mubr.bf16.mxu0 %v455
  %564 = vmatmul.mubr.bf16.gmra.mrb[0].mxu0 %v119
  %v565 = vpop.f32.mrb[0].mxu0
  %v566 = vadd.f32 %v505, %v565
  %v567 = vpop.f32.mrb[0].mxu0
  %v568 = vadd.f32 %v507, %v567
  %v569 = vpop.f32.mrb[0].mxu0
  %v570 = vadd.f32 %v509, %v569
  %v571 = vpop.f32.mrb[0].mxu0
  %v572 = vadd.f32 %v511, %v571
  %573 = vmatprep.mubr.bf16.mxu0 %v458
  %574 = vmatmul.mubr.bf16.gmra.mrb[0].mxu0 %v123
  %v575 = vpop.f32.mrb[0].mxu0
  %v576 = vadd.f32 %v515, %v575
  %v577 = vpop.f32.mrb[0].mxu0
  %v578 = vadd.f32 %v517, %v577
  %v579 = vpop.f32.mrb[0].mxu0
  %v580 = vadd.f32 %v519, %v579
  %v581 = vpop.f32.mrb[0].mxu0
  %v582 = vadd.f32 %v521, %v581
  %583 = vmatprep.mubr.bf16.mxu0 %v461
  %584 = vmatmul.mubr.bf16.gmra.mrb[0].mxu0 %v127
  %v585 = vpop.f32.mrb[0].mxu0
  %v586 = vadd.f32 %v525, %v585
  %v587 = vpop.f32.mrb[0].mxu0
  %v588 = vadd.f32 %v527, %v587
  %v589 = vpop.f32.mrb[0].mxu0
  %v590 = vpop.f32.mrb[0].mxu0
  %591 = vdwg.mxu0
  %s592 = scalar_lea.vmem %s1, 504
  %v593 = vld [vmem:[%s592] sm:$0xff]
  %v594 = vld [vmem:[%s592 + $0x8] sm:$0xff]
  %v595 = vld [vmem:[%s592 + $0x10] sm:$0xff]
  %v596 = vld [vmem:[%s592 + $0x18] sm:$0xff]
  %v597 = vld [vmem:[%s592 + $0x20] sm:$0xff]
  %v598 = vld [vmem:[%s592 + $0x28] sm:$0xff]
  %v599 = vld [vmem:[%s592 + $0x30] sm:$0xff]
  %v600 = vld [vmem:[%s592 + $0x38] sm:$0xff]
  %v601 = vld [vmem:[%s592 + $0x40] sm:$0xff]
  %v602 = vld [vmem:[%s592 + $0x48] sm:$0xff]
  %v603 = vld [vmem:[%s592 + $0x50] sm:$0xff]
  %v604 = vld [vmem:[%s592 + $0x58] sm:$0xff]
  %v605 = vld [vmem:[%s592 + $0x60] sm:$0xff]
  %v606 = vld [vmem:[%s592 + $0x68] sm:$0xff]
  %v607 = vld [vmem:[%s592 + $0x70] sm:$0xff]
  %v608 = vld [vmem:[%s592 + $0x78] sm:$0xff]
  %v609 = vld [vmem:[%s592 + $0x80] sm:$0xff]
  %v610 = vld [vmem:[%s592 + $0x88] sm:$0xff]
  %v611 = vld [vmem:[%s592 + $0x90] sm:$0xff]
  %v612 = vld [vmem:[%s592 + $0x98] sm:$0xff]
  %v613 = vld [vmem:[%s592 + $0xa0] sm:$0xff]
  %v614 = vld [vmem:[%s592 + $0xa8] sm:$0xff]
  %v615 = vld [vmem:[%s592 + $0xb0] sm:$0xff]
  %v616 = vld [vmem:[%s592 + $0xb8] sm:$0xff]
  %v617 = vld [vmem:[%s592 + $0xc0] sm:$0xff]
  %v618 = vld [vmem:[%s592 + $0xc8] sm:$0xff]
  %v619 = vld [vmem:[%s592 + $0xd0] sm:$0xff]
  %v620 = vld [vmem:[%s592 + $0xd8] sm:$0xff]
  %v621 = vld [vmem:[%s592 + $0xe0] sm:$0xff]
  %v622 = vld [vmem:[%s592 + $0xe8] sm:$0xff]
  %v623 = vld [vmem:[%s592 + $0xf0] sm:$0xff]
  %v624 = vld [vmem:[%s592 + $0xf8] sm:$0xff]
  %v625 = vld [vmem:[%s592 + $0x100] sm:$0xff]
  %v626 = vld [vmem:[%s592 + $0x108] sm:$0xff]
  %v627 = vld [vmem:[%s592 + $0x110] sm:$0xff]
  %v628 = vld [vmem:[%s592 + $0x118] sm:$0xff]
  %v629 = vld [vmem:[%s592 + $0x120] sm:$0xff]
  %v630 = vld [vmem:[%s592 + $0x128] sm:$0xff]
  %v631 = vld [vmem:[%s592 + $0x130] sm:$0xff]
  %v632 = vld [vmem:[%s592 + $0x138] sm:$0xff]
  %v633 = vld [vmem:[%s592 + $0x140] sm:$0xff]
  %v634 = vld [vmem:[%s592 + $0x148] sm:$0xff]
  %v635 = vld [vmem:[%s592 + $0x150] sm:$0xff]
  %v636 = vld [vmem:[%s592 + $0x158] sm:$0xff]
  %v637 = vld [vmem:[%s592 + $0x160] sm:$0xff]
  %v638 = vld [vmem:[%s592 + $0x168] sm:$0xff]
  %v639 = vld [vmem:[%s592 + $0x170] sm:$0xff]
  %v640 = vld [vmem:[%s592 + $0x178] sm:$0xff]
  %v641 = vld [vmem:[%s592 + $0x180] sm:$0xff]
  %v642 = vld [vmem:[%s592 + $0x188] sm:$0xff]
  %v643 = vld [vmem:[%s592 + $0x190] sm:$0xff]
  %v644 = vld [vmem:[%s592 + $0x198] sm:$0xff]
  %v645 = vld [vmem:[%s592 + $0x1a0] sm:$0xff]
  %v646 = vld [vmem:[%s592 + $0x1a8] sm:$0xff]
  %v647 = vld [vmem:[%s592 + $0x1b0] sm:$0xff]
  %v648 = vld [vmem:[%s592 + $0x1b8] sm:$0xff]
  %v649 = vld [vmem:[%s592 + $0x1c0] sm:$0xff]
  %v650 = vld [vmem:[%s592 + $0x1c8] sm:$0xff]
  %v651 = vld [vmem:[%s592 + $0x1d0] sm:$0xff]
  %v652 = vld [vmem:[%s592 + $0x1d8] sm:$0xff]
  %v653 = vld [vmem:[%s592 + $0x1e0] sm:$0xff]
  %v654 = vld [vmem:[%s592 + $0x1e8] sm:$0xff]
  %v655 = vld [vmem:[%s592 + $0x1f0] sm:$0x33]
  %v719 = vunpack.c.l.b16 %v593
  %v720 = vunpack.c.h.b16 %v593
  %v721 = vunpack.c.l.b16 %v594
  %v722 = vunpack.c.h.b16 %v594
  %v723 = vunpack.c.l.b16 %v595
  %v724 = vunpack.c.h.b16 %v595
  %v725 = vunpack.c.l.b16 %v596
  %v726 = vunpack.c.h.b16 %v596
  %v727 = vunpack.c.l.b16 %v597
  %v728 = vunpack.c.h.b16 %v597
  %v729 = vunpack.c.l.b16 %v598
  %v730 = vunpack.c.h.b16 %v598
  %v731 = vunpack.c.l.b16 %v599
  %v732 = vunpack.c.h.b16 %v599
  %v733 = vunpack.c.l.b16 %v600
  %v734 = vunpack.c.h.b16 %v600
  %v735 = vunpack.c.l.b16 %v601
  %v736 = vunpack.c.h.b16 %v601
  %v737 = vunpack.c.l.b16 %v602
  %v738 = vunpack.c.h.b16 %v602
  %v739 = vunpack.c.l.b16 %v603
  %v740 = vunpack.c.h.b16 %v603
  %v741 = vunpack.c.l.b16 %v604
  %v742 = vunpack.c.h.b16 %v604
  %v743 = vunpack.c.l.b16 %v605
  %v744 = vunpack.c.h.b16 %v605
  %v745 = vunpack.c.l.b16 %v606
  %v746 = vunpack.c.h.b16 %v606
  %v747 = vunpack.c.l.b16 %v607
  %v748 = vunpack.c.h.b16 %v607
  %v749 = vunpack.c.l.b16 %v608
  %v750 = vunpack.c.h.b16 %v608
  %v751 = vunpack.c.l.b16 %v609
  %v752 = vunpack.c.h.b16 %v609
  %v753 = vunpack.c.l.b16 %v610
  %v754 = vunpack.c.h.b16 %v610
  %v755 = vunpack.c.l.b16 %v611
  %v756 = vunpack.c.h.b16 %v611
  %v757 = vunpack.c.l.b16 %v612
  %v758 = vunpack.c.h.b16 %v612
  %v759 = vunpack.c.l.b16 %v613
  %v760 = vunpack.c.h.b16 %v613
  %v761 = vunpack.c.l.b16 %v614
  %v762 = vunpack.c.h.b16 %v614
  %v763 = vunpack.c.l.b16 %v615
  %v764 = vunpack.c.h.b16 %v615
  %v765 = vunpack.c.l.b16 %v616
  %v766 = vunpack.c.h.b16 %v616
  %v767 = vunpack.c.l.b16 %v617
  %v768 = vunpack.c.h.b16 %v617
  %v769 = vunpack.c.l.b16 %v618
  %v770 = vunpack.c.h.b16 %v618
  %v771 = vunpack.c.l.b16 %v619
  %v772 = vunpack.c.h.b16 %v619
  %v773 = vunpack.c.l.b16 %v620
  %v774 = vunpack.c.h.b16 %v620
  %v775 = vunpack.c.l.b16 %v621
  %v776 = vunpack.c.h.b16 %v621
  %v777 = vunpack.c.l.b16 %v622
  %v778 = vunpack.c.h.b16 %v622
  %v779 = vunpack.c.l.b16 %v623
  %v780 = vunpack.c.h.b16 %v623
  %v781 = vunpack.c.l.b16 %v624
  %v782 = vunpack.c.h.b16 %v624
  %v783 = vunpack.c.l.b16 %v625
  %v784 = vunpack.c.h.b16 %v625
  %v785 = vunpack.c.l.b16 %v626
  %v786 = vunpack.c.h.b16 %v626
  %v787 = vunpack.c.l.b16 %v627
  %v788 = vunpack.c.h.b16 %v627
  %v789 = vunpack.c.l.b16 %v628
  %v790 = vunpack.c.h.b16 %v628
  %v791 = vunpack.c.l.b16 %v629
  %v792 = vunpack.c.h.b16 %v629
  %v793 = vunpack.c.l.b16 %v630
  %v794 = vunpack.c.h.b16 %v630
  %v795 = vunpack.c.l.b16 %v631
  %v796 = vunpack.c.h.b16 %v631
  %v797 = vunpack.c.l.b16 %v632
  %v798 = vunpack.c.h.b16 %v632
  %v799 = vunpack.c.l.b16 %v633
  %v800 = vunpack.c.h.b16 %v633
  %v801 = vunpack.c.l.b16 %v634
  %v802 = vunpack.c.h.b16 %v634
  %v803 = vunpack.c.l.b16 %v635
  %v804 = vunpack.c.h.b16 %v635
  %v805 = vunpack.c.l.b16 %v636
  %v806 = vunpack.c.h.b16 %v636
  %v807 = vunpack.c.l.b16 %v637
  %v808 = vunpack.c.h.b16 %v637
  %v809 = vunpack.c.l.b16 %v638
  %v810 = vunpack.c.h.b16 %v638
  %v811 = vunpack.c.l.b16 %v639
  %v812 = vunpack.c.h.b16 %v639
  %v813 = vunpack.c.l.b16 %v640
  %v814 = vunpack.c.h.b16 %v640
  %v815 = vunpack.c.l.b16 %v641
  %v816 = vunpack.c.h.b16 %v641
  %v817 = vunpack.c.l.b16 %v642
  %v818 = vunpack.c.h.b16 %v642
  %v819 = vunpack.c.l.b16 %v643
  %v820 = vunpack.c.h.b16 %v643
  %v821 = vunpack.c.l.b16 %v644
  %v822 = vunpack.c.h.b16 %v644
  %v823 = vunpack.c.l.b16 %v645
  %v824 = vunpack.c.h.b16 %v645
  %v825 = vunpack.c.l.b16 %v646
  %v826 = vunpack.c.h.b16 %v646
  %v827 = vunpack.c.l.b16 %v647
  %v828 = vunpack.c.h.b16 %v647
  %v829 = vunpack.c.l.b16 %v648
  %v830 = vunpack.c.h.b16 %v648
  %v831 = vunpack.c.l.b16 %v649
  %v832 = vunpack.c.h.b16 %v649
  %v833 = vunpack.c.l.b16 %v650
  %v834 = vunpack.c.h.b16 %v650
  %v835 = vunpack.c.l.b16 %v651
  %v836 = vunpack.c.h.b16 %v651
  %v837 = vunpack.c.l.b16 %v652
  %v838 = vunpack.c.h.b16 %v652
  %v839 = vunpack.c.l.b16 %v653
  %v840 = vunpack.c.h.b16 %v653
  %v841 = vunpack.c.l.b16 %v654
  %v842 = vunpack.c.h.b16 %v654
  %v843 = vunpack.c.l.b16 %v655
  %v844 = vunpack.c.h.b16 %v655
  %v845 = vpack.c.b16 %v721, %v719
  %v846 = vpack.c.b16 %v722, %v720
  %v847 = vpack.c.b16 %v725, %v723
  %v848 = vpack.c.b16 %v726, %v724
  %v849 = vpack.c.b16 %v729, %v727
  %v850 = vpack.c.b16 %v730, %v728
  %v851 = vpack.c.b16 %v733, %v731
  %v852 = vpack.c.b16 %v734, %v732
  %v853 = vpack.c.b16 %v737, %v735
  %v854 = vpack.c.b16 %v738, %v736
  %v855 = vpack.c.b16 %v741, %v739
  %v856 = vpack.c.b16 %v742, %v740
  %v857 = vpack.c.b16 %v745, %v743
  %v858 = vpack.c.b16 %v746, %v744
  %v859 = vpack.c.b16 %v749, %v747
  %v860 = vpack.c.b16 %v750, %v748
  %v861 = vpack.c.b16 %v753, %v751
  %v862 = vpack.c.b16 %v754, %v752
  %v863 = vpack.c.b16 %v757, %v755
  %v864 = vpack.c.b16 %v758, %v756
  %v865 = vpack.c.b16 %v761, %v759
  %v866 = vpack.c.b16 %v762, %v760
  %v867 = vpack.c.b16 %v765, %v763
  %v868 = vpack.c.b16 %v766, %v764
  %v869 = vpack.c.b16 %v769, %v767
  %v870 = vpack.c.b16 %v770, %v768
  %v871 = vpack.c.b16 %v773, %v771
  %v872 = vpack.c.b16 %v774, %v772
  %v873 = vpack.c.b16 %v777, %v775
  %v874 = vpack.c.b16 %v778, %v776
  %v875 = vpack.c.b16 %v781, %v779
  %v876 = vpack.c.b16 %v782, %v780
  %v877 = vpack.c.b16 %v785, %v783
  %v878 = vpack.c.b16 %v786, %v784
  %v879 = vpack.c.b16 %v789, %v787
  %v880 = vpack.c.b16 %v790, %v788
  %v881 = vpack.c.b16 %v793, %v791
  %v882 = vpack.c.b16 %v794, %v792
  %v883 = vpack.c.b16 %v797, %v795
  %v884 = vpack.c.b16 %v798, %v796
  %v885 = vpack.c.b16 %v801, %v799
  %v886 = vpack.c.b16 %v802, %v800
  %v887 = vpack.c.b16 %v805, %v803
  %v888 = vpack.c.b16 %v806, %v804
  %v889 = vpack.c.b16 %v809, %v807
  %v890 = vpack.c.b16 %v810, %v808
  %v891 = vpack.c.b16 %v813, %v811
  %v892 = vpack.c.b16 %v814, %v812
  %v893 = vpack.c.b16 %v817, %v815
  %v894 = vpack.c.b16 %v818, %v816
  %v895 = vpack.c.b16 %v821, %v819
  %v896 = vpack.c.b16 %v822, %v820
  %v897 = vpack.c.b16 %v825, %v823
  %v898 = vpack.c.b16 %v826, %v824
  %v899 = vpack.c.b16 %v829, %v827
  %v900 = vpack.c.b16 %v830, %v828
  %v901 = vpack.c.b16 %v833, %v831
  %v902 = vpack.c.b16 %v834, %v832
  %v903 = vpack.c.b16 %v837, %v835
  %v904 = vpack.c.b16 %v838, %v836
  %v905 = vpack.c.b16 %v841, %v839
  %v906 = vpack.c.b16 %v842, %v840
  %v907 = vpack.c.b16 %v843, %v843
  %v908 = vpack.c.b16 %v844, %v844
  %v972 = vsel %vm463, %v907, 0
  %v975 = vsel %vm463, %v908, 0
  %977 = vmatprep.subr.bf16.mxu0 %v846
  %978 = vmatpush1.bf16.msra.mxu0 %v845
  %979 = vmatprep.subr.bf16.mxu0 %v848
  %980 = vmatpush1.bf16.msra.mxu0 %v847
  %981 = vmatprep.subr.bf16.mxu0 %v850
  %982 = vmatpush1.bf16.msra.mxu0 %v849
  %983 = vmatprep.subr.bf16.mxu0 %v852
  %984 = vmatpush1.bf16.msra.mxu0 %v851
  %985 = vmatprep.subr.bf16.mxu0 %v854
  %986 = vmatpush1.bf16.msra.mxu0 %v853
  %987 = vmatprep.subr.bf16.mxu0 %v856
  %988 = vmatpush1.bf16.msra.mxu0 %v855
  %989 = vmatprep.subr.bf16.mxu0 %v858
  %990 = vmatpush1.bf16.msra.mxu0 %v857
  %991 = vmatprep.subr.bf16.mxu0 %v860
  %992 = vmatpush1.bf16.msra.mxu0 %v859
  %993 = vmatprep.subr.bf16.mxu0 %v862
  %994 = vmatpush1.bf16.msra.mxu0 %v861
  %995 = vmatprep.subr.bf16.mxu0 %v864
  %996 = vmatpush1.bf16.msra.mxu0 %v863
  %997 = vmatprep.subr.bf16.mxu0 %v866
  %998 = vmatpush1.bf16.msra.mxu0 %v865
  %999 = vmatprep.subr.bf16.mxu0 %v868
  %1000 = vmatpush1.bf16.msra.mxu0 %v867
  %1001 = vmatprep.subr.bf16.mxu0 %v870
  %1002 = vmatpush1.bf16.msra.mxu0 %v869
  %1003 = vmatprep.subr.bf16.mxu0 %v872
  %1004 = vmatpush1.bf16.msra.mxu0 %v871
  %1005 = vmatprep.subr.bf16.mxu0 %v874
  %1006 = vmatpush1.bf16.msra.mxu0 %v873
  %1007 = vmatprep.subr.bf16.mxu0 %v876
  %1008 = vmatpush1.bf16.msra.mxu0 %v875
  %1009 = vmatprep.mubr.bf16.mxu0 %v118
  %1010 = vmatmul.mubr.bf16.gmra.mrb[0].mxu0 %v117
  %v1011 = vpop.f32.mrb[0].mxu0
  %v1012 = vadd.f32 0.0, %v1011
  %v1013 = vpop.f32.mrb[0].mxu0
  %v1014 = vadd.f32 0.0, %v1013
  %v1015 = vpop.f32.mrb[0].mxu0
  %v1016 = vadd.f32 0.0, %v1015
  %v1017 = vpop.f32.mrb[0].mxu0
  %v1018 = vadd.f32 0.0, %v1017
  %1019 = vmatprep.mubr.bf16.mxu0 %v122
  %1020 = vmatmul.mubr.bf16.gmra.mrb[0].mxu0 %v121
  %v1021 = vpop.f32.mrb[0].mxu0
  %v1022 = vadd.f32 0.0, %v1021
  %v1023 = vpop.f32.mrb[0].mxu0
  %v1024 = vadd.f32 0.0, %v1023
  %v1025 = vpop.f32.mrb[0].mxu0
  %v1026 = vadd.f32 0.0, %v1025
  %v1027 = vpop.f32.mrb[0].mxu0
  %v1028 = vadd.f32 0.0, %v1027
  %1029 = vmatprep.mubr.bf16.mxu0 %v126
  %1030 = vmatmul.mubr.bf16.gmra.mrb[0].mxu0 %v125
  %v1031 = vpop.f32.mrb[0].mxu0
  %v1032 = vadd.f32 0.0, %v1031
  %v1033 = vpop.f32.mrb[0].mxu0
  %v1034 = vadd.f32 0.0, %v1033
  %v1035 = vpop.f32.mrb[0].mxu0
  %v1036 = vpop.f32.mrb[0].mxu0
  %1037 = vdwg.mxu0
  %1038 = vmatprep.subr.bf16.mxu0 %v878
  %1039 = vmatpush1.bf16.msra.mxu0 %v877
  %1040 = vmatprep.subr.bf16.mxu0 %v880
  %1041 = vmatpush1.bf16.msra.mxu0 %v879
  %1042 = vmatprep.subr.bf16.mxu0 %v882
  %1043 = vmatpush1.bf16.msra.mxu0 %v881
  %1044 = vmatprep.subr.bf16.mxu0 %v884
  %1045 = vmatpush1.bf16.msra.mxu0 %v883
  %1046 = vmatprep.subr.bf16.mxu0 %v886
  %1047 = vmatpush1.bf16.msra.mxu0 %v885
  %1048 = vmatprep.subr.bf16.mxu0 %v888
  %1049 = vmatpush1.bf16.msra.mxu0 %v887
  %1050 = vmatprep.subr.bf16.mxu0 %v890
  %1051 = vmatpush1.bf16.msra.mxu0 %v889
  %1052 = vmatprep.subr.bf16.mxu0 %v892
  %1053 = vmatpush1.bf16.msra.mxu0 %v891
  %1054 = vmatprep.subr.bf16.mxu0 %v894
  %1055 = vmatpush1.bf16.msra.mxu0 %v893
  %1056 = vmatprep.subr.bf16.mxu0 %v896
  %1057 = vmatpush1.bf16.msra.mxu0 %v895
  %1058 = vmatprep.subr.bf16.mxu0 %v898
  %1059 = vmatpush1.bf16.msra.mxu0 %v897
  %1060 = vmatprep.subr.bf16.mxu0 %v900
  %1061 = vmatpush1.bf16.msra.mxu0 %v899
  %1062 = vmatprep.subr.bf16.mxu0 %v902
  %1063 = vmatpush1.bf16.msra.mxu0 %v901
  %1064 = vmatprep.subr.bf16.mxu0 %v904
  %1065 = vmatpush1.bf16.msra.mxu0 %v903
  %1066 = vmatprep.subr.bf16.mxu0 %v906
  %1067 = vmatpush1.bf16.msra.mxu0 %v905
  %1068 = vmatprep.subr.bf16.mxu0 %v975
  %1069 = vmatpush1.bf16.msra.mxu0 %v972
  %1070 = vmatprep.mubr.bf16.mxu0 %v455
  %1071 = vmatmul.mubr.bf16.gmra.mrb[0].mxu0 %v119
  %v1072 = vpop.f32.mrb[0].mxu0
  %v1073 = vadd.f32 %v1012, %v1072
  %v1074 = vpop.f32.mrb[0].mxu0
  %v1075 = vadd.f32 %v1014, %v1074
  %v1076 = vpop.f32.mrb[0].mxu0
  %v1077 = vadd.f32 %v1016, %v1076
  %v1078 = vpop.f32.mrb[0].mxu0
  %v1079 = vadd.f32 %v1018, %v1078
  %1080 = vmatprep.mubr.bf16.mxu0 %v458
  %1081 = vmatmul.mubr.bf16.gmra.mrb[0].mxu0 %v123
  %v1082 = vpop.f32.mrb[0].mxu0
  %v1083 = vadd.f32 %v1022, %v1082
  %v1084 = vpop.f32.mrb[0].mxu0
  %v1085 = vadd.f32 %v1024, %v1084
  %v1086 = vpop.f32.mrb[0].mxu0
  %v1087 = vadd.f32 %v1026, %v1086
  %v1088 = vpop.f32.mrb[0].mxu0
  %v1089 = vadd.f32 %v1028, %v1088
  %1090 = vmatprep.mubr.bf16.mxu0 %v461
  %1091 = vmatmul.mubr.bf16.gmra.mrb[0].mxu0 %v127
  %v1092 = vpop.f32.mrb[0].mxu0
  %v1093 = vadd.f32 %v1032, %v1092
  %v1094 = vpop.f32.mrb[0].mxu0
  %v1095 = vadd.f32 %v1034, %v1094
  %v1096 = vpop.f32.mrb[0].mxu0
  %v1097 = vpop.f32.mrb[0].mxu0
  %1098 = vdwg.mxu0
  %v1099 = vmax.f32 %v566, %v1073
  %v1100 = vmax.f32 %v568, %v1075
  %v1101 = vmax.f32 %v570, %v1077
  %v1102 = vmax.f32 %v572, %v1079
  %v1103 = vmax.f32 %v576, %v1083
  %v1104 = vmax.f32 %v578, %v1085
  %v1105 = vmax.f32 %v580, %v1087
  %v1106 = vmax.f32 %v582, %v1089
  %v1107 = vmax.f32 %v586, %v1093
  %v1108 = vmax.f32 %v588, %v1095
  %s1109 = scalar_lea.vmem %s1, 1008
  %v1110 = vld [vmem:[%s1109] sm:$0xff]
  %v1111 = vld [vmem:[%s1109 + $0x8] sm:$0xff]
  %v1112 = vld [vmem:[%s1109 + $0x10] sm:$0xff]
  %v1113 = vld [vmem:[%s1109 + $0x18] sm:$0xff]
  %v1114 = vld [vmem:[%s1109 + $0x20] sm:$0xff]
  %v1115 = vld [vmem:[%s1109 + $0x28] sm:$0xff]
  %v1116 = vld [vmem:[%s1109 + $0x30] sm:$0xff]
  %v1117 = vld [vmem:[%s1109 + $0x38] sm:$0xff]
  %v1118 = vld [vmem:[%s1109 + $0x40] sm:$0xff]
  %v1119 = vld [vmem:[%s1109 + $0x48] sm:$0xff]
  %v1120 = vld [vmem:[%s1109 + $0x50] sm:$0xff]
  %v1121 = vld [vmem:[%s1109 + $0x58] sm:$0xff]
  %v1122 = vld [vmem:[%s1109 + $0x60] sm:$0xff]
  %v1123 = vld [vmem:[%s1109 + $0x68] sm:$0xff]
  %v1124 = vld [vmem:[%s1109 + $0x70] sm:$0xff]
  %v1125 = vld [vmem:[%s1109 + $0x78] sm:$0xff]
  %v1126 = vld [vmem:[%s1109 + $0x80] sm:$0xff]
  %v1127 = vld [vmem:[%s1109 + $0x88] sm:$0xff]
  %v1128 = vld [vmem:[%s1109 + $0x90] sm:$0xff]
  %v1129 = vld [vmem:[%s1109 + $0x98] sm:$0xff]
  %v1130 = vld [vmem:[%s1109 + $0xa0] sm:$0xff]
  %v1131 = vld [vmem:[%s1109 + $0xa8] sm:$0xff]
  %v1132 = vld [vmem:[%s1109 + $0xb0] sm:$0xff]
  %v1133 = vld [vmem:[%s1109 + $0xb8] sm:$0xff]
  %v1134 = vld [vmem:[%s1109 + $0xc0] sm:$0xff]
  %v1135 = vld [vmem:[%s1109 + $0xc8] sm:$0xff]
  %v1136 = vld [vmem:[%s1109 + $0xd0] sm:$0xff]
  %v1137 = vld [vmem:[%s1109 + $0xd8] sm:$0xff]
  %v1138 = vld [vmem:[%s1109 + $0xe0] sm:$0xff]
  %v1139 = vld [vmem:[%s1109 + $0xe8] sm:$0xff]
  %v1140 = vld [vmem:[%s1109 + $0xf0] sm:$0xff]
  %v1141 = vld [vmem:[%s1109 + $0xf8] sm:$0xff]
  %v1142 = vld [vmem:[%s1109 + $0x100] sm:$0xff]
  %v1143 = vld [vmem:[%s1109 + $0x108] sm:$0xff]
  %v1144 = vld [vmem:[%s1109 + $0x110] sm:$0xff]
  %v1145 = vld [vmem:[%s1109 + $0x118] sm:$0xff]
  %v1146 = vld [vmem:[%s1109 + $0x120] sm:$0xff]
  %v1147 = vld [vmem:[%s1109 + $0x128] sm:$0xff]
  %v1148 = vld [vmem:[%s1109 + $0x130] sm:$0xff]
  %v1149 = vld [vmem:[%s1109 + $0x138] sm:$0xff]
  %v1150 = vld [vmem:[%s1109 + $0x140] sm:$0xff]
  %v1151 = vld [vmem:[%s1109 + $0x148] sm:$0xff]
  %v1152 = vld [vmem:[%s1109 + $0x150] sm:$0xff]
  %v1153 = vld [vmem:[%s1109 + $0x158] sm:$0xff]
  %v1154 = vld [vmem:[%s1109 + $0x160] sm:$0xff]
  %v1155 = vld [vmem:[%s1109 + $0x168] sm:$0xff]
  %v1156 = vld [vmem:[%s1109 + $0x170] sm:$0xff]
  %v1157 = vld [vmem:[%s1109 + $0x178] sm:$0xff]
  %v1158 = vld [vmem:[%s1109 + $0x180] sm:$0xff]
  %v1159 = vld [vmem:[%s1109 + $0x188] sm:$0xff]
  %v1160 = vld [vmem:[%s1109 + $0x190] sm:$0xff]
  %v1161 = vld [vmem:[%s1109 + $0x198] sm:$0xff]
  %v1162 = vld [vmem:[%s1109 + $0x1a0] sm:$0xff]
  %v1163 = vld [vmem:[%s1109 + $0x1a8] sm:$0xff]
  %v1164 = vld [vmem:[%s1109 + $0x1b0] sm:$0xff]
  %v1165 = vld [vmem:[%s1109 + $0x1b8] sm:$0xff]
  %v1166 = vld [vmem:[%s1109 + $0x1c0] sm:$0xff]
  %v1167 = vld [vmem:[%s1109 + $0x1c8] sm:$0xff]
  %v1168 = vld [vmem:[%s1109 + $0x1d0] sm:$0xff]
  %v1169 = vld [vmem:[%s1109 + $0x1d8] sm:$0xff]
  %v1170 = vld [vmem:[%s1109 + $0x1e0] sm:$0xff]
  %v1171 = vld [vmem:[%s1109 + $0x1e8] sm:$0xff]
  %v1172 = vld [vmem:[%s1109 + $0x1f0] sm:$0x33]
  %v1236 = vunpack.c.l.b16 %v1110
  %v1237 = vunpack.c.h.b16 %v1110
  %v1238 = vunpack.c.l.b16 %v1111
  %v1239 = vunpack.c.h.b16 %v1111
  %v1240 = vunpack.c.l.b16 %v1112
  %v1241 = vunpack.c.h.b16 %v1112
  %v1242 = vunpack.c.l.b16 %v1113
  %v1243 = vunpack.c.h.b16 %v1113
  %v1244 = vunpack.c.l.b16 %v1114
  %v1245 = vunpack.c.h.b16 %v1114
  %v1246 = vunpack.c.l.b16 %v1115
  %v1247 = vunpack.c.h.b16 %v1115
  %v1248 = vunpack.c.l.b16 %v1116
  %v1249 = vunpack.c.h.b16 %v1116
  %v1250 = vunpack.c.l.b16 %v1117
  %v1251 = vunpack.c.h.b16 %v1117
  %v1252 = vunpack.c.l.b16 %v1118
  %v1253 = vunpack.c.h.b16 %v1118
  %v1254 = vunpack.c.l.b16 %v1119
  %v1255 = vunpack.c.h.b16 %v1119
  %v1256 = vunpack.c.l.b16 %v1120
  %v1257 = vunpack.c.h.b16 %v1120
  %v1258 = vunpack.c.l.b16 %v1121
  %v1259 = vunpack.c.h.b16 %v1121
  %v1260 = vunpack.c.l.b16 %v1122
  %v1261 = vunpack.c.h.b16 %v1122
  %v1262 = vunpack.c.l.b16 %v1123
  %v1263 = vunpack.c.h.b16 %v1123
  %v1264 = vunpack.c.l.b16 %v1124
  %v1265 = vunpack.c.h.b16 %v1124
  %v1266 = vunpack.c.l.b16 %v1125
  %v1267 = vunpack.c.h.b16 %v1125
  %v1268 = vunpack.c.l.b16 %v1126
  %v1269 = vunpack.c.h.b16 %v1126
  %v1270 = vunpack.c.l.b16 %v1127
  %v1271 = vunpack.c.h.b16 %v1127
  %v1272 = vunpack.c.l.b16 %v1128
  %v1273 = vunpack.c.h.b16 %v1128
  %v1274 = vunpack.c.l.b16 %v1129
  %v1275 = vunpack.c.h.b16 %v1129
  %v1276 = vunpack.c.l.b16 %v1130
  %v1277 = vunpack.c.h.b16 %v1130
  %v1278 = vunpack.c.l.b16 %v1131
  %v1279 = vunpack.c.h.b16 %v1131
  %v1280 = vunpack.c.l.b16 %v1132
  %v1281 = vunpack.c.h.b16 %v1132
  %v1282 = vunpack.c.l.b16 %v1133
  %v1283 = vunpack.c.h.b16 %v1133
  %v1284 = vunpack.c.l.b16 %v1134
  %v1285 = vunpack.c.h.b16 %v1134
  %v1286 = vunpack.c.l.b16 %v1135
  %v1287 = vunpack.c.h.b16 %v1135
  %v1288 = vunpack.c.l.b16 %v1136
  %v1289 = vunpack.c.h.b16 %v1136
  %v1290 = vunpack.c.l.b16 %v1137
  %v1291 = vunpack.c.h.b16 %v1137
  %v1292 = vunpack.c.l.b16 %v1138
  %v1293 = vunpack.c.h.b16 %v1138
  %v1294 = vunpack.c.l.b16 %v1139
  %v1295 = vunpack.c.h.b16 %v1139
  %v1296 = vunpack.c.l.b16 %v1140
  %v1297 = vunpack.c.h.b16 %v1140
  %v1298 = vunpack.c.l.b16 %v1141
  %v1299 = vunpack.c.h.b16 %v1141
  %v1300 = vunpack.c.l.b16 %v1142
  %v1301 = vunpack.c.h.b16 %v1142
  %v1302 = vunpack.c.l.b16 %v1143
  %v1303 = vunpack.c.h.b16 %v1143
  %v1304 = vunpack.c.l.b16 %v1144
  %v1305 = vunpack.c.h.b16 %v1144
  %v1306 = vunpack.c.l.b16 %v1145
  %v1307 = vunpack.c.h.b16 %v1145
  %v1308 = vunpack.c.l.b16 %v1146
  %v1309 = vunpack.c.h.b16 %v1146
  %v1310 = vunpack.c.l.b16 %v1147
  %v1311 = vunpack.c.h.b16 %v1147
  %v1312 = vunpack.c.l.b16 %v1148
  %v1313 = vunpack.c.h.b16 %v1148
  %v1314 = vunpack.c.l.b16 %v1149
  %v1315 = vunpack.c.h.b16 %v1149
  %v1316 = vunpack.c.l.b16 %v1150
  %v1317 = vunpack.c.h.b16 %v1150
  %v1318 = vunpack.c.l.b16 %v1151
  %v1319 = vunpack.c.h.b16 %v1151
  %v1320 = vunpack.c.l.b16 %v1152
  %v1321 = vunpack.c.h.b16 %v1152
  %v1322 = vunpack.c.l.b16 %v1153
  %v1323 = vunpack.c.h.b16 %v1153
  %v1324 = vunpack.c.l.b16 %v1154
  %v1325 = vunpack.c.h.b16 %v1154
  %v1326 = vunpack.c.l.b16 %v1155
  %v1327 = vunpack.c.h.b16 %v1155
  %v1328 = vunpack.c.l.b16 %v1156
  %v1329 = vunpack.c.h.b16 %v1156
  %v1330 = vunpack.c.l.b16 %v1157
  %v1331 = vunpack.c.h.b16 %v1157
  %v1332 = vunpack.c.l.b16 %v1158
  %v1333 = vunpack.c.h.b16 %v1158
  %v1334 = vunpack.c.l.b16 %v1159
  %v1335 = vunpack.c.h.b16 %v1159
  %v1336 = vunpack.c.l.b16 %v1160
  %v1337 = vunpack.c.h.b16 %v1160
  %v1338 = vunpack.c.l.b16 %v1161
  %v1339 = vunpack.c.h.b16 %v1161
  %v1340 = vunpack.c.l.b16 %v1162
  %v1341 = vunpack.c.h.b16 %v1162
  %v1342 = vunpack.c.l.b16 %v1163
  %v1343 = vunpack.c.h.b16 %v1163
  %v1344 = vunpack.c.l.b16 %v1164
  %v1345 = vunpack.c.h.b16 %v1164
  %v1346 = vunpack.c.l.b16 %v1165
  %v1347 = vunpack.c.h.b16 %v1165
  %v1348 = vunpack.c.l.b16 %v1166
  %v1349 = vunpack.c.h.b16 %v1166
  %v1350 = vunpack.c.l.b16 %v1167
  %v1351 = vunpack.c.h.b16 %v1167
  %v1352 = vunpack.c.l.b16 %v1168
  %v1353 = vunpack.c.h.b16 %v1168
  %v1354 = vunpack.c.l.b16 %v1169
  %v1355 = vunpack.c.h.b16 %v1169
  %v1356 = vunpack.c.l.b16 %v1170
  %v1357 = vunpack.c.h.b16 %v1170
  %v1358 = vunpack.c.l.b16 %v1171
  %v1359 = vunpack.c.h.b16 %v1171
  %v1360 = vunpack.c.l.b16 %v1172
  %v1361 = vunpack.c.h.b16 %v1172
  %v1362 = vpack.c.b16 %v1238, %v1236
  %v1363 = vpack.c.b16 %v1239, %v1237
  %v1364 = vpack.c.b16 %v1242, %v1240
  %v1365 = vpack.c.b16 %v1243, %v1241
  %v1366 = vpack.c.b16 %v1246, %v1244
  %v1367 = vpack.c.b16 %v1247, %v1245
  %v1368 = vpack.c.b16 %v1250, %v1248
  %v1369 = vpack.c.b16 %v1251, %v1249
  %v1370 = vpack.c.b16 %v1254, %v1252
  %v1371 = vpack.c.b16 %v1255, %v1253
  %v1372 = vpack.c.b16 %v1258, %v1256
  %v1373 = vpack.c.b16 %v1259, %v1257
  %v1374 = vpack.c.b16 %v1262, %v1260
  %v1375 = vpack.c.b16 %v1263, %v1261
  %v1376 = vpack.c.b16 %v1266, %v1264
  %v1377 = vpack.c.b16 %v1267, %v1265
  %v1378 = vpack.c.b16 %v1270, %v1268
  %v1379 = vpack.c.b16 %v1271, %v1269
  %v1380 = vpack.c.b16 %v1274, %v1272
  %v1381 = vpack.c.b16 %v1275, %v1273
  %v1382 = vpack.c.b16 %v1278, %v1276
  %v1383 = vpack.c.b16 %v1279, %v1277
  %v1384 = vpack.c.b16 %v1282, %v1280
  %v1385 = vpack.c.b16 %v1283, %v1281
  %v1386 = vpack.c.b16 %v1286, %v1284
  %v1387 = vpack.c.b16 %v1287, %v1285
  %v1388 = vpack.c.b16 %v1290, %v1288
  %v1389 = vpack.c.b16 %v1291, %v1289
  %v1390 = vpack.c.b16 %v1294, %v1292
  %v1391 = vpack.c.b16 %v1295, %v1293
  %v1392 = vpack.c.b16 %v1298, %v1296
  %v1393 = vpack.c.b16 %v1299, %v1297
  %v1394 = vpack.c.b16 %v1302, %v1300
  %v1395 = vpack.c.b16 %v1303, %v1301
  %v1396 = vpack.c.b16 %v1306, %v1304
  %v1397 = vpack.c.b16 %v1307, %v1305
  %v1398 = vpack.c.b16 %v1310, %v1308
  %v1399 = vpack.c.b16 %v1311, %v1309
  %v1400 = vpack.c.b16 %v1314, %v1312
  %v1401 = vpack.c.b16 %v1315, %v1313
  %v1402 = vpack.c.b16 %v1318, %v1316
  %v1403 = vpack.c.b16 %v1319, %v1317
  %v1404 = vpack.c.b16 %v1322, %v1320
  %v1405 = vpack.c.b16 %v1323, %v1321
  %v1406 = vpack.c.b16 %v1326, %v1324
  %v1407 = vpack.c.b16 %v1327, %v1325
  %v1408 = vpack.c.b16 %v1330, %v1328
  %v1409 = vpack.c.b16 %v1331, %v1329
  %v1410 = vpack.c.b16 %v1334, %v1332
  %v1411 = vpack.c.b16 %v1335, %v1333
  %v1412 = vpack.c.b16 %v1338, %v1336
  %v1413 = vpack.c.b16 %v1339, %v1337
  %v1414 = vpack.c.b16 %v1342, %v1340
  %v1415 = vpack.c.b16 %v1343, %v1341
  %v1416 = vpack.c.b16 %v1346, %v1344
  %v1417 = vpack.c.b16 %v1347, %v1345
  %v1418 = vpack.c.b16 %v1350, %v1348
  %v1419 = vpack.c.b16 %v1351, %v1349
  %v1420 = vpack.c.b16 %v1354, %v1352
  %v1421 = vpack.c.b16 %v1355, %v1353
  %v1422 = vpack.c.b16 %v1358, %v1356
  %v1423 = vpack.c.b16 %v1359, %v1357
  %v1424 = vpack.c.b16 %v1360, %v1360
  %v1425 = vpack.c.b16 %v1361, %v1361
  %v1489 = vsel %vm463, %v1424, 0
  %v1492 = vsel %vm463, %v1425, 0
  %1494 = vmatprep.subr.bf16.mxu0 %v1363
  %1495 = vmatpush1.bf16.msra.mxu0 %v1362
  %1496 = vmatprep.subr.bf16.mxu0 %v1365
  %1497 = vmatpush1.bf16.msra.mxu0 %v1364
  %1498 = vmatprep.subr.bf16.mxu0 %v1367
  %1499 = vmatpush1.bf16.msra.mxu0 %v1366
  %1500 = vmatprep.subr.bf16.mxu0 %v1369
  %1501 = vmatpush1.bf16.msra.mxu0 %v1368
  %1502 = vmatprep.subr.bf16.mxu0 %v1371
  %1503 = vmatpush1.bf16.msra.mxu0 %v1370
  %1504 = vmatprep.subr.bf16.mxu0 %v1373
  %1505 = vmatpush1.bf16.msra.mxu0 %v1372
  %1506 = vmatprep.subr.bf16.mxu0 %v1375
  %1507 = vmatpush1.bf16.msra.mxu0 %v1374
  %1508 = vmatprep.subr.bf16.mxu0 %v1377
  %1509 = vmatpush1.bf16.msra.mxu0 %v1376
  %1510 = vmatprep.subr.bf16.mxu0 %v1379
  %1511 = vmatpush1.bf16.msra.mxu0 %v1378
  %1512 = vmatprep.subr.bf16.mxu0 %v1381
  %1513 = vmatpush1.bf16.msra.mxu0 %v1380
  %1514 = vmatprep.subr.bf16.mxu0 %v1383
  %1515 = vmatpush1.bf16.msra.mxu0 %v1382
  %1516 = vmatprep.subr.bf16.mxu0 %v1385
  %1517 = vmatpush1.bf16.msra.mxu0 %v1384
  %1518 = vmatprep.subr.bf16.mxu0 %v1387
  %1519 = vmatpush1.bf16.msra.mxu0 %v1386
  %1520 = vmatprep.subr.bf16.mxu0 %v1389
  %1521 = vmatpush1.bf16.msra.mxu0 %v1388
  %1522 = vmatprep.subr.bf16.mxu0 %v1391
  %1523 = vmatpush1.bf16.msra.mxu0 %v1390
  %1524 = vmatprep.subr.bf16.mxu0 %v1393
  %1525 = vmatpush1.bf16.msra.mxu0 %v1392
  %1526 = vmatprep.mubr.bf16.mxu0 %v118
  %1527 = vmatmul.mubr.bf16.gmra.mrb[0].mxu0 %v117
  %v1528 = vpop.f32.mrb[0].mxu0
  %v1529 = vadd.f32 0.0, %v1528
  %v1530 = vpop.f32.mrb[0].mxu0
  %v1531 = vadd.f32 0.0, %v1530
  %v1532 = vpop.f32.mrb[0].mxu0
  %v1533 = vadd.f32 0.0, %v1532
  %v1534 = vpop.f32.mrb[0].mxu0
  %v1535 = vadd.f32 0.0, %v1534
  %1536 = vmatprep.mubr.bf16.mxu0 %v122
  %1537 = vmatmul.mubr.bf16.gmra.mrb[0].mxu0 %v121
  %v1538 = vpop.f32.mrb[0].mxu0
  %v1539 = vadd.f32 0.0, %v1538
  %v1540 = vpop.f32.mrb[0].mxu0
  %v1541 = vadd.f32 0.0, %v1540
  %v1542 = vpop.f32.mrb[0].mxu0
  %v1543 = vadd.f32 0.0, %v1542
  %v1544 = vpop.f32.mrb[0].mxu0
  %v1545 = vadd.f32 0.0, %v1544
  %1546 = vmatprep.mubr.bf16.mxu0 %v126
  %1547 = vmatmul.mubr.bf16.gmra.mrb[0].mxu0 %v125
  %v1548 = vpop.f32.mrb[0].mxu0
  %v1549 = vadd.f32 0.0, %v1548
  %v1550 = vpop.f32.mrb[0].mxu0
  %v1551 = vadd.f32 0.0, %v1550
  %v1552 = vpop.f32.mrb[0].mxu0
  %v1553 = vpop.f32.mrb[0].mxu0
  %1554 = vdwg.mxu0
  %1555 = vmatprep.subr.bf16.mxu0 %v1395
  %1556 = vmatpush1.bf16.msra.mxu0 %v1394
  %1557 = vmatprep.subr.bf16.mxu0 %v1397
  %1558 = vmatpush1.bf16.msra.mxu0 %v1396
  %1559 = vmatprep.subr.bf16.mxu0 %v1399
  %1560 = vmatpush1.bf16.msra.mxu0 %v1398
  %1561 = vmatprep.subr.bf16.mxu0 %v1401
  %1562 = vmatpush1.bf16.msra.mxu0 %v1400
  %1563 = vmatprep.subr.bf16.mxu0 %v1403
  %1564 = vmatpush1.bf16.msra.mxu0 %v1402
  %1565 = vmatprep.subr.bf16.mxu0 %v1405
  %1566 = vmatpush1.bf16.msra.mxu0 %v1404
  %1567 = vmatprep.subr.bf16.mxu0 %v1407
  %1568 = vmatpush1.bf16.msra.mxu0 %v1406
  %1569 = vmatprep.subr.bf16.mxu0 %v1409
  %1570 = vmatpush1.bf16.msra.mxu0 %v1408
  %1571 = vmatprep.subr.bf16.mxu0 %v1411
  %1572 = vmatpush1.bf16.msra.mxu0 %v1410
  %1573 = vmatprep.subr.bf16.mxu0 %v1413
  %1574 = vmatpush1.bf16.msra.mxu0 %v1412
  %1575 = vmatprep.subr.bf16.mxu0 %v1415
  %1576 = vmatpush1.bf16.msra.mxu0 %v1414
  %1577 = vmatprep.subr.bf16.mxu0 %v1417
  %1578 = vmatpush1.bf16.msra.mxu0 %v1416
  %1579 = vmatprep.subr.bf16.mxu0 %v1419
  %1580 = vmatpush1.bf16.msra.mxu0 %v1418
  %1581 = vmatprep.subr.bf16.mxu0 %v1421
  %1582 = vmatpush1.bf16.msra.mxu0 %v1420
  %1583 = vmatprep.subr.bf16.mxu0 %v1423
  %1584 = vmatpush1.bf16.msra.mxu0 %v1422
  %1585 = vmatprep.subr.bf16.mxu0 %v1492
  %1586 = vmatpush1.bf16.msra.mxu0 %v1489
  %1587 = vmatprep.mubr.bf16.mxu0 %v455
  %1588 = vmatmul.mubr.bf16.gmra.mrb[0].mxu0 %v119
  %v1589 = vpop.f32.mrb[0].mxu0
  %v1590 = vadd.f32 %v1529, %v1589
  %v1591 = vpop.f32.mrb[0].mxu0
  %v1592 = vadd.f32 %v1531, %v1591
  %v1593 = vpop.f32.mrb[0].mxu0
  %v1594 = vadd.f32 %v1533, %v1593
  %v1595 = vpop.f32.mrb[0].mxu0
  %v1596 = vadd.f32 %v1535, %v1595
  %1597 = vmatprep.mubr.bf16.mxu0 %v458
  %1598 = vmatmul.mubr.bf16.gmra.mrb[0].mxu0 %v123
  %v1599 = vpop.f32.mrb[0].mxu0
  %v1600 = vadd.f32 %v1539, %v1599
  %v1601 = vpop.f32.mrb[0].mxu0
  %v1602 = vadd.f32 %v1541, %v1601
  %v1603 = vpop.f32.mrb[0].mxu0
  %v1604 = vadd.f32 %v1543, %v1603
  %v1605 = vpop.f32.mrb[0].mxu0
  %v1606 = vadd.f32 %v1545, %v1605
  %1607 = vmatprep.mubr.bf16.mxu0 %v461
  %1608 = vmatmul.mubr.bf16.gmra.mrb[0].mxu0 %v127
  %v1609 = vpop.f32.mrb[0].mxu0
  %v1610 = vadd.f32 %v1549, %v1609
  %v1611 = vpop.f32.mrb[0].mxu0
  %v1612 = vadd.f32 %v1551, %v1611
  %v1613 = vpop.f32.mrb[0].mxu0
  %v1614 = vpop.f32.mrb[0].mxu0
  %1615 = vdwg.mxu0
  %v1616 = vmax.f32 %v1099, %v1590
  %v1617 = vmax.f32 %v1100, %v1592
  %v1618 = vmax.f32 %v1101, %v1594
  %v1619 = vmax.f32 %v1102, %v1596
  %v1620 = vmax.f32 %v1103, %v1600
  %v1621 = vmax.f32 %v1104, %v1602
  %v1622 = vmax.f32 %v1105, %v1604
  %v1623 = vmax.f32 %v1106, %v1606
  %v1624 = vmax.f32 %v1107, %v1610
  %v1625 = vmax.f32 %v1108, %v1612
  %s1626 = scalar_lea.vmem %s1, 1512
  %v1627 = vld [vmem:[%s1626] sm:$0xff]
  %v1628 = vld [vmem:[%s1626 + $0x8] sm:$0xff]
  %v1629 = vld [vmem:[%s1626 + $0x10] sm:$0xff]
  %v1630 = vld [vmem:[%s1626 + $0x18] sm:$0xff]
  %v1631 = vld [vmem:[%s1626 + $0x20] sm:$0xff]
  %v1632 = vld [vmem:[%s1626 + $0x28] sm:$0xff]
  %v1633 = vld [vmem:[%s1626 + $0x30] sm:$0xff]
  %v1634 = vld [vmem:[%s1626 + $0x38] sm:$0xff]
  %v1635 = vld [vmem:[%s1626 + $0x40] sm:$0xff]
  %v1636 = vld [vmem:[%s1626 + $0x48] sm:$0xff]
  %v1637 = vld [vmem:[%s1626 + $0x50] sm:$0xff]
  %v1638 = vld [vmem:[%s1626 + $0x58] sm:$0xff]
  %v1639 = vld [vmem:[%s1626 + $0x60] sm:$0xff]
  %v1640 = vld [vmem:[%s1626 + $0x68] sm:$0xff]
  %v1641 = vld [vmem:[%s1626 + $0x70] sm:$0xff]
  %v1642 = vld [vmem:[%s1626 + $0x78] sm:$0xff]
  %v1643 = vld [vmem:[%s1626 + $0x80] sm:$0xff]
  %v1644 = vld [vmem:[%s1626 + $0x88] sm:$0xff]
  %v1645 = vld [vmem:[%s1626 + $0x90] sm:$0xff]
  %v1646 = vld [vmem:[%s1626 + $0x98] sm:$0xff]
  %v1647 = vld [vmem:[%s1626 + $0xa0] sm:$0xff]
  %v1648 = vld [vmem:[%s1626 + $0xa8] sm:$0xff]
  %v1649 = vld [vmem:[%s1626 + $0xb0] sm:$0xff]
  %v1650 = vld [vmem:[%s1626 + $0xb8] sm:$0xff]
  %v1651 = vld [vmem:[%s1626 + $0xc0] sm:$0xff]
  %v1652 = vld [vmem:[%s1626 + $0xc8] sm:$0xff]
  %v1653 = vld [vmem:[%s1626 + $0xd0] sm:$0xff]
  %v1654 = vld [vmem:[%s1626 + $0xd8] sm:$0xff]
  %v1655 = vld [vmem:[%s1626 + $0xe0] sm:$0xff]
  %v1656 = vld [vmem:[%s1626 + $0xe8] sm:$0xff]
  %v1657 = vld [vmem:[%s1626 + $0xf0] sm:$0xff]
  %v1658 = vld [vmem:[%s1626 + $0xf8] sm:$0xff]
  %v1659 = vld [vmem:[%s1626 + $0x100] sm:$0xff]
  %v1660 = vld [vmem:[%s1626 + $0x108] sm:$0xff]
  %v1661 = vld [vmem:[%s1626 + $0x110] sm:$0xff]
  %v1662 = vld [vmem:[%s1626 + $0x118] sm:$0xff]
  %v1663 = vld [vmem:[%s1626 + $0x120] sm:$0xff]
  %v1664 = vld [vmem:[%s1626 + $0x128] sm:$0xff]
  %v1665 = vld [vmem:[%s1626 + $0x130] sm:$0xff]
  %v1666 = vld [vmem:[%s1626 + $0x138] sm:$0xff]
  %v1667 = vld [vmem:[%s1626 + $0x140] sm:$0xff]
  %v1668 = vld [vmem:[%s1626 + $0x148] sm:$0xff]
  %v1669 = vld [vmem:[%s1626 + $0x150] sm:$0xff]
  %v1670 = vld [vmem:[%s1626 + $0x158] sm:$0xff]
  %v1671 = vld [vmem:[%s1626 + $0x160] sm:$0xff]
  %v1672 = vld [vmem:[%s1626 + $0x168] sm:$0xff]
  %v1673 = vld [vmem:[%s1626 + $0x170] sm:$0xff]
  %v1674 = vld [vmem:[%s1626 + $0x178] sm:$0xff]
  %v1675 = vld [vmem:[%s1626 + $0x180] sm:$0xff]
  %v1676 = vld [vmem:[%s1626 + $0x188] sm:$0xff]
  %v1677 = vld [vmem:[%s1626 + $0x190] sm:$0xff]
  %v1678 = vld [vmem:[%s1626 + $0x198] sm:$0xff]
  %v1679 = vld [vmem:[%s1626 + $0x1a0] sm:$0xff]
  %v1680 = vld [vmem:[%s1626 + $0x1a8] sm:$0xff]
  %v1681 = vld [vmem:[%s1626 + $0x1b0] sm:$0xff]
  %v1682 = vld [vmem:[%s1626 + $0x1b8] sm:$0xff]
  %v1683 = vld [vmem:[%s1626 + $0x1c0] sm:$0xff]
  %v1684 = vld [vmem:[%s1626 + $0x1c8] sm:$0xff]
  %v1685 = vld [vmem:[%s1626 + $0x1d0] sm:$0xff]
  %v1686 = vld [vmem:[%s1626 + $0x1d8] sm:$0xff]
  %v1687 = vld [vmem:[%s1626 + $0x1e0] sm:$0xff]
  %v1688 = vld [vmem:[%s1626 + $0x1e8] sm:$0xff]
  %v1689 = vld [vmem:[%s1626 + $0x1f0] sm:$0x33]
  %v1753 = vunpack.c.l.b16 %v1627
  %v1754 = vunpack.c.h.b16 %v1627
  %v1755 = vunpack.c.l.b16 %v1628
  %v1756 = vunpack.c.h.b16 %v1628
  %v1757 = vunpack.c.l.b16 %v1629
  %v1758 = vunpack.c.h.b16 %v1629
  %v1759 = vunpack.c.l.b16 %v1630
  %v1760 = vunpack.c.h.b16 %v1630
  %v1761 = vunpack.c.l.b16 %v1631
  %v1762 = vunpack.c.h.b16 %v1631
  %v1763 = vunpack.c.l.b16 %v1632
  %v1764 = vunpack.c.h.b16 %v1632
  %v1765 = vunpack.c.l.b16 %v1633
  %v1766 = vunpack.c.h.b16 %v1633
  %v1767 = vunpack.c.l.b16 %v1634
  %v1768 = vunpack.c.h.b16 %v1634
  %v1769 = vunpack.c.l.b16 %v1635
  %v1770 = vunpack.c.h.b16 %v1635
  %v1771 = vunpack.c.l.b16 %v1636
  %v1772 = vunpack.c.h.b16 %v1636
  %v1773 = vunpack.c.l.b16 %v1637
  %v1774 = vunpack.c.h.b16 %v1637
  %v1775 = vunpack.c.l.b16 %v1638
  %v1776 = vunpack.c.h.b16 %v1638
  %v1777 = vunpack.c.l.b16 %v1639
  %v1778 = vunpack.c.h.b16 %v1639
  %v1779 = vunpack.c.l.b16 %v1640
  %v1780 = vunpack.c.h.b16 %v1640
  %v1781 = vunpack.c.l.b16 %v1641
  %v1782 = vunpack.c.h.b16 %v1641
  %v1783 = vunpack.c.l.b16 %v1642
  %v1784 = vunpack.c.h.b16 %v1642
  %v1785 = vunpack.c.l.b16 %v1643
  %v1786 = vunpack.c.h.b16 %v1643
  %v1787 = vunpack.c.l.b16 %v1644
  %v1788 = vunpack.c.h.b16 %v1644
  %v1789 = vunpack.c.l.b16 %v1645
  %v1790 = vunpack.c.h.b16 %v1645
  %v1791 = vunpack.c.l.b16 %v1646
  %v1792 = vunpack.c.h.b16 %v1646
  %v1793 = vunpack.c.l.b16 %v1647
  %v1794 = vunpack.c.h.b16 %v1647
  %v1795 = vunpack.c.l.b16 %v1648
  %v1796 = vunpack.c.h.b16 %v1648
  %v1797 = vunpack.c.l.b16 %v1649
  %v1798 = vunpack.c.h.b16 %v1649
  %v1799 = vunpack.c.l.b16 %v1650
  %v1800 = vunpack.c.h.b16 %v1650
  %v1801 = vunpack.c.l.b16 %v1651
  %v1802 = vunpack.c.h.b16 %v1651
  %v1803 = vunpack.c.l.b16 %v1652
  %v1804 = vunpack.c.h.b16 %v1652
  %v1805 = vunpack.c.l.b16 %v1653
  %v1806 = vunpack.c.h.b16 %v1653
  %v1807 = vunpack.c.l.b16 %v1654
  %v1808 = vunpack.c.h.b16 %v1654
  %v1809 = vunpack.c.l.b16 %v1655
  %v1810 = vunpack.c.h.b16 %v1655
  %v1811 = vunpack.c.l.b16 %v1656
  %v1812 = vunpack.c.h.b16 %v1656
  %v1813 = vunpack.c.l.b16 %v1657
  %v1814 = vunpack.c.h.b16 %v1657
  %v1815 = vunpack.c.l.b16 %v1658
  %v1816 = vunpack.c.h.b16 %v1658
  %v1817 = vunpack.c.l.b16 %v1659
  %v1818 = vunpack.c.h.b16 %v1659
  %v1819 = vunpack.c.l.b16 %v1660
  %v1820 = vunpack.c.h.b16 %v1660
  %v1821 = vunpack.c.l.b16 %v1661
  %v1822 = vunpack.c.h.b16 %v1661
  %v1823 = vunpack.c.l.b16 %v1662
  %v1824 = vunpack.c.h.b16 %v1662
  %v1825 = vunpack.c.l.b16 %v1663
  %v1826 = vunpack.c.h.b16 %v1663
  %v1827 = vunpack.c.l.b16 %v1664
  %v1828 = vunpack.c.h.b16 %v1664
  %v1829 = vunpack.c.l.b16 %v1665
  %v1830 = vunpack.c.h.b16 %v1665
  %v1831 = vunpack.c.l.b16 %v1666
  %v1832 = vunpack.c.h.b16 %v1666
  %v1833 = vunpack.c.l.b16 %v1667
  %v1834 = vunpack.c.h.b16 %v1667
  %v1835 = vunpack.c.l.b16 %v1668
  %v1836 = vunpack.c.h.b16 %v1668
  %v1837 = vunpack.c.l.b16 %v1669
  %v1838 = vunpack.c.h.b16 %v1669
  %v1839 = vunpack.c.l.b16 %v1670
  %v1840 = vunpack.c.h.b16 %v1670
  %v1841 = vunpack.c.l.b16 %v1671
  %v1842 = vunpack.c.h.b16 %v1671
  %v1843 = vunpack.c.l.b16 %v1672
  %v1844 = vunpack.c.h.b16 %v1672
  %v1845 = vunpack.c.l.b16 %v1673
  %v1846 = vunpack.c.h.b16 %v1673
  %v1847 = vunpack.c.l.b16 %v1674
  %v1848 = vunpack.c.h.b16 %v1674
  %v1849 = vunpack.c.l.b16 %v1675
  %v1850 = vunpack.c.h.b16 %v1675
  %v1851 = vunpack.c.l.b16 %v1676
  %v1852 = vunpack.c.h.b16 %v1676
  %v1853 = vunpack.c.l.b16 %v1677
  %v1854 = vunpack.c.h.b16 %v1677
  %v1855 = vunpack.c.l.b16 %v1678
  %v1856 = vunpack.c.h.b16 %v1678
  %v1857 = vunpack.c.l.b16 %v1679
  %v1858 = vunpack.c.h.b16 %v1679
  %v1859 = vunpack.c.l.b16 %v1680
  %v1860 = vunpack.c.h.b16 %v1680
  %v1861 = vunpack.c.l.b16 %v1681
  %v1862 = vunpack.c.h.b16 %v1681
  %v1863 = vunpack.c.l.b16 %v1682
  %v1864 = vunpack.c.h.b16 %v1682
  %v1865 = vunpack.c.l.b16 %v1683
  %v1866 = vunpack.c.h.b16 %v1683
  %v1867 = vunpack.c.l.b16 %v1684
  %v1868 = vunpack.c.h.b16 %v1684
  %v1869 = vunpack.c.l.b16 %v1685
  %v1870 = vunpack.c.h.b16 %v1685
  %v1871 = vunpack.c.l.b16 %v1686
  %v1872 = vunpack.c.h.b16 %v1686
  %v1873 = vunpack.c.l.b16 %v1687
  %v1874 = vunpack.c.h.b16 %v1687
  %v1875 = vunpack.c.l.b16 %v1688
  %v1876 = vunpack.c.h.b16 %v1688
  %v1877 = vunpack.c.l.b16 %v1689
  %v1878 = vunpack.c.h.b16 %v1689
  %v1879 = vpack.c.b16 %v1755, %v1753
  %v1880 = vpack.c.b16 %v1756, %v1754
  %v1881 = vpack.c.b16 %v1759, %v1757
  %v1882 = vpack.c.b16 %v1760, %v1758
  %v1883 = vpack.c.b16 %v1763, %v1761
  %v1884 = vpack.c.b16 %v1764, %v1762
  %v1885 = vpack.c.b16 %v1767, %v1765
  %v1886 = vpack.c.b16 %v1768, %v1766
  %v1887 = vpack.c.b16 %v1771, %v1769
  %v1888 = vpack.c.b16 %v1772, %v1770
  %v1889 = vpack.c.b16 %v1775, %v1773
  %v1890 = vpack.c.b16 %v1776, %v1774
  %v1891 = vpack.c.b16 %v1779, %v1777
  %v1892 = vpack.c.b16 %v1780, %v1778
  %v1893 = vpack.c.b16 %v1783, %v1781
  %v1894 = vpack.c.b16 %v1784, %v1782
  %v1895 = vpack.c.b16 %v1787, %v1785
  %v1896 = vpack.c.b16 %v1788, %v1786
  %v1897 = vpack.c.b16 %v1791, %v1789
  %v1898 = vpack.c.b16 %v1792, %v1790
  %v1899 = vpack.c.b16 %v1795, %v1793
  %v1900 = vpack.c.b16 %v1796, %v1794
  %v1901 = vpack.c.b16 %v1799, %v1797
  %v1902 = vpack.c.b16 %v1800, %v1798
  %v1903 = vpack.c.b16 %v1803, %v1801
  %v1904 = vpack.c.b16 %v1804, %v1802
  %v1905 = vpack.c.b16 %v1807, %v1805
  %v1906 = vpack.c.b16 %v1808, %v1806
  %v1907 = vpack.c.b16 %v1811, %v1809
  %v1908 = vpack.c.b16 %v1812, %v1810
  %v1909 = vpack.c.b16 %v1815, %v1813
  %v1910 = vpack.c.b16 %v1816, %v1814
  %v1911 = vpack.c.b16 %v1819, %v1817
  %v1912 = vpack.c.b16 %v1820, %v1818
  %v1913 = vpack.c.b16 %v1823, %v1821
  %v1914 = vpack.c.b16 %v1824, %v1822
  %v1915 = vpack.c.b16 %v1827, %v1825
  %v1916 = vpack.c.b16 %v1828, %v1826
  %v1917 = vpack.c.b16 %v1831, %v1829
  %v1918 = vpack.c.b16 %v1832, %v1830
  %v1919 = vpack.c.b16 %v1835, %v1833
  %v1920 = vpack.c.b16 %v1836, %v1834
  %v1921 = vpack.c.b16 %v1839, %v1837
  %v1922 = vpack.c.b16 %v1840, %v1838
  %v1923 = vpack.c.b16 %v1843, %v1841
  %v1924 = vpack.c.b16 %v1844, %v1842
  %v1925 = vpack.c.b16 %v1847, %v1845
  %v1926 = vpack.c.b16 %v1848, %v1846
  %v1927 = vpack.c.b16 %v1851, %v1849
  %v1928 = vpack.c.b16 %v1852, %v1850
  %v1929 = vpack.c.b16 %v1855, %v1853
  %v1930 = vpack.c.b16 %v1856, %v1854
  %v1931 = vpack.c.b16 %v1859, %v1857
  %v1932 = vpack.c.b16 %v1860, %v1858
  %v1933 = vpack.c.b16 %v1863, %v1861
  %v1934 = vpack.c.b16 %v1864, %v1862
  %v1935 = vpack.c.b16 %v1867, %v1865
  %v1936 = vpack.c.b16 %v1868, %v1866
  %v1937 = vpack.c.b16 %v1871, %v1869
  %v1938 = vpack.c.b16 %v1872, %v1870
  %v1939 = vpack.c.b16 %v1875, %v1873
  %v1940 = vpack.c.b16 %v1876, %v1874
  %v1941 = vpack.c.b16 %v1877, %v1877
  %v1942 = vpack.c.b16 %v1878, %v1878
  %v2006 = vsel %vm463, %v1941, 0
  %v2009 = vsel %vm463, %v1942, 0
  %2011 = vmatprep.subr.bf16.mxu0 %v1880
  %2012 = vmatpush1.bf16.msra.mxu0 %v1879
  %2013 = vmatprep.subr.bf16.mxu0 %v1882
  %2014 = vmatpush1.bf16.msra.mxu0 %v1881
  %2015 = vmatprep.subr.bf16.mxu0 %v1884
  %2016 = vmatpush1.bf16.msra.mxu0 %v1883
  %2017 = vmatprep.subr.bf16.mxu0 %v1886
  %2018 = vmatpush1.bf16.msra.mxu0 %v1885
  %2019 = vmatprep.subr.bf16.mxu0 %v1888
  %2020 = vmatpush1.bf16.msra.mxu0 %v1887
  %2021 = vmatprep.subr.bf16.mxu0 %v1890
  %2022 = vmatpush1.bf16.msra.mxu0 %v1889
  %2023 = vmatprep.subr.bf16.mxu0 %v1892
  %2024 = vmatpush1.bf16.msra.mxu0 %v1891
  %2025 = vmatprep.subr.bf16.mxu0 %v1894
  %2026 = vmatpush1.bf16.msra.mxu0 %v1893
  %2027 = vmatprep.subr.bf16.mxu0 %v1896
  %2028 = vmatpush1.bf16.msra.mxu0 %v1895
  %2029 = vmatprep.subr.bf16.mxu0 %v1898
  %2030 = vmatpush1.bf16.msra.mxu0 %v1897
  %2031 = vmatprep.subr.bf16.mxu0 %v1900
  %2032 = vmatpush1.bf16.msra.mxu0 %v1899
  %2033 = vmatprep.subr.bf16.mxu0 %v1902
  %2034 = vmatpush1.bf16.msra.mxu0 %v1901
  %2035 = vmatprep.subr.bf16.mxu0 %v1904
  %2036 = vmatpush1.bf16.msra.mxu0 %v1903
  %2037 = vmatprep.subr.bf16.mxu0 %v1906
  %2038 = vmatpush1.bf16.msra.mxu0 %v1905
  %2039 = vmatprep.subr.bf16.mxu0 %v1908
  %2040 = vmatpush1.bf16.msra.mxu0 %v1907
  %2041 = vmatprep.subr.bf16.mxu0 %v1910
  %2042 = vmatpush1.bf16.msra.mxu0 %v1909
  %2043 = vmatprep.mubr.bf16.mxu0 %v118
  %2044 = vmatmul.mubr.bf16.gmra.mrb[0].mxu0 %v117
  %v2045 = vpop.f32.mrb[0].mxu0
  %v2046 = vadd.f32 0.0, %v2045
  %v2047 = vpop.f32.mrb[0].mxu0
  %v2048 = vadd.f32 0.0, %v2047
  %v2049 = vpop.f32.mrb[0].mxu0
  %v2050 = vadd.f32 0.0, %v2049
  %v2051 = vpop.f32.mrb[0].mxu0
  %v2052 = vadd.f32 0.0, %v2051
  %2053 = vmatprep.mubr.bf16.mxu0 %v122
  %2054 = vmatmul.mubr.bf16.gmra.mrb[0].mxu0 %v121
  %v2055 = vpop.f32.mrb[0].mxu0
  %v2056 = vadd.f32 0.0, %v2055
  %v2057 = vpop.f32.mrb[0].mxu0
  %v2058 = vadd.f32 0.0, %v2057
  %v2059 = vpop.f32.mrb[0].mxu0
  %v2060 = vadd.f32 0.0, %v2059
  %v2061 = vpop.f32.mrb[0].mxu0
  %v2062 = vadd.f32 0.0, %v2061
  %2063 = vmatprep.mubr.bf16.mxu0 %v126
  %2064 = vmatmul.mubr.bf16.gmra.mrb[0].mxu0 %v125
  %v2065 = vpop.f32.mrb[0].mxu0
  %v2066 = vadd.f32 0.0, %v2065
  %v2067 = vpop.f32.mrb[0].mxu0
  %v2068 = vadd.f32 0.0, %v2067
  %v2069 = vpop.f32.mrb[0].mxu0
  %v2070 = vpop.f32.mrb[0].mxu0
  %2071 = vdwg.mxu0
  %2072 = vmatprep.subr.bf16.mxu0 %v1912
  %2073 = vmatpush1.bf16.msra.mxu0 %v1911
  %2074 = vmatprep.subr.bf16.mxu0 %v1914
  %2075 = vmatpush1.bf16.msra.mxu0 %v1913
  %2076 = vmatprep.subr.bf16.mxu0 %v1916
  %2077 = vmatpush1.bf16.msra.mxu0 %v1915
  %2078 = vmatprep.subr.bf16.mxu0 %v1918
  %2079 = vmatpush1.bf16.msra.mxu0 %v1917
  %2080 = vmatprep.subr.bf16.mxu0 %v1920
  %2081 = vmatpush1.bf16.msra.mxu0 %v1919
  %2082 = vmatprep.subr.bf16.mxu0 %v1922
  %2083 = vmatpush1.bf16.msra.mxu0 %v1921
  %2084 = vmatprep.subr.bf16.mxu0 %v1924
  %2085 = vmatpush1.bf16.msra.mxu0 %v1923
  %2086 = vmatprep.subr.bf16.mxu0 %v1926
  %2087 = vmatpush1.bf16.msra.mxu0 %v1925
  %2088 = vmatprep.subr.bf16.mxu0 %v1928
  %2089 = vmatpush1.bf16.msra.mxu0 %v1927
  %2090 = vmatprep.subr.bf16.mxu0 %v1930
  %2091 = vmatpush1.bf16.msra.mxu0 %v1929
  %2092 = vmatprep.subr.bf16.mxu0 %v1932
  %2093 = vmatpush1.bf16.msra.mxu0 %v1931
  %2094 = vmatprep.subr.bf16.mxu0 %v1934
  %2095 = vmatpush1.bf16.msra.mxu0 %v1933
  %2096 = vmatprep.subr.bf16.mxu0 %v1936
  %2097 = vmatpush1.bf16.msra.mxu0 %v1935
  %2098 = vmatprep.subr.bf16.mxu0 %v1938
  %2099 = vmatpush1.bf16.msra.mxu0 %v1937
  %2100 = vmatprep.subr.bf16.mxu0 %v1940
  %2101 = vmatpush1.bf16.msra.mxu0 %v1939
  %2102 = vmatprep.subr.bf16.mxu0 %v2009
  %2103 = vmatpush1.bf16.msra.mxu0 %v2006
  %2104 = vmatprep.mubr.bf16.mxu0 %v455
  %2105 = vmatmul.mubr.bf16.gmra.mrb[0].mxu0 %v119
  %v2106 = vpop.f32.mrb[0].mxu0
  %v2107 = vadd.f32 %v2046, %v2106
  %v2108 = vpop.f32.mrb[0].mxu0
  %v2109 = vadd.f32 %v2048, %v2108
  %v2110 = vpop.f32.mrb[0].mxu0
  %v2111 = vadd.f32 %v2050, %v2110
  %v2112 = vpop.f32.mrb[0].mxu0
  %v2113 = vadd.f32 %v2052, %v2112
  %2114 = vmatprep.mubr.bf16.mxu0 %v458
  %2115 = vmatmul.mubr.bf16.gmra.mrb[0].mxu0 %v123
  %v2116 = vpop.f32.mrb[0].mxu0
  %v2117 = vadd.f32 %v2056, %v2116
  %v2118 = vpop.f32.mrb[0].mxu0
  %v2119 = vadd.f32 %v2058, %v2118
  %v2120 = vpop.f32.mrb[0].mxu0
  %v2121 = vadd.f32 %v2060, %v2120
  %v2122 = vpop.f32.mrb[0].mxu0
  %v2123 = vadd.f32 %v2062, %v2122
  %2124 = vmatprep.mubr.bf16.mxu0 %v461
  %2125 = vmatmul.mubr.bf16.gmra.mrb[0].mxu0 %v127
  %v2126 = vpop.f32.mrb[0].mxu0
  %v2127 = vadd.f32 %v2066, %v2126
  %v2128 = vpop.f32.mrb[0].mxu0
  %v2129 = vadd.f32 %v2068, %v2128
  %v2130 = vpop.f32.mrb[0].mxu0
  %v2131 = vpop.f32.mrb[0].mxu0
  %2132 = vdwg.mxu0
  %v2133 = vmax.f32 %v1616, %v2107
  %v2134 = vmax.f32 %v1617, %v2109
  %v2135 = vmax.f32 %v1618, %v2111
  %v2136 = vmax.f32 %v1619, %v2113
  %v2137 = vmax.f32 %v1620, %v2117
  %v2138 = vmax.f32 %v1621, %v2119
  %v2139 = vmax.f32 %v1622, %v2121
  %v2140 = vmax.f32 %v1623, %v2123
  %v2141 = vmax.f32 %v1624, %v2127
  %v2142 = vmax.f32 %v1625, %v2129
  %v2143 = vld [vmem:[%s2] sm:$0xff]
  %v2144 = vld [vmem:[%s2 + $0x8] sm:$0xff]
  %v2145 = vld [vmem:[%s2 + $0x10] sm:$0xff]
  %v2146 = vld [vmem:[%s2 + $0x18] sm:$0xff]
  %v2147 = vld [vmem:[%s2 + $0x20] sm:$0xff]
  %2149 = vset.pattern.permute.xlu0 0
  %2150 = vperm.xlu0 %2149, %v2143
  %v2151 = vpop.permute.xlu0 %2150
  %2154 = vset.pattern.permute.xlu0 0
  %2155 = vperm.xlu0 %2154, %v2144
  %v2156 = vpop.permute.xlu0 %2155
  %2159 = vset.pattern.permute.xlu0 0
  %2160 = vperm.xlu0 %2159, %v2145
  %v2161 = vpop.permute.xlu0 %2160
  %2164 = vset.pattern.permute.xlu0 0
  %2165 = vperm.xlu0 %2164, %v2146
  %v2166 = vpop.permute.xlu0 %2165
  %2169 = vset.pattern.permute.xlu0 0
  %2170 = vperm.xlu0 %2169, %v2147
  %v2171 = vpop.permute.xlu0 %2170
  %v2173 = vadd.f32 %v2133, %v2151
  %v2174 = vadd.f32 %v2134, %v2151
  %v2175 = vadd.f32 %v2135, %v2156
  %v2176 = vadd.f32 %v2136, %v2156
  %v2177 = vadd.f32 %v2137, %v2161
  %v2178 = vadd.f32 %v2138, %v2161
  %v2179 = vadd.f32 %v2139, %v2166
  %v2180 = vadd.f32 %v2140, %v2166
  %v2181 = vadd.f32 %v2141, %v2171
  %v2182 = vadd.f32 %v2142, %v2171
  %v2183 = vmax.f32 %v2173, 0.0
  %v2184 = vmax.f32 %v2174, 0.0
  %v2185 = vmax.f32 %v2175, 0.0
  %v2186 = vmax.f32 %v2176, 0.0
  %v2187 = vmax.f32 %v2177, 0.0
  %v2188 = vmax.f32 %v2178, 0.0
  %v2189 = vmax.f32 %v2179, 0.0
  %v2190 = vmax.f32 %v2180, 0.0
  %v2191 = vmax.f32 %v2181, 0.0
  %v2192 = vmax.f32 %v2182, 0.0
  %v2193 = vpack.c.bf16 %v2185, %v2183
  %v2194 = vpack.c.bf16 %v2186, %v2184
  %v2195 = vpack.c.bf16 %v2189, %v2187
  %v2196 = vpack.c.bf16 %v2190, %v2188
  %v2197 = vpack.c.bf16 %v2191, %v2191
  %v2198 = vpack.c.bf16 %v2192, %v2192
  %v2205 = vunpack.c.l.b16 %v2193
  %v2206 = vunpack.c.l.b16 %v2194
  %v2207 = vunpack.c.h.b16 %v2193
  %v2208 = vunpack.c.h.b16 %v2194
  %v2209 = vunpack.c.l.b16 %v2195
  %v2210 = vunpack.c.l.b16 %v2196
  %v2211 = vunpack.c.h.b16 %v2195
  %v2212 = vunpack.c.h.b16 %v2196
  %v2213 = vunpack.c.l.b16 %v2197
  %v2214 = vunpack.c.l.b16 %v2198
  %v2215 = vpack.c.b16 %v2206, %v2205
  %v2216 = vpack.c.b16 %v2208, %v2207
  %v2217 = vpack.c.b16 %v2210, %v2209
  %v2218 = vpack.c.b16 %v2212, %v2211
  %v2219 = vpack.c.b16 %v2214, %v2213
  %2225 = vst [vmem:[%s3] sm:$0xff] %v2215
  %2226 = vst [vmem:[%s3 + $0x8] sm:$0xff] %v2216
  %2227 = vst [vmem:[%s3 + $0x10] sm:$0xff] %v2217
  %2228 = vst [vmem:[%s3 + $0x18] sm:$0xff] %v2218
  %2229 = vst [vmem:[%s3 + $0x20] sm:$0xff] %v2219
  // Predicated region
  $region14: #{net1_forward.4} parent=0 // pred_check
    _
  $region15: #{net1_forward.4} parent=0 // pred_check_branch
    %2231 = sbr.rel (0) target = $region17
  $region16: #{net1_forward.4} parent=0 // pred_region
    _
  $region17: #{net1_forward.4} parent=0 // pred_fallthru
    _
  // Predicated region
  $region18: #{net1_forward.4} parent=0 // pred_check
    _
  $region19: #{net1_forward.4} parent=0 // pred_check_branch
    %2233 = sbr.rel (0) target = $region21
  $region20: #{net1_forward.4} parent=0 // pred_region
    _
  $region21: #{net1_forward.4} parent=0 // pred_fallthru
    _

// kernel: net1_forward.5
$region0: #{net1_forward.5}
  #allocation0 [shape = 'u32[]', space=smem, size = 0x4, offset = 0x4, fixed_abs, tag = 'smem constant byte address 0x4 - core index']
  #allocation1 [shape = 'u32[144,128]{1,0:T(1,128)}', space=vmem, size = 0x12000, scoped, tag = 'internal scratch']
  %s0 = inlined_call_operand.vmem [shape: bf16[640,16], index: 0, kind: input, shape index: {}]
  %s1 = inlined_call_operand.vmem [shape: bf16[384,640], index: 1, kind: input, shape index: {}]
  %s2 = inlined_call_operand.vmem [shape: f32[384,1], index: 2, kind: input, shape index: {}]
  %s3 = inlined_call_operand.vmem [shape: bf16[10,384], index: 3, kind: input, shape index: {}]
  %s4 = inlined_call_operand.vmem [shape: f32[10,1], index: 4, kind: input, shape index: {}]
  %s5 = inlined_call_operand.vmem [shape: f32[10,16], index: 5, kind: output, shape index: {}]
  %s6 = sld [smem:[#allocation0]]
  $region30: #{net1_forward.5} parent=0
    _
  %s8 = ssub.s32 1, %s6
  %s9 = scalar_select 0, %s8, %s6
  // Predicated region
  $region2: #{net1_forward.5} parent=0 // pred_check
    _
  $region3: #{net1_forward.5} parent=0 // pred_check_branch
    %11 = sbr.rel (0) target = $region5
  $region4: #{net1_forward.5} parent=0 // pred_region
    _
  $region5: #{net1_forward.5} parent=0 // pred_fallthru
    _
  // Predicated region
  $region6: #{net1_forward.5} parent=0 // pred_check
    _
  $region7: #{net1_forward.5} parent=0 // pred_check_branch
    %13 = sbr.rel (0) target = $region9
  $region8: #{net1_forward.5} parent=0 // pred_region
    _
  $region9: #{net1_forward.5} parent=0 // pred_fallthru
    _
  // Predicated region
  $region10: #{net1_forward.5} parent=0 // pred_check
    _
  $region11: #{net1_forward.5} parent=0 // pred_check_branch
    %15 = sbr.rel (0) target = $region13
  $region12: #{net1_forward.5} parent=0 // pred_region
    _
  $region13: #{net1_forward.5} parent=0 // pred_fallthru
    _
  // Predicated region
  $region14: #{net1_forward.5} parent=0 // pred_check
    _
  $region15: #{net1_forward.5} parent=0 // pred_check_branch
    %17 = sbr.rel (0) target = $region17
  $region16: #{net1_forward.5} parent=0 // pred_region
    _
  $region17: #{net1_forward.5} parent=0 // pred_fallthru
    _
  // Predicated region
  $region18: #{net1_forward.5} parent=0 // pred_check
    _
  $region19: #{net1_forward.5} parent=0 // pred_check_branch
    %19 = sbr.rel (0) target = $region21
  $region20: #{net1_forward.5} parent=0 // pred_region
    _
  $region21: #{net1_forward.5} parent=0 // pred_fallthru
    _
  %v21 = vld [vmem:[%s1] sm:$0xff]
  %v22 = vld [vmem:[%s1 + $0x8] sm:$0xff]
  %v23 = vld [vmem:[%s1 + $0x10] sm:$0xf]
  %v24 = vld [vmem:[%s1 + $0x14] sm:$0xff]
  %v25 = vld [vmem:[%s1 + $0x1c] sm:$0xff]
  %v26 = vld [vmem:[%s1 + $0x24] sm:$0xf]
  %v27 = vld [vmem:[%s1 + $0x28] sm:$0xff]
  %v28 = vld [vmem:[%s1 + $0x30] sm:$0xff]
  %v29 = vld [vmem:[%s1 + $0x38] sm:$0xf]
  %v30 = vld [vmem:[%s1 + $0x3c] sm:$0xff]
  %v31 = vld [vmem:[%s1 + $0x44] sm:$0xff]
  %v32 = vld [vmem:[%s1 + $0x4c] sm:$0xf]
  %v33 = vld [vmem:[%s1 + $0x50] sm:$0xff]
  %v34 = vld [vmem:[%s1 + $0x58] sm:$0xff]
  %v35 = vld [vmem:[%s1 + $0x60] sm:$0xf]
  %v36 = vld [vmem:[%s1 + $0x64] sm:$0xff]
  %v37 = vld [vmem:[%s1 + $0x6c] sm:$0xff]
  %v38 = vld [vmem:[%s1 + $0x74] sm:$0xf]
  %v39 = vld [vmem:[%s1 + $0x78] sm:$0xff]
  %v40 = vld [vmem:[%s1 + $0x80] sm:$0xff]
  %v41 = vld [vmem:[%s1 + $0x88] sm:$0xf]
  %v42 = vld [vmem:[%s1 + $0x8c] sm:$0xff]
  %v43 = vld [vmem:[%s1 + $0x94] sm:$0xff]
  %v44 = vld [vmem:[%s1 + $0x9c] sm:$0xf]
  %v45 = vld [vmem:[%s1 + $0xa0] sm:$0xff]
  %v46 = vld [vmem:[%s1 + $0xa8] sm:$0xff]
  %v47 = vld [vmem:[%s1 + $0xb0] sm:$0xf]
  %v48 = vld [vmem:[%s1 + $0xb4] sm:$0xff]
  %v49 = vld [vmem:[%s1 + $0xbc] sm:$0xff]
  %v50 = vld [vmem:[%s1 + $0xc4] sm:$0xf]
  %v51 = vld [vmem:[%s1 + $0xc8] sm:$0xff]
  %v52 = vld [vmem:[%s1 + $0xd0] sm:$0xff]
  %v53 = vld [vmem:[%s1 + $0xd8] sm:$0xf]
  %v54 = vld [vmem:[%s1 + $0xdc] sm:$0xff]
  %v55 = vld [vmem:[%s1 + $0xe4] sm:$0xff]
  %v56 = vld [vmem:[%s1 + $0xec] sm:$0xf]
  %v57 = vld [vmem:[%s1 + $0xf0] sm:$0xff]
  %v58 = vld [vmem:[%s1 + $0xf8] sm:$0xff]
  %v59 = vld [vmem:[%s1 + $0x100] sm:$0xf]
  %v60 = vld [vmem:[%s1 + $0x104] sm:$0xff]
  %v61 = vld [vmem:[%s1 + $0x10c] sm:$0xff]
  %v62 = vld [vmem:[%s1 + $0x114] sm:$0xf]
  %v63 = vld [vmem:[%s1 + $0x118] sm:$0xff]
  %v64 = vld [vmem:[%s1 + $0x120] sm:$0xff]
  %v65 = vld [vmem:[%s1 + $0x128] sm:$0xf]
  %v66 = vld [vmem:[%s1 + $0x12c] sm:$0xff]
  %v67 = vld [vmem:[%s1 + $0x134] sm:$0xff]
  %v68 = vld [vmem:[%s1 + $0x13c] sm:$0xf]
  %v69 = vld [vmem:[%s1 + $0x140] sm:$0xff]
  %v70 = vld [vmem:[%s1 + $0x148] sm:$0xff]
  %v71 = vld [vmem:[%s1 + $0x150] sm:$0xf]
  %v72 = vld [vmem:[%s1 + $0x154] sm:$0xff]
  %v73 = vld [vmem:[%s1 + $0x15c] sm:$0xff]
  %v74 = vld [vmem:[%s1 + $0x164] sm:$0xf]
  %v75 = vld [vmem:[%s1 + $0x168] sm:$0xff]
  %v76 = vld [vmem:[%s1 + $0x170] sm:$0xff]
  %v77 = vld [vmem:[%s1 + $0x178] sm:$0xf]
  %v78 = vld [vmem:[%s1 + $0x17c] sm:$0xff]
  %v79 = vld [vmem:[%s1 + $0x184] sm:$0xff]
  %v80 = vld [vmem:[%s1 + $0x18c] sm:$0xf]
  %v81 = vld [vmem:[%s1 + $0x190] sm:$0xff]
  %v82 = vld [vmem:[%s1 + $0x198] sm:$0xff]
  %v83 = vld [vmem:[%s1 + $0x1a0] sm:$0xf]
  %v84 = vld [vmem:[%s1 + $0x1a4] sm:$0xff]
  %v85 = vld [vmem:[%s1 + $0x1ac] sm:$0xff]
  %v86 = vld [vmem:[%s1 + $0x1b4] sm:$0xf]
  %v87 = vld [vmem:[%s1 + $0x1b8] sm:$0xff]
  %v88 = vld [vmem:[%s1 + $0x1c0] sm:$0xff]
  %v89 = vld [vmem:[%s1 + $0x1c8] sm:$0xf]
  %v90 = vld [vmem:[%s1 + $0x1cc] sm:$0xff]
  %v91 = vld [vmem:[%s1 + $0x1d4] sm:$0xff]
  %v92 = vld [vmem:[%s1 + $0x1dc] sm:$0xf]
  %v93 = vld [vmem:[%s1 + $0x1e0] sm:$0xff]
  %v94 = vld [vmem:[%s1 + $0x1e8] sm:$0xff]
  %v95 = vld [vmem:[%s1 + $0x1f0] sm:$0xf]
  %v96 = vld [vmem:[%s1 + $0x1f4] sm:$0xff]
  %v97 = vld [vmem:[%s1 + $0x1fc] sm:$0xff]
  %v98 = vld [vmem:[%s1 + $0x204] sm:$0xf]
  %v99 = vld [vmem:[%s1 + $0x208] sm:$0xff]
  %v100 = vld [vmem:[%s1 + $0x210] sm:$0xff]
  %v101 = vld [vmem:[%s1 + $0x218] sm:$0xf]
  %v102 = vld [vmem:[%s1 + $0x21c] sm:$0xff]
  %v103 = vld [vmem:[%s1 + $0x224] sm:$0xff]
  %v104 = vld [vmem:[%s1 + $0x22c] sm:$0xf]
  %v105 = vld [vmem:[%s1 + $0x230] sm:$0xff]
  %v106 = vld [vmem:[%s1 + $0x238] sm:$0xff]
  %v107 = vld [vmem:[%s1 + $0x240] sm:$0xf]
  %v108 = vld [vmem:[%s1 + $0x244] sm:$0xff]
  %v109 = vld [vmem:[%s1 + $0x24c] sm:$0xff]
  %v110 = vld [vmem:[%s1 + $0x254] sm:$0xf]
  %v111 = vld [vmem:[%s1 + $0x258] sm:$0xff]
  %v112 = vld [vmem:[%s1 + $0x260] sm:$0xff]
  %v113 = vld [vmem:[%s1 + $0x268] sm:$0xf]
  %v114 = vld [vmem:[%s1 + $0x26c] sm:$0xff]
  %v115 = vld [vmem:[%s1 + $0x274] sm:$0xff]
  %v116 = vld [vmem:[%s1 + $0x27c] sm:$0xf]
  %v117 = vld [vmem:[%s1 + $0x280] sm:$0xff]
  %v118 = vld [vmem:[%s1 + $0x288] sm:$0xff]
  %v119 = vld [vmem:[%s1 + $0x290] sm:$0xf]
  %v120 = vld [vmem:[%s1 + $0x294] sm:$0xff]
  %v121 = vld [vmem:[%s1 + $0x29c] sm:$0xff]
  %v122 = vld [vmem:[%s1 + $0x2a4] sm:$0xf]
  %v123 = vld [vmem:[%s1 + $0x2a8] sm:$0xff]
  %v124 = vld [vmem:[%s1 + $0x2b0] sm:$0xff]
  %v125 = vld [vmem:[%s1 + $0x2b8] sm:$0xf]
  %v126 = vld [vmem:[%s1 + $0x2bc] sm:$0xff]
  %v127 = vld [vmem:[%s1 + $0x2c4] sm:$0xff]
  %v128 = vld [vmem:[%s1 + $0x2cc] sm:$0xf]
  %v129 = vld [vmem:[%s1 + $0x2d0] sm:$0xff]
  %v130 = vld [vmem:[%s1 + $0x2d8] sm:$0xff]
  %v131 = vld [vmem:[%s1 + $0x2e0] sm:$0xf]
  %v132 = vld [vmem:[%s1 + $0x2e4] sm:$0xff]
  %v133 = vld [vmem:[%s1 + $0x2ec] sm:$0xff]
  %v134 = vld [vmem:[%s1 + $0x2f4] sm:$0xf]
  %v135 = vld [vmem:[%s1 + $0x2f8] sm:$0xff]
  %v136 = vld [vmem:[%s1 + $0x300] sm:$0xff]
  %v137 = vld [vmem:[%s1 + $0x308] sm:$0xf]
  %v138 = vld [vmem:[%s1 + $0x30c] sm:$0xff]
  %v139 = vld [vmem:[%s1 + $0x314] sm:$0xff]
  %v140 = vld [vmem:[%s1 + $0x31c] sm:$0xf]
  %v141 = vld [vmem:[%s1 + $0x320] sm:$0xff]
  %v142 = vld [vmem:[%s1 + $0x328] sm:$0xff]
  %v143 = vld [vmem:[%s1 + $0x330] sm:$0xf]
  %v144 = vld [vmem:[%s1 + $0x334] sm:$0xff]
  %v145 = vld [vmem:[%s1 + $0x33c] sm:$0xff]
  %v146 = vld [vmem:[%s1 + $0x344] sm:$0xf]
  %v147 = vld [vmem:[%s1 + $0x348] sm:$0xff]
  %v148 = vld [vmem:[%s1 + $0x350] sm:$0xff]
  %v149 = vld [vmem:[%s1 + $0x358] sm:$0xf]
  %v150 = vld [vmem:[%s1 + $0x35c] sm:$0xff]
  %v151 = vld [vmem:[%s1 + $0x364] sm:$0xff]
  %v152 = vld [vmem:[%s1 + $0x36c] sm:$0xf]
  %v153 = vld [vmem:[%s1 + $0x370] sm:$0xff]
  %v154 = vld [vmem:[%s1 + $0x378] sm:$0xff]
  %v155 = vld [vmem:[%s1 + $0x380] sm:$0xf]
  %v156 = vld [vmem:[%s1 + $0x384] sm:$0xff]
  %v157 = vld [vmem:[%s1 + $0x38c] sm:$0xff]
  %v158 = vld [vmem:[%s1 + $0x394] sm:$0xf]
  %v159 = vld [vmem:[%s1 + $0x398] sm:$0xff]
  %v160 = vld [vmem:[%s1 + $0x3a0] sm:$0xff]
  %v161 = vld [vmem:[%s1 + $0x3a8] sm:$0xf]
  %v162 = vld [vmem:[%s1 + $0x3ac] sm:$0xff]
  %v163 = vld [vmem:[%s1 + $0x3b4] sm:$0xff]
  %v164 = vld [vmem:[%s1 + $0x3bc] sm:$0xf]
  %v165 = vld [vmem:[%s0] sm:$0xf]
  %v166 = vld [vmem:[%s0 + $0x4] sm:$0xf]
  %v167 = vld [vmem:[%s0 + $0x8] sm:$0xf]
  %v168 = vld [vmem:[%s0 + $0xc] sm:$0xf]
  %v169 = vld [vmem:[%s0 + $0x10] sm:$0xf]
  %v170 = vld [vmem:[%s0 + $0x14] sm:$0xf]
  %v171 = vld [vmem:[%s0 + $0x18] sm:$0xf]
  %v172 = vld [vmem:[%s0 + $0x1c] sm:$0xf]
  %v173 = vld [vmem:[%s0 + $0x20] sm:$0xf]
  %v174 = vld [vmem:[%s0 + $0x24] sm:$0xf]
  %v175 = vld [vmem:[%s0 + $0x28] sm:$0xf]
  %v176 = vld [vmem:[%s0 + $0x2c] sm:$0xf]
  %v177 = vld [vmem:[%s0 + $0x30] sm:$0xf]
  %v178 = vld [vmem:[%s0 + $0x34] sm:$0xf]
  %v179 = vld [vmem:[%s0 + $0x38] sm:$0xf]
  %v180 = vld [vmem:[%s0 + $0x3c] sm:$0xf]
  %v181 = vld [vmem:[%s0 + $0x40] sm:$0xf]
  %v182 = vld [vmem:[%s0 + $0x44] sm:$0xf]
  %v183 = vld [vmem:[%s0 + $0x48] sm:$0xf]
  %v184 = vld [vmem:[%s0 + $0x4c] sm:$0xf]
  %v185 = vld [vmem:[%s0 + $0x50] sm:$0xf]
  %v186 = vld [vmem:[%s0 + $0x54] sm:$0xf]
  %v187 = vld [vmem:[%s0 + $0x58] sm:$0xf]
  %v188 = vld [vmem:[%s0 + $0x5c] sm:$0xf]
  %v189 = vld [vmem:[%s0 + $0x60] sm:$0xf]
  %v190 = vld [vmem:[%s0 + $0x64] sm:$0xf]
  %v191 = vld [vmem:[%s0 + $0x68] sm:$0xf]
  %v192 = vld [vmem:[%s0 + $0x6c] sm:$0xf]
  %v193 = vld [vmem:[%s0 + $0x70] sm:$0xf]
  %v194 = vld [vmem:[%s0 + $0x74] sm:$0xf]
  %v195 = vld [vmem:[%s0 + $0x78] sm:$0xf]
  %v196 = vld [vmem:[%s0 + $0x7c] sm:$0xf]
  %v197 = vld [vmem:[%s0 + $0x80] sm:$0xf]
  %v198 = vld [vmem:[%s0 + $0x84] sm:$0xf]
  %v199 = vld [vmem:[%s0 + $0x88] sm:$0xf]
  %v200 = vld [vmem:[%s0 + $0x8c] sm:$0xf]
  %v201 = vld [vmem:[%s0 + $0x90] sm:$0xf]
  %v202 = vld [vmem:[%s0 + $0x94] sm:$0xf]
  %v203 = vld [vmem:[%s0 + $0x98] sm:$0xf]
  %v204 = vld [vmem:[%s0 + $0x9c] sm:$0xf]
  %v205 = vld [vmem:[%s0 + $0xa0] sm:$0xf]
  %v206 = vld [vmem:[%s0 + $0xa4] sm:$0xf]
  %v207 = vld [vmem:[%s0 + $0xa8] sm:$0xf]
  %v208 = vld [vmem:[%s0 + $0xac] sm:$0xf]
  %v209 = vld [vmem:[%s0 + $0xb0] sm:$0xf]
  %v210 = vld [vmem:[%s0 + $0xb4] sm:$0xf]
  %v211 = vld [vmem:[%s0 + $0xb8] sm:$0xf]
  %v212 = vld [vmem:[%s0 + $0xbc] sm:$0xf]
  %v213 = vld [vmem:[%s0 + $0xc0] sm:$0xf]
  %v214 = vld [vmem:[%s0 + $0xc4] sm:$0xf]
  %v215 = vld [vmem:[%s0 + $0xc8] sm:$0xf]
  %v216 = vld [vmem:[%s0 + $0xcc] sm:$0xf]
  %v217 = vld [vmem:[%s0 + $0xd0] sm:$0xf]
  %v218 = vld [vmem:[%s0 + $0xd4] sm:$0xf]
  %v219 = vld [vmem:[%s0 + $0xd8] sm:$0xf]
  %v220 = vld [vmem:[%s0 + $0xdc] sm:$0xf]
  %v221 = vld [vmem:[%s0 + $0xe0] sm:$0xf]
  %v222 = vld [vmem:[%s0 + $0xe4] sm:$0xf]
  %v223 = vld [vmem:[%s0 + $0xe8] sm:$0xf]
  %v224 = vld [vmem:[%s0 + $0xec] sm:$0xf]
  %v225 = vld [vmem:[%s0 + $0xf0] sm:$0xf]
  %v226 = vld [vmem:[%s0 + $0xf4] sm:$0xf]
  %v227 = vld [vmem:[%s0 + $0xf8] sm:$0xf]
  %v228 = vld [vmem:[%s0 + $0xfc] sm:$0xf]
  %v229 = vld [vmem:[%s0 + $0x100] sm:$0xf]
  %v230 = vld [vmem:[%s0 + $0x104] sm:$0xf]
  %v231 = vld [vmem:[%s0 + $0x108] sm:$0xf]
  %v232 = vld [vmem:[%s0 + $0x10c] sm:$0xf]
  %v233 = vld [vmem:[%s0 + $0x110] sm:$0xf]
  %v234 = vld [vmem:[%s0 + $0x114] sm:$0xf]
  %v235 = vld [vmem:[%s0 + $0x118] sm:$0xf]
  %v236 = vld [vmem:[%s0 + $0x11c] sm:$0xf]
  %v237 = vld [vmem:[%s0 + $0x120] sm:$0xf]
  %v238 = vld [vmem:[%s0 + $0x124] sm:$0xf]
  %v239 = vld [vmem:[%s0 + $0x128] sm:$0xf]
  %v240 = vld [vmem:[%s0 + $0x12c] sm:$0xf]
  %v241 = vld [vmem:[%s0 + $0x130] sm:$0xf]
  %v242 = vld [vmem:[%s0 + $0x134] sm:$0xf]
  %v243 = vld [vmem:[%s0 + $0x138] sm:$0xf]
  %v244 = vld [vmem:[%s0 + $0x13c] sm:$0xf]
  %v245 = vld [vmem:[%s2] sm:$0xff]
  %v246 = vld [vmem:[%s2 + $0x8] sm:$0xff]
  %v247 = vld [vmem:[%s2 + $0x10] sm:$0xff]
  %v248 = vld [vmem:[%s2 + $0x18] sm:$0xff]
  %v249 = vld [vmem:[%s2 + $0x20] sm:$0xff]
  %v250 = vld [vmem:[%s2 + $0x28] sm:$0xff]
  %v251 = vld [vmem:[%s2 + $0x30] sm:$0xff]
  %v252 = vld [vmem:[%s2 + $0x38] sm:$0xff]
  %v253 = vld [vmem:[%s2 + $0x40] sm:$0xff]
  %v254 = vld [vmem:[%s2 + $0x48] sm:$0xff]
  %v255 = vld [vmem:[%s2 + $0x50] sm:$0xff]
  %v256 = vld [vmem:[%s2 + $0x58] sm:$0xff]
  %v257 = vld [vmem:[%s2 + $0x60] sm:$0xff]
  %v258 = vld [vmem:[%s2 + $0x68] sm:$0xff]
  %v259 = vld [vmem:[%s2 + $0x70] sm:$0xff]
  %v260 = vld [vmem:[%s2 + $0x78] sm:$0xff]
  %v261 = vld [vmem:[%s2 + $0x80] sm:$0xff]
  %v262 = vld [vmem:[%s2 + $0x88] sm:$0xff]
  %v263 = vld [vmem:[%s2 + $0x90] sm:$0xff]
  %v264 = vld [vmem:[%s2 + $0x98] sm:$0xff]
  %v265 = vld [vmem:[%s2 + $0xa0] sm:$0xff]
  %v266 = vld [vmem:[%s2 + $0xa8] sm:$0xff]
  %v267 = vld [vmem:[%s2 + $0xb0] sm:$0xff]
  %v268 = vld [vmem:[%s2 + $0xb8] sm:$0xff]
  %v269 = vld [vmem:[%s2 + $0xc0] sm:$0xff]
  %v270 = vld [vmem:[%s2 + $0xc8] sm:$0xff]
  %v271 = vld [vmem:[%s2 + $0xd0] sm:$0xff]
  %v272 = vld [vmem:[%s2 + $0xd8] sm:$0xff]
  %v273 = vld [vmem:[%s2 + $0xe0] sm:$0xff]
  %v274 = vld [vmem:[%s2 + $0xe8] sm:$0xff]
  %v275 = vld [vmem:[%s2 + $0xf0] sm:$0xff]
  %v276 = vld [vmem:[%s2 + $0xf8] sm:$0xff]
  %v277 = vld [vmem:[%s2 + $0x100] sm:$0xff]
  %v278 = vld [vmem:[%s2 + $0x108] sm:$0xff]
  %v279 = vld [vmem:[%s2 + $0x110] sm:$0xff]
  %v280 = vld [vmem:[%s2 + $0x118] sm:$0xff]
  %v281 = vld [vmem:[%s2 + $0x120] sm:$0xff]
  %v282 = vld [vmem:[%s2 + $0x128] sm:$0xff]
  %v283 = vld [vmem:[%s2 + $0x130] sm:$0xff]
  %v284 = vld [vmem:[%s2 + $0x138] sm:$0xff]
  %v285 = vld [vmem:[%s2 + $0x140] sm:$0xff]
  %v286 = vld [vmem:[%s2 + $0x148] sm:$0xff]
  %v287 = vld [vmem:[%s2 + $0x150] sm:$0xff]
  %v288 = vld [vmem:[%s2 + $0x158] sm:$0xff]
  %v289 = vld [vmem:[%s2 + $0x160] sm:$0xff]
  %v290 = vld [vmem:[%s2 + $0x168] sm:$0xff]
  %v291 = vld [vmem:[%s2 + $0x170] sm:$0xff]
  %v292 = vld [vmem:[%s2 + $0x178] sm:$0xff]
  %294 = vset.pattern.permute.xlu0 0
  %295 = vperm.xlu0 %294, %v245
  %v296 = vpop.permute.xlu0 %295
  %299 = vset.pattern.permute.xlu0 0
  %300 = vperm.xlu0 %299, %v246
  %v301 = vpop.permute.xlu0 %300
  %304 = vset.pattern.permute.xlu0 0
  %305 = vperm.xlu0 %304, %v247
  %v306 = vpop.permute.xlu0 %305
  %309 = vset.pattern.permute.xlu0 0
  %310 = vperm.xlu0 %309, %v248
  %v311 = vpop.permute.xlu0 %310
  %314 = vset.pattern.permute.xlu0 0
  %315 = vperm.xlu0 %314, %v249
  %v316 = vpop.permute.xlu0 %315
  %319 = vset.pattern.permute.xlu0 0
  %320 = vperm.xlu0 %319, %v250
  %v321 = vpop.permute.xlu0 %320
  %324 = vset.pattern.permute.xlu0 0
  %325 = vperm.xlu0 %324, %v251
  %v326 = vpop.permute.xlu0 %325
  %329 = vset.pattern.permute.xlu0 0
  %330 = vperm.xlu0 %329, %v252
  %v331 = vpop.permute.xlu0 %330
  %334 = vset.pattern.permute.xlu0 0
  %335 = vperm.xlu0 %334, %v253
  %v336 = vpop.permute.xlu0 %335
  %339 = vset.pattern.permute.xlu0 0
  %340 = vperm.xlu0 %339, %v254
  %v341 = vpop.permute.xlu0 %340
  %344 = vset.pattern.permute.xlu0 0
  %345 = vperm.xlu0 %344, %v255
  %v346 = vpop.permute.xlu0 %345
  %349 = vset.pattern.permute.xlu0 0
  %350 = vperm.xlu0 %349, %v256
  %v351 = vpop.permute.xlu0 %350
  %354 = vset.pattern.permute.xlu0 0
  %355 = vperm.xlu0 %354, %v257
  %v356 = vpop.permute.xlu0 %355
  %359 = vset.pattern.permute.xlu0 0
  %360 = vperm.xlu0 %359, %v258
  %v361 = vpop.permute.xlu0 %360
  %364 = vset.pattern.permute.xlu0 0
  %365 = vperm.xlu0 %364, %v259
  %v366 = vpop.permute.xlu0 %365
  %369 = vset.pattern.permute.xlu0 0
  %370 = vperm.xlu0 %369, %v260
  %v371 = vpop.permute.xlu0 %370
  %374 = vset.pattern.permute.xlu0 0
  %375 = vperm.xlu0 %374, %v261
  %v376 = vpop.permute.xlu0 %375
  %379 = vset.pattern.permute.xlu0 0
  %380 = vperm.xlu0 %379, %v262
  %v381 = vpop.permute.xlu0 %380
  %384 = vset.pattern.permute.xlu0 0
  %385 = vperm.xlu0 %384, %v263
  %v386 = vpop.permute.xlu0 %385
  %389 = vset.pattern.permute.xlu0 0
  %390 = vperm.xlu0 %389, %v264
  %v391 = vpop.permute.xlu0 %390
  %394 = vset.pattern.permute.xlu0 0
  %395 = vperm.xlu0 %394, %v265
  %v396 = vpop.permute.xlu0 %395
  %399 = vset.pattern.permute.xlu0 0
  %400 = vperm.xlu0 %399, %v266
  %v401 = vpop.permute.xlu0 %400
  %404 = vset.pattern.permute.xlu0 0
  %405 = vperm.xlu0 %404, %v267
  %v406 = vpop.permute.xlu0 %405
  %409 = vset.pattern.permute.xlu0 0
  %410 = vperm.xlu0 %409, %v268
  %v411 = vpop.permute.xlu0 %410
  %414 = vset.pattern.permute.xlu0 0
  %415 = vperm.xlu0 %414, %v269
  %v416 = vpop.permute.xlu0 %415
  %419 = vset.pattern.permute.xlu0 0
  %420 = vperm.xlu0 %419, %v270
  %v421 = vpop.permute.xlu0 %420
  %424 = vset.pattern.permute.xlu0 0
  %425 = vperm.xlu0 %424, %v271
  %v426 = vpop.permute.xlu0 %425
  %429 = vset.pattern.permute.xlu0 0
  %430 = vperm.xlu0 %429, %v272
  %v431 = vpop.permute.xlu0 %430
  %434 = vset.pattern.permute.xlu0 0
  %435 = vperm.xlu0 %434, %v273
  %v436 = vpop.permute.xlu0 %435
  %439 = vset.pattern.permute.xlu0 0
  %440 = vperm.xlu0 %439, %v274
  %v441 = vpop.permute.xlu0 %440
  %444 = vset.pattern.permute.xlu0 0
  %445 = vperm.xlu0 %444, %v275
  %v446 = vpop.permute.xlu0 %445
  %449 = vset.pattern.permute.xlu0 0
  %450 = vperm.xlu0 %449, %v276
  %v451 = vpop.permute.xlu0 %450
  %454 = vset.pattern.permute.xlu0 0
  %455 = vperm.xlu0 %454, %v277
  %v456 = vpop.permute.xlu0 %455
  %459 = vset.pattern.permute.xlu0 0
  %460 = vperm.xlu0 %459, %v278
  %v461 = vpop.permute.xlu0 %460
  %464 = vset.pattern.permute.xlu0 0
  %465 = vperm.xlu0 %464, %v279
  %v466 = vpop.permute.xlu0 %465
  %469 = vset.pattern.permute.xlu0 0
  %470 = vperm.xlu0 %469, %v280
  %v471 = vpop.permute.xlu0 %470
  %474 = vset.pattern.permute.xlu0 0
  %475 = vperm.xlu0 %474, %v281
  %v476 = vpop.permute.xlu0 %475
  %479 = vset.pattern.permute.xlu0 0
  %480 = vperm.xlu0 %479, %v282
  %v481 = vpop.permute.xlu0 %480
  %484 = vset.pattern.permute.xlu0 0
  %485 = vperm.xlu0 %484, %v283
  %v486 = vpop.permute.xlu0 %485
  %489 = vset.pattern.permute.xlu0 0
  %490 = vperm.xlu0 %489, %v284
  %v491 = vpop.permute.xlu0 %490
  %494 = vset.pattern.permute.xlu0 0
  %495 = vperm.xlu0 %494, %v285
  %v496 = vpop.permute.xlu0 %495
  %499 = vset.pattern.permute.xlu0 0
  %500 = vperm.xlu0 %499, %v286
  %v501 = vpop.permute.xlu0 %500
  %504 = vset.pattern.permute.xlu0 0
  %505 = vperm.xlu0 %504, %v287
  %v506 = vpop.permute.xlu0 %505
  %509 = vset.pattern.permute.xlu0 0
  %510 = vperm.xlu0 %509, %v288
  %v511 = vpop.permute.xlu0 %510
  %514 = vset.pattern.permute.xlu0 0
  %515 = vperm.xlu0 %514, %v289
  %v516 = vpop.permute.xlu0 %515
  %519 = vset.pattern.permute.xlu0 0
  %520 = vperm.xlu0 %519, %v290
  %v521 = vpop.permute.xlu0 %520
  %524 = vset.pattern.permute.xlu0 0
  %525 = vperm.xlu0 %524, %v291
  %v526 = vpop.permute.xlu0 %525
  %529 = vset.pattern.permute.xlu0 0
  %530 = vperm.xlu0 %529, %v292
  %v531 = vpop.permute.xlu0 %530
  %v677 = vunpack.c.l.b16 %v21
  %v678 = vunpack.c.h.b16 %v21
  %v679 = vunpack.c.l.b16 %v22
  %v680 = vunpack.c.h.b16 %v22
  %v681 = vunpack.c.l.b16 %v23
  %v682 = vunpack.c.l.b16 %v24
  %v683 = vunpack.c.h.b16 %v24
  %v684 = vunpack.c.l.b16 %v25
  %v685 = vunpack.c.h.b16 %v25
  %v686 = vunpack.c.l.b16 %v26
  %v687 = vunpack.c.l.b16 %v27
  %v688 = vunpack.c.h.b16 %v27
  %v689 = vunpack.c.l.b16 %v28
  %v690 = vunpack.c.h.b16 %v28
  %v691 = vunpack.c.l.b16 %v29
  %v692 = vunpack.c.l.b16 %v30
  %v693 = vunpack.c.h.b16 %v30
  %v694 = vunpack.c.l.b16 %v31
  %v695 = vunpack.c.h.b16 %v31
  %v696 = vunpack.c.l.b16 %v32
  %v697 = vunpack.c.l.b16 %v33
  %v698 = vunpack.c.h.b16 %v33
  %v699 = vunpack.c.l.b16 %v34
  %v700 = vunpack.c.h.b16 %v34
  %v701 = vunpack.c.l.b16 %v35
  %v702 = vunpack.c.l.b16 %v36
  %v703 = vunpack.c.h.b16 %v36
  %v704 = vunpack.c.l.b16 %v37
  %v705 = vunpack.c.h.b16 %v37
  %v706 = vunpack.c.l.b16 %v38
  %v707 = vunpack.c.l.b16 %v39
  %v708 = vunpack.c.h.b16 %v39
  %v709 = vunpack.c.l.b16 %v40
  %v710 = vunpack.c.h.b16 %v40
  %v711 = vunpack.c.l.b16 %v41
  %v712 = vunpack.c.l.b16 %v42
  %v713 = vunpack.c.h.b16 %v42
  %v714 = vunpack.c.l.b16 %v43
  %v715 = vunpack.c.h.b16 %v43
  %v716 = vunpack.c.l.b16 %v44
  %v717 = vunpack.c.l.b16 %v45
  %v718 = vunpack.c.h.b16 %v45
  %v719 = vunpack.c.l.b16 %v46
  %v720 = vunpack.c.h.b16 %v46
  %v721 = vunpack.c.l.b16 %v47
  %v722 = vunpack.c.l.b16 %v48
  %v723 = vunpack.c.h.b16 %v48
  %v724 = vunpack.c.l.b16 %v49
  %v725 = vunpack.c.h.b16 %v49
  %v726 = vunpack.c.l.b16 %v50
  %v727 = vunpack.c.l.b16 %v51
  %v728 = vunpack.c.h.b16 %v51
  %v729 = vunpack.c.l.b16 %v52
  %v730 = vunpack.c.h.b16 %v52
  %v731 = vunpack.c.l.b16 %v53
  %v732 = vunpack.c.l.b16 %v54
  %v733 = vunpack.c.h.b16 %v54
  %v734 = vunpack.c.l.b16 %v55
  %v735 = vunpack.c.h.b16 %v55
  %v736 = vunpack.c.l.b16 %v56
  %v737 = vunpack.c.l.b16 %v57
  %v738 = vunpack.c.h.b16 %v57
  %v739 = vunpack.c.l.b16 %v58
  %v740 = vunpack.c.h.b16 %v58
  %v741 = vunpack.c.l.b16 %v59
  %v742 = vunpack.c.l.b16 %v60
  %v743 = vunpack.c.h.b16 %v60
  %v744 = vunpack.c.l.b16 %v61
  %v745 = vunpack.c.h.b16 %v61
  %v746 = vunpack.c.l.b16 %v62
  %v747 = vunpack.c.l.b16 %v63
  %v748 = vunpack.c.h.b16 %v63
  %v749 = vunpack.c.l.b16 %v64
  %v750 = vunpack.c.h.b16 %v64
  %v751 = vunpack.c.l.b16 %v65
  %v752 = vunpack.c.l.b16 %v66
  %v753 = vunpack.c.h.b16 %v66
  %v754 = vunpack.c.l.b16 %v67
  %v755 = vunpack.c.h.b16 %v67
  %v756 = vunpack.c.l.b16 %v68
  %v757 = vunpack.c.l.b16 %v69
  %v758 = vunpack.c.h.b16 %v69
  %v759 = vunpack.c.l.b16 %v70
  %v760 = vunpack.c.h.b16 %v70
  %v761 = vunpack.c.l.b16 %v71
  %v762 = vunpack.c.l.b16 %v72
  %v763 = vunpack.c.h.b16 %v72
  %v764 = vunpack.c.l.b16 %v73
  %v765 = vunpack.c.h.b16 %v73
  %v766 = vunpack.c.l.b16 %v74
  %v767 = vunpack.c.l.b16 %v75
  %v768 = vunpack.c.h.b16 %v75
  %v769 = vunpack.c.l.b16 %v76
  %v770 = vunpack.c.h.b16 %v76
  %v771 = vunpack.c.l.b16 %v77
  %v772 = vunpack.c.l.b16 %v78
  %v773 = vunpack.c.h.b16 %v78
  %v774 = vunpack.c.l.b16 %v79
  %v775 = vunpack.c.h.b16 %v79
  %v776 = vunpack.c.l.b16 %v80
  %v777 = vunpack.c.l.b16 %v81
  %v778 = vunpack.c.h.b16 %v81
  %v779 = vunpack.c.l.b16 %v82
  %v780 = vunpack.c.h.b16 %v82
  %v781 = vunpack.c.l.b16 %v83
  %v782 = vunpack.c.l.b16 %v84
  %v783 = vunpack.c.h.b16 %v84
  %v784 = vunpack.c.l.b16 %v85
  %v785 = vunpack.c.h.b16 %v85
  %v786 = vunpack.c.l.b16 %v86
  %v787 = vunpack.c.l.b16 %v87
  %v788 = vunpack.c.h.b16 %v87
  %v789 = vunpack.c.l.b16 %v88
  %v790 = vunpack.c.h.b16 %v88
  %v791 = vunpack.c.l.b16 %v89
  %v792 = vunpack.c.l.b16 %v90
  %v793 = vunpack.c.h.b16 %v90
  %v794 = vunpack.c.l.b16 %v91
  %v795 = vunpack.c.h.b16 %v91
  %v796 = vunpack.c.l.b16 %v92
  %v797 = vunpack.c.l.b16 %v93
  %v798 = vunpack.c.h.b16 %v93
  %v799 = vunpack.c.l.b16 %v94
  %v800 = vunpack.c.h.b16 %v94
  %v801 = vunpack.c.l.b16 %v95
  %v802 = vunpack.c.l.b16 %v96
  %v803 = vunpack.c.h.b16 %v96
  %v804 = vunpack.c.l.b16 %v97
  %v805 = vunpack.c.h.b16 %v97
  %v806 = vunpack.c.l.b16 %v98
  %v807 = vunpack.c.l.b16 %v99
  %v808 = vunpack.c.h.b16 %v99
  %v809 = vunpack.c.l.b16 %v100
  %v810 = vunpack.c.h.b16 %v100
  %v811 = vunpack.c.l.b16 %v101
  %v812 = vunpack.c.l.b16 %v102
  %v813 = vunpack.c.h.b16 %v102
  %v814 = vunpack.c.l.b16 %v103
  %v815 = vunpack.c.h.b16 %v103
  %v816 = vunpack.c.l.b16 %v104
  %v817 = vunpack.c.l.b16 %v105
  %v818 = vunpack.c.h.b16 %v105
  %v819 = vunpack.c.l.b16 %v106
  %v820 = vunpack.c.h.b16 %v106
  %v821 = vunpack.c.l.b16 %v107
  %v822 = vunpack.c.l.b16 %v108
  %v823 = vunpack.c.h.b16 %v108
  %v824 = vunpack.c.l.b16 %v109
  %v825 = vunpack.c.h.b16 %v109
  %v826 = vunpack.c.l.b16 %v110
  %v827 = vunpack.c.l.b16 %v111
  %v828 = vunpack.c.h.b16 %v111
  %v829 = vunpack.c.l.b16 %v112
  %v830 = vunpack.c.h.b16 %v112
  %v831 = vunpack.c.l.b16 %v113
  %v832 = vunpack.c.l.b16 %v114
  %v833 = vunpack.c.h.b16 %v114
  %v834 = vunpack.c.l.b16 %v115
  %v835 = vunpack.c.h.b16 %v115
  %v836 = vunpack.c.l.b16 %v116
  %v837 = vunpack.c.l.b16 %v117
  %v838 = vunpack.c.h.b16 %v117
  %v839 = vunpack.c.l.b16 %v118
  %v840 = vunpack.c.h.b16 %v118
  %v841 = vunpack.c.l.b16 %v119
  %v842 = vunpack.c.l.b16 %v120
  %v843 = vunpack.c.h.b16 %v120
  %v844 = vunpack.c.l.b16 %v121
  %v845 = vunpack.c.h.b16 %v121
  %v846 = vunpack.c.l.b16 %v122
  %v847 = vunpack.c.l.b16 %v123
  %v848 = vunpack.c.h.b16 %v123
  %v849 = vunpack.c.l.b16 %v124
  %v850 = vunpack.c.h.b16 %v124
  %v851 = vunpack.c.l.b16 %v125
  %v852 = vunpack.c.l.b16 %v126
  %v853 = vunpack.c.h.b16 %v126
  %v854 = vunpack.c.l.b16 %v127
  %v855 = vunpack.c.h.b16 %v127
  %v856 = vunpack.c.l.b16 %v128
  %v857 = vunpack.c.l.b16 %v129
  %v858 = vunpack.c.h.b16 %v129
  %v859 = vunpack.c.l.b16 %v130
  %v860 = vunpack.c.h.b16 %v130
  %v861 = vunpack.c.l.b16 %v131
  %v862 = vunpack.c.l.b16 %v132
  %v863 = vunpack.c.h.b16 %v132
  %v864 = vunpack.c.l.b16 %v133
  %v865 = vunpack.c.h.b16 %v133
  %v866 = vunpack.c.l.b16 %v134
  %v867 = vunpack.c.l.b16 %v135
  %v868 = vunpack.c.h.b16 %v135
  %v869 = vunpack.c.l.b16 %v136
  %v870 = vunpack.c.h.b16 %v136
  %v871 = vunpack.c.l.b16 %v137
  %v872 = vunpack.c.l.b16 %v138
  %v873 = vunpack.c.h.b16 %v138
  %v874 = vunpack.c.l.b16 %v139
  %v875 = vunpack.c.h.b16 %v139
  %v876 = vunpack.c.l.b16 %v140
  %v877 = vunpack.c.l.b16 %v141
  %v878 = vunpack.c.h.b16 %v141
  %v879 = vunpack.c.l.b16 %v142
  %v880 = vunpack.c.h.b16 %v142
  %v881 = vunpack.c.l.b16 %v143
  %v882 = vunpack.c.l.b16 %v144
  %v883 = vunpack.c.h.b16 %v144
  %v884 = vunpack.c.l.b16 %v145
  %v885 = vunpack.c.h.b16 %v145
  %v886 = vunpack.c.l.b16 %v146
  %v887 = vunpack.c.l.b16 %v147
  %v888 = vunpack.c.h.b16 %v147
  %v889 = vunpack.c.l.b16 %v148
  %v890 = vunpack.c.h.b16 %v148
  %v891 = vunpack.c.l.b16 %v149
  %v892 = vunpack.c.l.b16 %v150
  %v893 = vunpack.c.h.b16 %v150
  %v894 = vunpack.c.l.b16 %v151
  %v895 = vunpack.c.h.b16 %v151
  %v896 = vunpack.c.l.b16 %v152
  %v897 = vunpack.c.l.b16 %v153
  %v898 = vunpack.c.h.b16 %v153
  %v899 = vunpack.c.l.b16 %v154
  %v900 = vunpack.c.h.b16 %v154
  %v901 = vunpack.c.l.b16 %v155
  %v902 = vunpack.c.l.b16 %v156
  %v903 = vunpack.c.h.b16 %v156
  %v904 = vunpack.c.l.b16 %v157
  %v905 = vunpack.c.h.b16 %v157
  %v906 = vunpack.c.l.b16 %v158
  %v907 = vunpack.c.l.b16 %v159
  %v908 = vunpack.c.h.b16 %v159
  %v909 = vunpack.c.l.b16 %v160
  %v910 = vunpack.c.h.b16 %v160
  %v911 = vunpack.c.l.b16 %v161
  %v912 = vunpack.c.l.b16 %v162
  %v913 = vunpack.c.h.b16 %v162
  %v914 = vunpack.c.l.b16 %v163
  %v915 = vunpack.c.h.b16 %v163
  %v916 = vunpack.c.l.b16 %v164
  %v917 = vpack.c.b16 %v682, %v677
  %v918 = vpack.c.b16 %v683, %v678
  %v919 = vpack.c.b16 %v684, %v679
  %v920 = vpack.c.b16 %v685, %v680
  %v921 = vpack.c.b16 %v686, %v681
  %v922 = vpack.c.b16 %v692, %v687
  %v923 = vpack.c.b16 %v693, %v688
  %v924 = vpack.c.b16 %v694, %v689
  %v925 = vpack.c.b16 %v695, %v690
  %v926 = vpack.c.b16 %v696, %v691
  %v927 = vpack.c.b16 %v702, %v697
  %v928 = vpack.c.b16 %v703, %v698
  %v929 = vpack.c.b16 %v704, %v699
  %v930 = vpack.c.b16 %v705, %v700
  %v931 = vpack.c.b16 %v706, %v701
  %v932 = vpack.c.b16 %v712, %v707
  %v933 = vpack.c.b16 %v713, %v708
  %v934 = vpack.c.b16 %v714, %v709
  %v935 = vpack.c.b16 %v715, %v710
  %v936 = vpack.c.b16 %v716, %v711
  %v937 = vpack.c.b16 %v722, %v717
  %v938 = vpack.c.b16 %v723, %v718
  %v939 = vpack.c.b16 %v724, %v719
  %v940 = vpack.c.b16 %v725, %v720
  %v941 = vpack.c.b16 %v726, %v721
  %v942 = vpack.c.b16 %v732, %v727
  %v943 = vpack.c.b16 %v733, %v728
  %v944 = vpack.c.b16 %v734, %v729
  %v945 = vpack.c.b16 %v735, %v730
  %v946 = vpack.c.b16 %v736, %v731
  %v947 = vpack.c.b16 %v742, %v737
  %v948 = vpack.c.b16 %v743, %v738
  %v949 = vpack.c.b16 %v744, %v739
  %v950 = vpack.c.b16 %v745, %v740
  %v951 = vpack.c.b16 %v746, %v741
  %v952 = vpack.c.b16 %v752, %v747
  %v953 = vpack.c.b16 %v753, %v748
  %v954 = vpack.c.b16 %v754, %v749
  %v955 = vpack.c.b16 %v755, %v750
  %v956 = vpack.c.b16 %v756, %v751
  %v957 = vpack.c.b16 %v762, %v757
  %v958 = vpack.c.b16 %v763, %v758
  %v959 = vpack.c.b16 %v764, %v759
  %v960 = vpack.c.b16 %v765, %v760
  %v961 = vpack.c.b16 %v766, %v761
  %v962 = vpack.c.b16 %v772, %v767
  %v963 = vpack.c.b16 %v773, %v768
  %v964 = vpack.c.b16 %v774, %v769
  %v965 = vpack.c.b16 %v775, %v770
  %v966 = vpack.c.b16 %v776, %v771
  %v967 = vpack.c.b16 %v782, %v777
  %v968 = vpack.c.b16 %v783, %v778
  %v969 = vpack.c.b16 %v784, %v779
  %v970 = vpack.c.b16 %v785, %v780
  %v971 = vpack.c.b16 %v786, %v781
  %v972 = vpack.c.b16 %v792, %v787
  %v973 = vpack.c.b16 %v793, %v788
  %v974 = vpack.c.b16 %v794, %v789
  %v975 = vpack.c.b16 %v795, %v790
  %v976 = vpack.c.b16 %v796, %v791
  %v977 = vpack.c.b16 %v802, %v797
  %v978 = vpack.c.b16 %v803, %v798
  %v979 = vpack.c.b16 %v804, %v799
  %v980 = vpack.c.b16 %v805, %v800
  %v981 = vpack.c.b16 %v806, %v801
  %v982 = vpack.c.b16 %v812, %v807
  %v983 = vpack.c.b16 %v813, %v808
  %v984 = vpack.c.b16 %v814, %v809
  %v985 = vpack.c.b16 %v815, %v810
  %v986 = vpack.c.b16 %v816, %v811
  %v987 = vpack.c.b16 %v822, %v817
  %v988 = vpack.c.b16 %v823, %v818
  %v989 = vpack.c.b16 %v824, %v819
  %v990 = vpack.c.b16 %v825, %v820
  %v991 = vpack.c.b16 %v826, %v821
  %v992 = vpack.c.b16 %v832, %v827
  %v993 = vpack.c.b16 %v833, %v828
  %v994 = vpack.c.b16 %v834, %v829
  %v995 = vpack.c.b16 %v835, %v830
  %v996 = vpack.c.b16 %v836, %v831
  %v997 = vpack.c.b16 %v842, %v837
  %v998 = vpack.c.b16 %v843, %v838
  %v999 = vpack.c.b16 %v844, %v839
  %v1000 = vpack.c.b16 %v845, %v840
  %v1001 = vpack.c.b16 %v846, %v841
  %v1002 = vpack.c.b16 %v852, %v847
  %v1003 = vpack.c.b16 %v853, %v848
  %v1004 = vpack.c.b16 %v854, %v849
  %v1005 = vpack.c.b16 %v855, %v850
  %v1006 = vpack.c.b16 %v856, %v851
  %v1007 = vpack.c.b16 %v862, %v857
  %v1008 = vpack.c.b16 %v863, %v858
  %v1009 = vpack.c.b16 %v864, %v859
  %v1010 = vpack.c.b16 %v865, %v860
  %v1011 = vpack.c.b16 %v866, %v861
  %v1012 = vpack.c.b16 %v872, %v867
  %v1013 = vpack.c.b16 %v873, %v868
  %v1014 = vpack.c.b16 %v874, %v869
  %v1015 = vpack.c.b16 %v875, %v870
  %v1016 = vpack.c.b16 %v876, %v871
  %v1017 = vpack.c.b16 %v882, %v877
  %v1018 = vpack.c.b16 %v883, %v878
  %v1019 = vpack.c.b16 %v884, %v879
  %v1020 = vpack.c.b16 %v885, %v880
  %v1021 = vpack.c.b16 %v886, %v881
  %v1022 = vpack.c.b16 %v892, %v887
  %v1023 = vpack.c.b16 %v893, %v888
  %v1024 = vpack.c.b16 %v894, %v889
  %v1025 = vpack.c.b16 %v895, %v890
  %v1026 = vpack.c.b16 %v896, %v891
  %v1027 = vpack.c.b16 %v902, %v897
  %v1028 = vpack.c.b16 %v903, %v898
  %v1029 = vpack.c.b16 %v904, %v899
  %v1030 = vpack.c.b16 %v905, %v900
  %v1031 = vpack.c.b16 %v906, %v901
  %v1032 = vpack.c.b16 %v912, %v907
  %v1033 = vpack.c.b16 %v913, %v908
  %v1034 = vpack.c.b16 %v914, %v909
  %v1035 = vpack.c.b16 %v915, %v910
  %v1036 = vpack.c.b16 %v916, %v911
  %v1237 = vunpack.c.l.b16 %v165
  %v1238 = vunpack.c.l.b16 %v166
  %v1239 = vunpack.c.l.b16 %v167
  %v1240 = vunpack.c.l.b16 %v168
  %v1241 = vunpack.c.l.b16 %v169
  %v1242 = vunpack.c.l.b16 %v170
  %v1243 = vunpack.c.l.b16 %v171
  %v1244 = vunpack.c.l.b16 %v172
  %v1245 = vunpack.c.l.b16 %v173
  %v1246 = vunpack.c.l.b16 %v174
  %v1247 = vunpack.c.l.b16 %v175
  %v1248 = vunpack.c.l.b16 %v176
  %v1249 = vunpack.c.l.b16 %v177
  %v1250 = vunpack.c.l.b16 %v178
  %v1251 = vunpack.c.l.b16 %v179
  %v1252 = vunpack.c.l.b16 %v180
  %v1253 = vunpack.c.l.b16 %v181
  %v1254 = vunpack.c.l.b16 %v182
  %v1255 = vunpack.c.l.b16 %v183
  %v1256 = vunpack.c.l.b16 %v184
  %v1257 = vunpack.c.l.b16 %v185
  %v1258 = vunpack.c.l.b16 %v186
  %v1259 = vunpack.c.l.b16 %v187
  %v1260 = vunpack.c.l.b16 %v188
  %v1261 = vunpack.c.l.b16 %v189
  %v1262 = vunpack.c.l.b16 %v190
  %v1263 = vunpack.c.l.b16 %v191
  %v1264 = vunpack.c.l.b16 %v192
  %v1265 = vunpack.c.l.b16 %v193
  %v1266 = vunpack.c.l.b16 %v194
  %v1267 = vunpack.c.l.b16 %v195
  %v1268 = vunpack.c.l.b16 %v196
  %v1269 = vunpack.c.l.b16 %v197
  %v1270 = vunpack.c.l.b16 %v198
  %v1271 = vunpack.c.l.b16 %v199
  %v1272 = vunpack.c.l.b16 %v200
  %v1273 = vunpack.c.l.b16 %v201
  %v1274 = vunpack.c.l.b16 %v202
  %v1275 = vunpack.c.l.b16 %v203
  %v1276 = vunpack.c.l.b16 %v204
  %v1277 = vunpack.c.l.b16 %v205
  %v1278 = vunpack.c.l.b16 %v206
  %v1279 = vunpack.c.l.b16 %v207
  %v1280 = vunpack.c.l.b16 %v208
  %v1281 = vunpack.c.l.b16 %v209
  %v1282 = vunpack.c.l.b16 %v210
  %v1283 = vunpack.c.l.b16 %v211
  %v1284 = vunpack.c.l.b16 %v212
  %v1285 = vunpack.c.l.b16 %v213
  %v1286 = vunpack.c.l.b16 %v214
  %v1287 = vunpack.c.l.b16 %v215
  %v1288 = vunpack.c.l.b16 %v216
  %v1289 = vunpack.c.l.b16 %v217
  %v1290 = vunpack.c.l.b16 %v218
  %v1291 = vunpack.c.l.b16 %v219
  %v1292 = vunpack.c.l.b16 %v220
  %v1293 = vunpack.c.l.b16 %v221
  %v1294 = vunpack.c.l.b16 %v222
  %v1295 = vunpack.c.l.b16 %v223
  %v1296 = vunpack.c.l.b16 %v224
  %v1297 = vunpack.c.l.b16 %v225
  %v1298 = vunpack.c.l.b16 %v226
  %v1299 = vunpack.c.l.b16 %v227
  %v1300 = vunpack.c.l.b16 %v228
  %v1301 = vunpack.c.l.b16 %v229
  %v1302 = vunpack.c.l.b16 %v230
  %v1303 = vunpack.c.l.b16 %v231
  %v1304 = vunpack.c.l.b16 %v232
  %v1305 = vunpack.c.l.b16 %v233
  %v1306 = vunpack.c.l.b16 %v234
  %v1307 = vunpack.c.l.b16 %v235
  %v1308 = vunpack.c.l.b16 %v236
  %v1309 = vunpack.c.l.b16 %v237
  %v1310 = vunpack.c.l.b16 %v238
  %v1311 = vunpack.c.l.b16 %v239
  %v1312 = vunpack.c.l.b16 %v240
  %v1313 = vunpack.c.l.b16 %v241
  %v1314 = vunpack.c.l.b16 %v242
  %v1315 = vunpack.c.l.b16 %v243
  %v1316 = vunpack.c.l.b16 %v244
  %v1317 = vpack.c.b16 %v1238, %v1237
  %v1318 = vpack.c.b16 %v1240, %v1239
  %v1319 = vpack.c.b16 %v1242, %v1241
  %v1320 = vpack.c.b16 %v1244, %v1243
  %v1321 = vpack.c.b16 %v1246, %v1245
  %v1322 = vpack.c.b16 %v1248, %v1247
  %v1323 = vpack.c.b16 %v1250, %v1249
  %v1324 = vpack.c.b16 %v1252, %v1251
  %v1325 = vpack.c.b16 %v1254, %v1253
  %v1326 = vpack.c.b16 %v1256, %v1255
  %v1327 = vpack.c.b16 %v1258, %v1257
  %v1328 = vpack.c.b16 %v1260, %v1259
  %v1329 = vpack.c.b16 %v1262, %v1261
  %v1330 = vpack.c.b16 %v1264, %v1263
  %v1331 = vpack.c.b16 %v1266, %v1265
  %v1332 = vpack.c.b16 %v1268, %v1267
  %v1333 = vpack.c.b16 %v1270, %v1269
  %v1334 = vpack.c.b16 %v1272, %v1271
  %v1335 = vpack.c.b16 %v1274, %v1273
  %v1336 = vpack.c.b16 %v1276, %v1275
  %v1337 = vpack.c.b16 %v1278, %v1277
  %v1338 = vpack.c.b16 %v1280, %v1279
  %v1339 = vpack.c.b16 %v1282, %v1281
  %v1340 = vpack.c.b16 %v1284, %v1283
  %v1341 = vpack.c.b16 %v1286, %v1285
  %v1342 = vpack.c.b16 %v1288, %v1287
  %v1343 = vpack.c.b16 %v1290, %v1289
  %v1344 = vpack.c.b16 %v1292, %v1291
  %v1345 = vpack.c.b16 %v1294, %v1293
  %v1346 = vpack.c.b16 %v1296, %v1295
  %v1347 = vpack.c.b16 %v1298, %v1297
  %v1348 = vpack.c.b16 %v1300, %v1299
  %v1349 = vpack.c.b16 %v1302, %v1301
  %v1350 = vpack.c.b16 %v1304, %v1303
  %v1351 = vpack.c.b16 %v1306, %v1305
  %v1352 = vpack.c.b16 %v1308, %v1307
  %v1353 = vpack.c.b16 %v1310, %v1309
  %v1354 = vpack.c.b16 %v1312, %v1311
  %v1355 = vpack.c.b16 %v1314, %v1313
  %v1356 = vpack.c.b16 %v1316, %v1315
  %1397 = vmatprep.subr.bf16.mxu0 0
  %1398 = vmatpush1.bf16.msra.mxu0 %v1317
  %1399 = vmatprep.subr.bf16.mxu0 0
  %1400 = vmatpush1.bf16.msra.mxu0 %v1318
  %1401 = vmatprep.subr.bf16.mxu0 0
  %1402 = vmatpush1.bf16.msra.mxu0 %v1319
  %1403 = vmatprep.subr.bf16.mxu0 0
  %1404 = vmatpush1.bf16.msra.mxu0 %v1320
  %1405 = vmatprep.subr.bf16.mxu0 0
  %1406 = vmatpush1.bf16.msra.mxu0 %v1321
  %1407 = vmatprep.subr.bf16.mxu0 0
  %1408 = vmatpush1.bf16.msra.mxu0 %v1322
  %1409 = vmatprep.subr.bf16.mxu0 0
  %1410 = vmatpush1.bf16.msra.mxu0 %v1323
  %1411 = vmatprep.subr.bf16.mxu0 0
  %1412 = vmatpush1.bf16.msra.mxu0 %v1324
  %1413 = vmatprep.subr.bf16.mxu0 0
  %1414 = vmatpush1.bf16.msra.mxu0 %v1325
  %1415 = vmatprep.subr.bf16.mxu0 0
  %1416 = vmatpush1.bf16.msra.mxu0 %v1326
  %1417 = vmatprep.subr.bf16.mxu0 0
  %1418 = vmatpush1.bf16.msra.mxu0 %v1327
  %1419 = vmatprep.subr.bf16.mxu0 0
  %1420 = vmatpush1.bf16.msra.mxu0 %v1328
  %1421 = vmatprep.subr.bf16.mxu0 0
  %1422 = vmatpush1.bf16.msra.mxu0 %v1329
  %1423 = vmatprep.subr.bf16.mxu0 0
  %1424 = vmatpush1.bf16.msra.mxu0 %v1330
  %1425 = vmatprep.subr.bf16.mxu0 0
  %1426 = vmatpush1.bf16.msra.mxu0 %v1331
  %1427 = vmatprep.subr.bf16.mxu0 0
  %1428 = vmatpush1.bf16.msra.mxu0 %v1332
  %1429 = vmatprep.mubr.bf16.mxu0 %v918
  %1430 = vmatmul.mubr.bf16.gmra.mrb[0].mxu0 %v917
  %v1431 = vpop.f32.mrb[0].mxu0
  %v1432 = vadd.f32 %v296, %v1431
  %v1433 = vpop.f32.mrb[0].mxu0
  %v1434 = vpop.f32.mrb[0].mxu0
  %v1435 = vadd.f32 %v301, %v1434
  %v1436 = vpop.f32.mrb[0].mxu0
  %1437 = vmatprep.mubr.bf16.mxu0 %v923
  %1438 = vmatmul.mubr.bf16.gmra.mrb[0].mxu0 %v922
  %v1439 = vpop.f32.mrb[0].mxu0
  %v1440 = vadd.f32 %v306, %v1439
  %v1441 = vpop.f32.mrb[0].mxu0
  %v1442 = vpop.f32.mrb[0].mxu0
  %v1443 = vadd.f32 %v311, %v1442
  %v1444 = vpop.f32.mrb[0].mxu0
  %1445 = vmatprep.mubr.bf16.mxu0 %v928
  %1446 = vmatmul.mubr.bf16.gmra.mrb[0].mxu0 %v927
  %v1447 = vpop.f32.mrb[0].mxu0
  %v1448 = vadd.f32 %v316, %v1447
  %v1449 = vpop.f32.mrb[0].mxu0
  %v1450 = vpop.f32.mrb[0].mxu0
  %v1451 = vadd.f32 %v321, %v1450
  %v1452 = vpop.f32.mrb[0].mxu0
  %1453 = vmatprep.mubr.bf16.mxu0 %v933
  %1454 = vmatmul.mubr.bf16.gmra.mrb[0].mxu0 %v932
  %v1455 = vpop.f32.mrb[0].mxu0
  %v1456 = vadd.f32 %v326, %v1455
  %v1457 = vpop.f32.mrb[0].mxu0
  %v1458 = vpop.f32.mrb[0].mxu0
  %v1459 = vadd.f32 %v331, %v1458
  %v1460 = vpop.f32.mrb[0].mxu0
  %1461 = vmatprep.mubr.bf16.mxu0 %v938
  %1462 = vmatmul.mubr.bf16.gmra.mrb[0].mxu0 %v937
  %v1463 = vpop.f32.mrb[0].mxu0
  %v1464 = vadd.f32 %v336, %v1463
  %v1465 = vpop.f32.mrb[0].mxu0
  %v1466 = vpop.f32.mrb[0].mxu0
  %v1467 = vadd.f32 %v341, %v1466
  %v1468 = vpop.f32.mrb[0].mxu0
  %1469 = vmatprep.mubr.bf16.mxu0 %v943
  %1470 = vmatmul.mubr.bf16.gmra.mrb[0].mxu0 %v942
  %v1471 = vpop.f32.mrb[0].mxu0
  %v1472 = vadd.f32 %v346, %v1471
  %v1473 = vpop.f32.mrb[0].mxu0
  %v1474 = vpop.f32.mrb[0].mxu0
  %v1475 = vadd.f32 %v351, %v1474
  %v1476 = vpop.f32.mrb[0].mxu0
  %1477 = vmatprep.mubr.bf16.mxu0 %v948
  %1478 = vmatmul.mubr.bf16.gmra.mrb[0].mxu0 %v947
  %v1479 = vpop.f32.mrb[0].mxu0
  %v1480 = vadd.f32 %v356, %v1479
  %v1481 = vpop.f32.mrb[0].mxu0
  %v1482 = vpop.f32.mrb[0].mxu0
  %v1483 = vadd.f32 %v361, %v1482
  %v1484 = vpop.f32.mrb[0].mxu0
  %1485 = vmatprep.mubr.bf16.mxu0 %v953
  %1486 = vmatmul.mubr.bf16.gmra.mrb[0].mxu0 %v952
  %v1487 = vpop.f32.mrb[0].mxu0
  %v1488 = vadd.f32 %v366, %v1487
  %v1489 = vpop.f32.mrb[0].mxu0
  %v1490 = vpop.f32.mrb[0].mxu0
  %v1491 = vadd.f32 %v371, %v1490
  %v1492 = vpop.f32.mrb[0].mxu0
  %1493 = vmatprep.mubr.bf16.mxu0 %v958
  %1494 = vmatmul.mubr.bf16.gmra.mrb[0].mxu0 %v957
  %v1495 = vpop.f32.mrb[0].mxu0
  %v1496 = vadd.f32 %v376, %v1495
  %v1497 = vpop.f32.mrb[0].mxu0
  %v1498 = vpop.f32.mrb[0].mxu0
  %v1499 = vadd.f32 %v381, %v1498
  %v1500 = vpop.f32.mrb[0].mxu0
  %1501 = vmatprep.mubr.bf16.mxu0 %v963
  %1502 = vmatmul.mubr.bf16.gmra.mrb[0].mxu0 %v962
  %v1503 = vpop.f32.mrb[0].mxu0
  %v1504 = vadd.f32 %v386, %v1503
  %v1505 = vpop.f32.mrb[0].mxu0
  %v1506 = vpop.f32.mrb[0].mxu0
  %v1507 = vadd.f32 %v391, %v1506
  %v1508 = vpop.f32.mrb[0].mxu0
  %1509 = vmatprep.mubr.bf16.mxu0 %v968
  %1510 = vmatmul.mubr.bf16.gmra.mrb[0].mxu0 %v967
  %v1511 = vpop.f32.mrb[0].mxu0
  %v1512 = vadd.f32 %v396, %v1511
  %v1513 = vpop.f32.mrb[0].mxu0
  %v1514 = vpop.f32.mrb[0].mxu0
  %v1515 = vadd.f32 %v401, %v1514
  %v1516 = vpop.f32.mrb[0].mxu0
  %1517 = vmatprep.mubr.bf16.mxu0 %v973
  %1518 = vmatmul.mubr.bf16.gmra.mrb[0].mxu0 %v972
  %v1519 = vpop.f32.mrb[0].mxu0
  %v1520 = vadd.f32 %v406, %v1519
  %v1521 = vpop.f32.mrb[0].mxu0
  %v1522 = vpop.f32.mrb[0].mxu0
  %v1523 = vadd.f32 %v411, %v1522
  %v1524 = vpop.f32.mrb[0].mxu0
  %1525 = vmatprep.mubr.bf16.mxu0 %v978
  %1526 = vmatmul.mubr.bf16.gmra.mrb[0].mxu0 %v977
  %v1527 = vpop.f32.mrb[0].mxu0
  %v1528 = vadd.f32 %v416, %v1527
  %v1529 = vpop.f32.mrb[0].mxu0
  %v1530 = vpop.f32.mrb[0].mxu0
  %v1531 = vadd.f32 %v421, %v1530
  %v1532 = vpop.f32.mrb[0].mxu0
  %1533 = vmatprep.mubr.bf16.mxu0 %v983
  %1534 = vmatmul.mubr.bf16.gmra.mrb[0].mxu0 %v982
  %v1535 = vpop.f32.mrb[0].mxu0
  %v1536 = vadd.f32 %v426, %v1535
  %v1537 = vpop.f32.mrb[0].mxu0
  %v1538 = vpop.f32.mrb[0].mxu0
  %v1539 = vadd.f32 %v431, %v1538
  %v1540 = vpop.f32.mrb[0].mxu0
  %1541 = vmatprep.mubr.bf16.mxu0 %v988
  %1542 = vmatmul.mubr.bf16.gmra.mrb[0].mxu0 %v987
  %v1543 = vpop.f32.mrb[0].mxu0
  %v1544 = vadd.f32 %v436, %v1543
  %v1545 = vpop.f32.mrb[0].mxu0
  %v1546 = vpop.f32.mrb[0].mxu0
  %v1547 = vadd.f32 %v441, %v1546
  %v1548 = vpop.f32.mrb[0].mxu0
  %1549 = vmatprep.mubr.bf16.mxu0 %v993
  %1550 = vmatmul.mubr.bf16.gmra.mrb[0].mxu0 %v992
  %v1551 = vpop.f32.mrb[0].mxu0
  %v1552 = vadd.f32 %v446, %v1551
  %v1553 = vpop.f32.mrb[0].mxu0
  %v1554 = vpop.f32.mrb[0].mxu0
  %v1555 = vadd.f32 %v451, %v1554
  %v1556 = vpop.f32.mrb[0].mxu0
  %1557 = vmatprep.mubr.bf16.mxu0 %v998
  %1558 = vmatmul.mubr.bf16.gmra.mrb[0].mxu0 %v997
  %v1559 = vpop.f32.mrb[0].mxu0
  %v1560 = vadd.f32 %v456, %v1559
  %v1561 = vpop.f32.mrb[0].mxu0
  %v1562 = vpop.f32.mrb[0].mxu0
  %v1563 = vadd.f32 %v461, %v1562
  %v1564 = vpop.f32.mrb[0].mxu0
  %1565 = vmatprep.mubr.bf16.mxu0 %v1003
  %1566 = vmatmul.mubr.bf16.gmra.mrb[0].mxu0 %v1002
  %v1567 = vpop.f32.mrb[0].mxu0
  %v1568 = vadd.f32 %v466, %v1567
  %v1569 = vpop.f32.mrb[0].mxu0
  %v1570 = vpop.f32.mrb[0].mxu0
  %v1571 = vadd.f32 %v471, %v1570
  %v1572 = vpop.f32.mrb[0].mxu0
  %1573 = vmatprep.mubr.bf16.mxu0 %v1008
  %1574 = vmatmul.mubr.bf16.gmra.mrb[0].mxu0 %v1007
  %v1575 = vpop.f32.mrb[0].mxu0
  %v1576 = vadd.f32 %v476, %v1575
  %v1577 = vpop.f32.mrb[0].mxu0
  %v1578 = vpop.f32.mrb[0].mxu0
  %v1579 = vadd.f32 %v481, %v1578
  %v1580 = vpop.f32.mrb[0].mxu0
  %1581 = vmatprep.mubr.bf16.mxu0 %v1013
  %1582 = vmatmul.mubr.bf16.gmra.mrb[0].mxu0 %v1012
  %v1583 = vpop.f32.mrb[0].mxu0
  %v1584 = vadd.f32 %v486, %v1583
  %v1585 = vpop.f32.mrb[0].mxu0
  %v1586 = vpop.f32.mrb[0].mxu0
  %v1587 = vadd.f32 %v491, %v1586
  %v1588 = vpop.f32.mrb[0].mxu0
  %1589 = vmatprep.mubr.bf16.mxu0 %v1018
  %1590 = vmatmul.mubr.bf16.gmra.mrb[0].mxu0 %v1017
  %v1591 = vpop.f32.mrb[0].mxu0
  %v1592 = vadd.f32 %v496, %v1591
  %v1593 = vpop.f32.mrb[0].mxu0
  %v1594 = vpop.f32.mrb[0].mxu0
  %v1595 = vadd.f32 %v501, %v1594
  %v1596 = vpop.f32.mrb[0].mxu0
  %1597 = vmatprep.mubr.bf16.mxu0 %v1023
  %1598 = vmatmul.mubr.bf16.gmra.mrb[0].mxu0 %v1022
  %v1599 = vpop.f32.mrb[0].mxu0
  %v1600 = vadd.f32 %v506, %v1599
  %v1601 = vpop.f32.mrb[0].mxu0
  %v1602 = vpop.f32.mrb[0].mxu0
  %v1603 = vadd.f32 %v511, %v1602
  %v1604 = vpop.f32.mrb[0].mxu0
  %1605 = vmatprep.mubr.bf16.mxu0 %v1028
  %1606 = vmatmul.mubr.bf16.gmra.mrb[0].mxu0 %v1027
  %v1607 = vpop.f32.mrb[0].mxu0
  %v1608 = vadd.f32 %v516, %v1607
  %v1609 = vpop.f32.mrb[0].mxu0
  %v1610 = vpop.f32.mrb[0].mxu0
  %v1611 = vadd.f32 %v521, %v1610
  %v1612 = vpop.f32.mrb[0].mxu0
  %1613 = vmatprep.mubr.bf16.mxu0 %v1033
  %1614 = vmatmul.mubr.bf16.gmra.mrb[0].mxu0 %v1032
  %v1615 = vpop.f32.mrb[0].mxu0
  %v1616 = vadd.f32 %v526, %v1615
  %v1617 = vpop.f32.mrb[0].mxu0
  %v1618 = vpop.f32.mrb[0].mxu0
  %v1619 = vadd.f32 %v531, %v1618
  %v1620 = vpop.f32.mrb[0].mxu0
  %1621 = vdwg.mxu0
  %1622 = vmatprep.subr.bf16.mxu0 0
  %1623 = vmatpush1.bf16.msra.mxu0 %v1333
  %1624 = vmatprep.subr.bf16.mxu0 0
  %1625 = vmatpush1.bf16.msra.mxu0 %v1334
  %1626 = vmatprep.subr.bf16.mxu0 0
  %1627 = vmatpush1.bf16.msra.mxu0 %v1335
  %1628 = vmatprep.subr.bf16.mxu0 0
  %1629 = vmatpush1.bf16.msra.mxu0 %v1336
  %1630 = vmatprep.subr.bf16.mxu0 0
  %1631 = vmatpush1.bf16.msra.mxu0 %v1337
  %1632 = vmatprep.subr.bf16.mxu0 0
  %1633 = vmatpush1.bf16.msra.mxu0 %v1338
  %1634 = vmatprep.subr.bf16.mxu0 0
  %1635 = vmatpush1.bf16.msra.mxu0 %v1339
  %1636 = vmatprep.subr.bf16.mxu0 0
  %1637 = vmatpush1.bf16.msra.mxu0 %v1340
  %1638 = vmatprep.subr.bf16.mxu0 0
  %1639 = vmatpush1.bf16.msra.mxu0 %v1341
  %1640 = vmatprep.subr.bf16.mxu0 0
  %1641 = vmatpush1.bf16.msra.mxu0 %v1342
  %1642 = vmatprep.subr.bf16.mxu0 0
  %1643 = vmatpush1.bf16.msra.mxu0 %v1343
  %1644 = vmatprep.subr.bf16.mxu0 0
  %1645 = vmatpush1.bf16.msra.mxu0 %v1344
  %1646 = vmatprep.subr.bf16.mxu0 0
  %1647 = vmatpush1.bf16.msra.mxu0 %v1345
  %1648 = vmatprep.subr.bf16.mxu0 0
  %1649 = vmatpush1.bf16.msra.mxu0 %v1346
  %1650 = vmatprep.subr.bf16.mxu0 0
  %1651 = vmatpush1.bf16.msra.mxu0 %v1347
  %1652 = vmatprep.subr.bf16.mxu0 0
  %1653 = vmatpush1.bf16.msra.mxu0 %v1348
  %1654 = vmatprep.mubr.bf16.mxu0 %v920
  %1655 = vmatmul.mubr.bf16.gmra.mrb[0].mxu0 %v919
  %v1656 = vpop.f32.mrb[0].mxu0
  %v1657 = vadd.f32 %v1432, %v1656
  %v1658 = vpop.f32.mrb[0].mxu0
  %v1659 = vpop.f32.mrb[0].mxu0
  %v1660 = vadd.f32 %v1435, %v1659
  %v1661 = vpop.f32.mrb[0].mxu0
  %1662 = vmatprep.mubr.bf16.mxu0 %v925
  %1663 = vmatmul.mubr.bf16.gmra.mrb[0].mxu0 %v924
  %v1664 = vpop.f32.mrb[0].mxu0
  %v1665 = vadd.f32 %v1440, %v1664
  %v1666 = vpop.f32.mrb[0].mxu0
  %v1667 = vpop.f32.mrb[0].mxu0
  %v1668 = vadd.f32 %v1443, %v1667
  %v1669 = vpop.f32.mrb[0].mxu0
  %1670 = vmatprep.mubr.bf16.mxu0 %v930
  %1671 = vmatmul.mubr.bf16.gmra.mrb[0].mxu0 %v929
  %v1672 = vpop.f32.mrb[0].mxu0
  %v1673 = vadd.f32 %v1448, %v1672
  %v1674 = vpop.f32.mrb[0].mxu0
  %v1675 = vpop.f32.mrb[0].mxu0
  %v1676 = vadd.f32 %v1451, %v1675
  %v1677 = vpop.f32.mrb[0].mxu0
  %1678 = vmatprep.mubr.bf16.mxu0 %v935
  %1679 = vmatmul.mubr.bf16.gmra.mrb[0].mxu0 %v934
  %v1680 = vpop.f32.mrb[0].mxu0
  %v1681 = vadd.f32 %v1456, %v1680
  %v1682 = vpop.f32.mrb[0].mxu0
  %v1683 = vpop.f32.mrb[0].mxu0
  %v1684 = vadd.f32 %v1459, %v1683
  %v1685 = vpop.f32.mrb[0].mxu0
  %1686 = vmatprep.mubr.bf16.mxu0 %v940
  %1687 = vmatmul.mubr.bf16.gmra.mrb[0].mxu0 %v939
  %v1688 = vpop.f32.mrb[0].mxu0
  %v1689 = vadd.f32 %v1464, %v1688
  %v1690 = vpop.f32.mrb[0].mxu0
  %v1691 = vpop.f32.mrb[0].mxu0
  %v1692 = vadd.f32 %v1467, %v1691
  %v1693 = vpop.f32.mrb[0].mxu0
  %1694 = vmatprep.mubr.bf16.mxu0 %v945
  %1695 = vmatmul.mubr.bf16.gmra.mrb[0].mxu0 %v944
  %v1696 = vpop.f32.mrb[0].mxu0
  %v1697 = vadd.f32 %v1472, %v1696
  %v1698 = vpop.f32.mrb[0].mxu0
  %v1699 = vpop.f32.mrb[0].mxu0
  %v1700 = vadd.f32 %v1475, %v1699
  %v1701 = vpop.f32.mrb[0].mxu0
  %1702 = vmatprep.mubr.bf16.mxu0 %v950
  %1703 = vmatmul.mubr.bf16.gmra.mrb[0].mxu0 %v949
  %v1704 = vpop.f32.mrb[0].mxu0
  %v1705 = vadd.f32 %v1480, %v1704
  %v1706 = vpop.f32.mrb[0].mxu0
  %v1707 = vpop.f32.mrb[0].mxu0
  %v1708 = vadd.f32 %v1483, %v1707
  %v1709 = vpop.f32.mrb[0].mxu0
  %1710 = vmatprep.mubr.bf16.mxu0 %v955
  %1711 = vmatmul.mubr.bf16.gmra.mrb[0].mxu0 %v954
  %v1712 = vpop.f32.mrb[0].mxu0
  %v1713 = vadd.f32 %v1488, %v1712
  %v1714 = vpop.f32.mrb[0].mxu0
  %v1715 = vpop.f32.mrb[0].mxu0
  %v1716 = vadd.f32 %v1491, %v1715
  %v1717 = vpop.f32.mrb[0].mxu0
  %1718 = vmatprep.mubr.bf16.mxu0 %v960
  %1719 = vmatmul.mubr.bf16.gmra.mrb[0].mxu0 %v959
  %v1720 = vpop.f32.mrb[0].mxu0
  %v1721 = vadd.f32 %v1496, %v1720
  %v1722 = vpop.f32.mrb[0].mxu0
  %v1723 = vpop.f32.mrb[0].mxu0
  %v1724 = vadd.f32 %v1499, %v1723
  %v1725 = vpop.f32.mrb[0].mxu0
  %1726 = vmatprep.mubr.bf16.mxu0 %v965
  %1727 = vmatmul.mubr.bf16.gmra.mrb[0].mxu0 %v964
  %v1728 = vpop.f32.mrb[0].mxu0
  %v1729 = vadd.f32 %v1504, %v1728
  %v1730 = vpop.f32.mrb[0].mxu0
  %v1731 = vpop.f32.mrb[0].mxu0
  %v1732 = vadd.f32 %v1507, %v1731
  %v1733 = vpop.f32.mrb[0].mxu0
  %1734 = vmatprep.mubr.bf16.mxu0 %v970
  %1735 = vmatmul.mubr.bf16.gmra.mrb[0].mxu0 %v969
  %v1736 = vpop.f32.mrb[0].mxu0
  %v1737 = vadd.f32 %v1512, %v1736
  %v1738 = vpop.f32.mrb[0].mxu0
  %v1739 = vpop.f32.mrb[0].mxu0
  %v1740 = vadd.f32 %v1515, %v1739
  %v1741 = vpop.f32.mrb[0].mxu0
  %1742 = vmatprep.mubr.bf16.mxu0 %v975
  %1743 = vmatmul.mubr.bf16.gmra.mrb[0].mxu0 %v974
  %v1744 = vpop.f32.mrb[0].mxu0
  %v1745 = vadd.f32 %v1520, %v1744
  %v1746 = vpop.f32.mrb[0].mxu0
  %v1747 = vpop.f32.mrb[0].mxu0
  %v1748 = vadd.f32 %v1523, %v1747
  %v1749 = vpop.f32.mrb[0].mxu0
  %1750 = vmatprep.mubr.bf16.mxu0 %v980
  %1751 = vmatmul.mubr.bf16.gmra.mrb[0].mxu0 %v979
  %v1752 = vpop.f32.mrb[0].mxu0
  %v1753 = vadd.f32 %v1528, %v1752
  %v1754 = vpop.f32.mrb[0].mxu0
  %v1755 = vpop.f32.mrb[0].mxu0
  %v1756 = vadd.f32 %v1531, %v1755
  %v1757 = vpop.f32.mrb[0].mxu0
  %1758 = vmatprep.mubr.bf16.mxu0 %v985
  %1759 = vmatmul.mubr.bf16.gmra.mrb[0].mxu0 %v984
  %v1760 = vpop.f32.mrb[0].mxu0
  %v1761 = vadd.f32 %v1536, %v1760
  %v1762 = vpop.f32.mrb[0].mxu0
  %v1763 = vpop.f32.mrb[0].mxu0
  %v1764 = vadd.f32 %v1539, %v1763
  %v1765 = vpop.f32.mrb[0].mxu0
  %1766 = vmatprep.mubr.bf16.mxu0 %v990
  %1767 = vmatmul.mubr.bf16.gmra.mrb[0].mxu0 %v989
  %v1768 = vpop.f32.mrb[0].mxu0
  %v1769 = vadd.f32 %v1544, %v1768
  %v1770 = vpop.f32.mrb[0].mxu0
  %v1771 = vpop.f32.mrb[0].mxu0
  %v1772 = vadd.f32 %v1547, %v1771
  %v1773 = vpop.f32.mrb[0].mxu0
  %1774 = vmatprep.mubr.bf16.mxu0 %v995
  %1775 = vmatmul.mubr.bf16.gmra.mrb[0].mxu0 %v994
  %v1776 = vpop.f32.mrb[0].mxu0
  %v1777 = vadd.f32 %v1552, %v1776
  %v1778 = vpop.f32.mrb[0].mxu0
  %v1779 = vpop.f32.mrb[0].mxu0
  %v1780 = vadd.f32 %v1555, %v1779
  %v1781 = vpop.f32.mrb[0].mxu0
  %1782 = vmatprep.mubr.bf16.mxu0 %v1000
  %1783 = vmatmul.mubr.bf16.gmra.mrb[0].mxu0 %v999
  %v1784 = vpop.f32.mrb[0].mxu0
  %v1785 = vadd.f32 %v1560, %v1784
  %v1786 = vpop.f32.mrb[0].mxu0
  %v1787 = vpop.f32.mrb[0].mxu0
  %v1788 = vadd.f32 %v1563, %v1787
  %v1789 = vpop.f32.mrb[0].mxu0
  %1790 = vmatprep.mubr.bf16.mxu0 %v1005
  %1791 = vmatmul.mubr.bf16.gmra.mrb[0].mxu0 %v1004
  %v1792 = vpop.f32.mrb[0].mxu0
  %v1793 = vadd.f32 %v1568, %v1792
  %v1794 = vpop.f32.mrb[0].mxu0
  %v1795 = vpop.f32.mrb[0].mxu0
  %v1796 = vadd.f32 %v1571, %v1795
  %v1797 = vpop.f32.mrb[0].mxu0
  %1798 = vmatprep.mubr.bf16.mxu0 %v1010
  %1799 = vmatmul.mubr.bf16.gmra.mrb[0].mxu0 %v1009
  %v1800 = vpop.f32.mrb[0].mxu0
  %v1801 = vadd.f32 %v1576, %v1800
  %v1802 = vpop.f32.mrb[0].mxu0
  %v1803 = vpop.f32.mrb[0].mxu0
  %v1804 = vadd.f32 %v1579, %v1803
  %v1805 = vpop.f32.mrb[0].mxu0
  %1806 = vmatprep.mubr.bf16.mxu0 %v1015
  %1807 = vmatmul.mubr.bf16.gmra.mrb[0].mxu0 %v1014
  %v1808 = vpop.f32.mrb[0].mxu0
  %v1809 = vadd.f32 %v1584, %v1808
  %v1810 = vpop.f32.mrb[0].mxu0
  %v1811 = vpop.f32.mrb[0].mxu0
  %v1812 = vadd.f32 %v1587, %v1811
  %v1813 = vpop.f32.mrb[0].mxu0
  %1814 = vmatprep.mubr.bf16.mxu0 %v1020
  %1815 = vmatmul.mubr.bf16.gmra.mrb[0].mxu0 %v1019
  %v1816 = vpop.f32.mrb[0].mxu0
  %v1817 = vadd.f32 %v1592, %v1816
  %v1818 = vpop.f32.mrb[0].mxu0
  %v1819 = vpop.f32.mrb[0].mxu0
  %v1820 = vadd.f32 %v1595, %v1819
  %v1821 = vpop.f32.mrb[0].mxu0
  %1822 = vmatprep.mubr.bf16.mxu0 %v1025
  %1823 = vmatmul.mubr.bf16.gmra.mrb[0].mxu0 %v1024
  %v1824 = vpop.f32.mrb[0].mxu0
  %v1825 = vadd.f32 %v1600, %v1824
  %v1826 = vpop.f32.mrb[0].mxu0
  %v1827 = vpop.f32.mrb[0].mxu0
  %v1828 = vadd.f32 %v1603, %v1827
  %v1829 = vpop.f32.mrb[0].mxu0
  %1830 = vmatprep.mubr.bf16.mxu0 %v1030
  %1831 = vmatmul.mubr.bf16.gmra.mrb[0].mxu0 %v1029
  %v1832 = vpop.f32.mrb[0].mxu0
  %v1833 = vadd.f32 %v1608, %v1832
  %v1834 = vpop.f32.mrb[0].mxu0
  %v1835 = vpop.f32.mrb[0].mxu0
  %v1836 = vadd.f32 %v1611, %v1835
  %v1837 = vpop.f32.mrb[0].mxu0
  %1838 = vmatprep.mubr.bf16.mxu0 %v1035
  %1839 = vmatmul.mubr.bf16.gmra.mrb[0].mxu0 %v1034
  %v1840 = vpop.f32.mrb[0].mxu0
  %v1841 = vadd.f32 %v1616, %v1840
  %v1842 = vpop.f32.mrb[0].mxu0
  %v1843 = vpop.f32.mrb[0].mxu0
  %v1844 = vadd.f32 %v1619, %v1843
  %v1845 = vpop.f32.mrb[0].mxu0
  %1846 = vdwg.mxu0
  %1847 = vmatprep.subr.bf16.mxu0 0
  %1848 = vmatpush1.bf16.msra.mxu0 %v1349
  %1849 = vmatprep.subr.bf16.mxu0 0
  %1850 = vmatpush1.bf16.msra.mxu0 %v1350
  %1851 = vmatprep.subr.bf16.mxu0 0
  %1852 = vmatpush1.bf16.msra.mxu0 %v1351
  %1853 = vmatprep.subr.bf16.mxu0 0
  %1854 = vmatpush1.bf16.msra.mxu0 %v1352
  %1855 = vmatprep.subr.bf16.mxu0 0
  %1856 = vmatpush1.bf16.msra.mxu0 %v1353
  %1857 = vmatprep.subr.bf16.mxu0 0
  %1858 = vmatpush1.bf16.msra.mxu0 %v1354
  %1859 = vmatprep.subr.bf16.mxu0 0
  %1860 = vmatpush1.bf16.msra.mxu0 %v1355
  %1861 = vmatprep.subr.bf16.mxu0 0
  %1862 = vmatpush1.bf16.msra.mxu0 %v1356
  %1863 = vmatprep.subr.bf16.mxu0 0
  %1864 = vmatpush1.bf16.msra.mxu0 0
  %1865 = vmatprep.subr.bf16.mxu0 0
  %1866 = vmatpush1.bf16.msra.mxu0 0
  %1867 = vmatprep.subr.bf16.mxu0 0
  %1868 = vmatpush1.bf16.msra.mxu0 0
  %1869 = vmatprep.subr.bf16.mxu0 0
  %1870 = vmatpush1.bf16.msra.mxu0 0
  %1871 = vmatprep.subr.bf16.mxu0 0
  %1872 = vmatpush1.bf16.msra.mxu0 0
  %1873 = vmatprep.subr.bf16.mxu0 0
  %1874 = vmatpush1.bf16.msra.mxu0 0
  %1875 = vmatprep.subr.bf16.mxu0 0
  %1876 = vmatpush1.bf16.msra.mxu0 0
  %1877 = vmatprep.subr.bf16.mxu0 0
  %1878 = vmatpush1.bf16.msra.mxu0 0
  %1879 = vmatprep.mubr.bf16.mxu0 0
  %1880 = vmatmul.mubr.bf16.gmra.mrb[0].mxu0 %v921
  %v1881 = vpop.f32.mrb[0].mxu0
  %v1882 = vadd.f32 %v1657, %v1881
  %v1883 = vpop.f32.mrb[0].mxu0
  %v1884 = vpop.f32.mrb[0].mxu0
  %v1885 = vadd.f32 %v1660, %v1884
  %v1886 = vpop.f32.mrb[0].mxu0
  %1887 = vmatprep.mubr.bf16.mxu0 0
  %1888 = vmatmul.mubr.bf16.gmra.mrb[0].mxu0 %v926
  %v1889 = vpop.f32.mrb[0].mxu0
  %v1890 = vadd.f32 %v1665, %v1889
  %v1891 = vpop.f32.mrb[0].mxu0
  %v1892 = vpop.f32.mrb[0].mxu0
  %v1893 = vadd.f32 %v1668, %v1892
  %v1894 = vpop.f32.mrb[0].mxu0
  %1895 = vmatprep.mubr.bf16.mxu0 0
  %1896 = vmatmul.mubr.bf16.gmra.mrb[0].mxu0 %v931
  %v1897 = vpop.f32.mrb[0].mxu0
  %v1898 = vadd.f32 %v1673, %v1897
  %v1899 = vpop.f32.mrb[0].mxu0
  %v1900 = vpop.f32.mrb[0].mxu0
  %v1901 = vadd.f32 %v1676, %v1900
  %v1902 = vpop.f32.mrb[0].mxu0
  %1903 = vmatprep.mubr.bf16.mxu0 0
  %1904 = vmatmul.mubr.bf16.gmra.mrb[0].mxu0 %v936
  %v1905 = vpop.f32.mrb[0].mxu0
  %v1906 = vadd.f32 %v1681, %v1905
  %v1907 = vpop.f32.mrb[0].mxu0
  %v1908 = vpop.f32.mrb[0].mxu0
  %v1909 = vadd.f32 %v1684, %v1908
  %v1910 = vpop.f32.mrb[0].mxu0
  %1911 = vmatprep.mubr.bf16.mxu0 0
  %1912 = vmatmul.mubr.bf16.gmra.mrb[0].mxu0 %v941
  %v1913 = vpop.f32.mrb[0].mxu0
  %v1914 = vadd.f32 %v1689, %v1913
  %v1915 = vpop.f32.mrb[0].mxu0
  %v1916 = vpop.f32.mrb[0].mxu0
  %v1917 = vadd.f32 %v1692, %v1916
  %v1918 = vpop.f32.mrb[0].mxu0
  %1919 = vmatprep.mubr.bf16.mxu0 0
  %1920 = vmatmul.mubr.bf16.gmra.mrb[0].mxu0 %v946
  %v1921 = vpop.f32.mrb[0].mxu0
  %v1922 = vadd.f32 %v1697, %v1921
  %v1923 = vpop.f32.mrb[0].mxu0
  %v1924 = vpop.f32.mrb[0].mxu0
  %v1925 = vadd.f32 %v1700, %v1924
  %v1926 = vpop.f32.mrb[0].mxu0
  %1927 = vmatprep.mubr.bf16.mxu0 0
  %1928 = vmatmul.mubr.bf16.gmra.mrb[0].mxu0 %v951
  %v1929 = vpop.f32.mrb[0].mxu0
  %v1930 = vadd.f32 %v1705, %v1929
  %v1931 = vpop.f32.mrb[0].mxu0
  %v1932 = vpop.f32.mrb[0].mxu0
  %v1933 = vadd.f32 %v1708, %v1932
  %v1934 = vpop.f32.mrb[0].mxu0
  %1935 = vmatprep.mubr.bf16.mxu0 0
  %1936 = vmatmul.mubr.bf16.gmra.mrb[0].mxu0 %v956
  %v1937 = vpop.f32.mrb[0].mxu0
  %v1938 = vadd.f32 %v1713, %v1937
  %v1939 = vpop.f32.mrb[0].mxu0
  %v1940 = vpop.f32.mrb[0].mxu0
  %v1941 = vadd.f32 %v1716, %v1940
  %v1942 = vpop.f32.mrb[0].mxu0
  %1943 = vmatprep.mubr.bf16.mxu0 0
  %1944 = vmatmul.mubr.bf16.gmra.mrb[0].mxu0 %v961
  %v1945 = vpop.f32.mrb[0].mxu0
  %v1946 = vadd.f32 %v1721, %v1945
  %v1947 = vpop.f32.mrb[0].mxu0
  %v1948 = vpop.f32.mrb[0].mxu0
  %v1949 = vadd.f32 %v1724, %v1948
  %v1950 = vpop.f32.mrb[0].mxu0
  %1951 = vmatprep.mubr.bf16.mxu0 0
  %1952 = vmatmul.mubr.bf16.gmra.mrb[0].mxu0 %v966
  %v1953 = vpop.f32.mrb[0].mxu0
  %v1954 = vadd.f32 %v1729, %v1953
  %v1955 = vpop.f32.mrb[0].mxu0
  %v1956 = vpop.f32.mrb[0].mxu0
  %v1957 = vadd.f32 %v1732, %v1956
  %v1958 = vpop.f32.mrb[0].mxu0
  %1959 = vmatprep.mubr.bf16.mxu0 0
  %1960 = vmatmul.mubr.bf16.gmra.mrb[0].mxu0 %v971
  %v1961 = vpop.f32.mrb[0].mxu0
  %v1962 = vadd.f32 %v1737, %v1961
  %v1963 = vpop.f32.mrb[0].mxu0
  %v1964 = vpop.f32.mrb[0].mxu0
  %v1965 = vadd.f32 %v1740, %v1964
  %v1966 = vpop.f32.mrb[0].mxu0
  %1967 = vmatprep.mubr.bf16.mxu0 0
  %1968 = vmatmul.mubr.bf16.gmra.mrb[0].mxu0 %v976
  %v1969 = vpop.f32.mrb[0].mxu0
  %v1970 = vadd.f32 %v1745, %v1969
  %v1971 = vpop.f32.mrb[0].mxu0
  %v1972 = vpop.f32.mrb[0].mxu0
  %v1973 = vadd.f32 %v1748, %v1972
  %v1974 = vpop.f32.mrb[0].mxu0
  %1975 = vmatprep.mubr.bf16.mxu0 0
  %1976 = vmatmul.mubr.bf16.gmra.mrb[0].mxu0 %v981
  %v1977 = vpop.f32.mrb[0].mxu0
  %v1978 = vadd.f32 %v1753, %v1977
  %v1979 = vpop.f32.mrb[0].mxu0
  %v1980 = vpop.f32.mrb[0].mxu0
  %v1981 = vadd.f32 %v1756, %v1980
  %v1982 = vpop.f32.mrb[0].mxu0
  %1983 = vmatprep.mubr.bf16.mxu0 0
  %1984 = vmatmul.mubr.bf16.gmra.mrb[0].mxu0 %v986
  %v1985 = vpop.f32.mrb[0].mxu0
  %v1986 = vadd.f32 %v1761, %v1985
  %v1987 = vpop.f32.mrb[0].mxu0
  %v1988 = vpop.f32.mrb[0].mxu0
  %v1989 = vadd.f32 %v1764, %v1988
  %v1990 = vpop.f32.mrb[0].mxu0
  %1991 = vmatprep.mubr.bf16.mxu0 0
  %1992 = vmatmul.mubr.bf16.gmra.mrb[0].mxu0 %v991
  %v1993 = vpop.f32.mrb[0].mxu0
  %v1994 = vadd.f32 %v1769, %v1993
  %v1995 = vpop.f32.mrb[0].mxu0
  %v1996 = vpop.f32.mrb[0].mxu0
  %v1997 = vadd.f32 %v1772, %v1996
  %v1998 = vpop.f32.mrb[0].mxu0
  %1999 = vmatprep.mubr.bf16.mxu0 0
  %2000 = vmatmul.mubr.bf16.gmra.mrb[0].mxu0 %v996
  %v2001 = vpop.f32.mrb[0].mxu0
  %v2002 = vadd.f32 %v1777, %v2001
  %v2003 = vpop.f32.mrb[0].mxu0
  %v2004 = vpop.f32.mrb[0].mxu0
  %v2005 = vadd.f32 %v1780, %v2004
  %v2006 = vpop.f32.mrb[0].mxu0
  %2007 = vmatprep.mubr.bf16.mxu0 0
  %2008 = vmatmul.mubr.bf16.gmra.mrb[0].mxu0 %v1001
  %v2009 = vpop.f32.mrb[0].mxu0
  %v2010 = vadd.f32 %v1785, %v2009
  %v2011 = vpop.f32.mrb[0].mxu0
  %v2012 = vpop.f32.mrb[0].mxu0
  %v2013 = vadd.f32 %v1788, %v2012
  %v2014 = vpop.f32.mrb[0].mxu0
  %2015 = vmatprep.mubr.bf16.mxu0 0
  %2016 = vmatmul.mubr.bf16.gmra.mrb[0].mxu0 %v1006
  %v2017 = vpop.f32.mrb[0].mxu0
  %v2018 = vadd.f32 %v1793, %v2017
  %v2019 = vpop.f32.mrb[0].mxu0
  %v2020 = vpop.f32.mrb[0].mxu0
  %v2021 = vadd.f32 %v1796, %v2020
  %v2022 = vpop.f32.mrb[0].mxu0
  %2023 = vmatprep.mubr.bf16.mxu0 0
  %2024 = vmatmul.mubr.bf16.gmra.mrb[0].mxu0 %v1011
  %v2025 = vpop.f32.mrb[0].mxu0
  %v2026 = vadd.f32 %v1801, %v2025
  %v2027 = vpop.f32.mrb[0].mxu0
  %v2028 = vpop.f32.mrb[0].mxu0
  %v2029 = vadd.f32 %v1804, %v2028
  %v2030 = vpop.f32.mrb[0].mxu0
  %2031 = vmatprep.mubr.bf16.mxu0 0
  %2032 = vmatmul.mubr.bf16.gmra.mrb[0].mxu0 %v1016
  %v2033 = vpop.f32.mrb[0].mxu0
  %v2034 = vadd.f32 %v1809, %v2033
  %v2035 = vpop.f32.mrb[0].mxu0
  %v2036 = vpop.f32.mrb[0].mxu0
  %v2037 = vadd.f32 %v1812, %v2036
  %v2038 = vpop.f32.mrb[0].mxu0
  %2039 = vmatprep.mubr.bf16.mxu0 0
  %2040 = vmatmul.mubr.bf16.gmra.mrb[0].mxu0 %v1021
  %v2041 = vpop.f32.mrb[0].mxu0
  %v2042 = vadd.f32 %v1817, %v2041
  %v2043 = vpop.f32.mrb[0].mxu0
  %v2044 = vpop.f32.mrb[0].mxu0
  %v2045 = vadd.f32 %v1820, %v2044
  %v2046 = vpop.f32.mrb[0].mxu0
  %2047 = vmatprep.mubr.bf16.mxu0 0
  %2048 = vmatmul.mubr.bf16.gmra.mrb[0].mxu0 %v1026
  %v2049 = vpop.f32.mrb[0].mxu0
  %v2050 = vadd.f32 %v1825, %v2049
  %v2051 = vpop.f32.mrb[0].mxu0
  %v2052 = vpop.f32.mrb[0].mxu0
  %v2053 = vadd.f32 %v1828, %v2052
  %v2054 = vpop.f32.mrb[0].mxu0
  %2055 = vmatprep.mubr.bf16.mxu0 0
  %2056 = vmatmul.mubr.bf16.gmra.mrb[0].mxu0 %v1031
  %v2057 = vpop.f32.mrb[0].mxu0
  %v2058 = vadd.f32 %v1833, %v2057
  %v2059 = vpop.f32.mrb[0].mxu0
  %v2060 = vpop.f32.mrb[0].mxu0
  %v2061 = vadd.f32 %v1836, %v2060
  %v2062 = vpop.f32.mrb[0].mxu0
  %2063 = vmatprep.mubr.bf16.mxu0 0
  %2064 = vmatmul.mubr.bf16.gmra.mrb[0].mxu0 %v1036
  %v2065 = vpop.f32.mrb[0].mxu0
  %v2066 = vadd.f32 %v1841, %v2065
  %v2067 = vpop.f32.mrb[0].mxu0
  %v2068 = vpop.f32.mrb[0].mxu0
  %v2069 = vadd.f32 %v1844, %v2068
  %v2070 = vpop.f32.mrb[0].mxu0
  %2071 = vdwg.mxu0
  %v2072 = vmax.f32 %v1882, 0.0
  %v2073 = vmax.f32 %v1885, 0.0
  %v2074 = vmax.f32 %v1890, 0.0
  %v2075 = vmax.f32 %v1893, 0.0
  %v2076 = vmax.f32 %v1898, 0.0
  %v2077 = vmax.f32 %v1901, 0.0
  %v2078 = vmax.f32 %v1906, 0.0
  %v2079 = vmax.f32 %v1909, 0.0
  %v2080 = vmax.f32 %v1914, 0.0
  %v2081 = vmax.f32 %v1917, 0.0
  %v2082 = vmax.f32 %v1922, 0.0
  %v2083 = vmax.f32 %v1925, 0.0
  %v2084 = vmax.f32 %v1930, 0.0
  %v2085 = vmax.f32 %v1933, 0.0
  %v2086 = vmax.f32 %v1938, 0.0
  %v2087 = vmax.f32 %v1941, 0.0
  %v2088 = vmax.f32 %v1946, 0.0
  %v2089 = vmax.f32 %v1949, 0.0
  %v2090 = vmax.f32 %v1954, 0.0
  %v2091 = vmax.f32 %v1957, 0.0
  %v2092 = vmax.f32 %v1962, 0.0
  %v2093 = vmax.f32 %v1965, 0.0
  %v2094 = vmax.f32 %v1970, 0.0
  %v2095 = vmax.f32 %v1973, 0.0
  %v2096 = vmax.f32 %v1978, 0.0
  %v2097 = vmax.f32 %v1981, 0.0
  %v2098 = vmax.f32 %v1986, 0.0
  %v2099 = vmax.f32 %v1989, 0.0
  %v2100 = vmax.f32 %v1994, 0.0
  %v2101 = vmax.f32 %v1997, 0.0
  %v2102 = vmax.f32 %v2002, 0.0
  %v2103 = vmax.f32 %v2005, 0.0
  %v2104 = vmax.f32 %v2010, 0.0
  %v2105 = vmax.f32 %v2013, 0.0
  %v2106 = vmax.f32 %v2018, 0.0
  %v2107 = vmax.f32 %v2021, 0.0
  %v2108 = vmax.f32 %v2026, 0.0
  %v2109 = vmax.f32 %v2029, 0.0
  %v2110 = vmax.f32 %v2034, 0.0
  %v2111 = vmax.f32 %v2037, 0.0
  %v2112 = vmax.f32 %v2042, 0.0
  %v2113 = vmax.f32 %v2045, 0.0
  %v2114 = vmax.f32 %v2050, 0.0
  %v2115 = vmax.f32 %v2053, 0.0
  %v2116 = vmax.f32 %v2058, 0.0
  %v2117 = vmax.f32 %v2061, 0.0
  %v2118 = vmax.f32 %v2066, 0.0
  %v2119 = vmax.f32 %v2069, 0.0
  %v2120 = vld [vmem:[%s3] sm:$0xff]
  %v2121 = vld [vmem:[%s3 + $0x8] sm:$0xf]
  %v2122 = vld [vmem:[%s3 + $0xc] sm:$0x11]
  %v2123 = vld [vmem:[%s3 + $0x14] sm:$0x1]
  %v2124 = vpack.c.bf16 %v2073, %v2072
  %v2125 = vpack.c.bf16 %v2075, %v2074
  %v2126 = vpack.c.bf16 %v2077, %v2076
  %v2127 = vpack.c.bf16 %v2079, %v2078
  %v2128 = vpack.c.bf16 %v2081, %v2080
  %v2129 = vpack.c.bf16 %v2083, %v2082
  %v2130 = vpack.c.bf16 %v2085, %v2084
  %v2131 = vpack.c.bf16 %v2087, %v2086
  %v2132 = vpack.c.bf16 %v2089, %v2088
  %v2133 = vpack.c.bf16 %v2091, %v2090
  %v2134 = vpack.c.bf16 %v2093, %v2092
  %v2135 = vpack.c.bf16 %v2095, %v2094
  %v2136 = vpack.c.bf16 %v2097, %v2096
  %v2137 = vpack.c.bf16 %v2099, %v2098
  %v2138 = vpack.c.bf16 %v2101, %v2100
  %v2139 = vpack.c.bf16 %v2103, %v2102
  %v2140 = vpack.c.bf16 %v2105, %v2104
  %v2141 = vpack.c.bf16 %v2107, %v2106
  %v2142 = vpack.c.bf16 %v2109, %v2108
  %v2143 = vpack.c.bf16 %v2111, %v2110
  %v2144 = vpack.c.bf16 %v2113, %v2112
  %v2145 = vpack.c.bf16 %v2115, %v2114
  %v2146 = vpack.c.bf16 %v2117, %v2116
  %v2147 = vpack.c.bf16 %v2119, %v2118
  %v2148 = vld [vmem:[%s4] sm:$0xff]
  %v2149 = vld [vmem:[%s4 + $0x8] sm:$0x3]
  %2151 = vset.pattern.permute.xlu0 0
  %2152 = vperm.xlu0 %2151, %v2148
  %v2153 = vpop.permute.xlu0 %2152
  %2156 = vset.pattern.permute.xlu0 0
  %2157 = vperm.xlu0 %2156, %v2149
  %v2158 = vpop.permute.xlu0 %2157
  %v2164 = vunpack.c.l.b16 %v2120
  %v2165 = vunpack.c.h.b16 %v2120
  %v2166 = vunpack.c.l.b16 %v2121
  %v2167 = vunpack.c.l.b16 %v2122
  %v2168 = vunpack.c.h.b16 %v2122
  %v2169 = vunpack.c.l.b16 %v2123
  %v2170 = vpack.c.b16 %v2167, %v2164
  %v2171 = vpack.c.b16 %v2168, %v2165
  %v2172 = vpack.c.b16 %v2169, %v2166
  %2176 = vmatprep.subr.bf16.mxu0 0
  %2177 = vmatpush1.bf16.msra.mxu0 %v2124
  %2178 = vmatprep.subr.bf16.mxu0 0
  %2179 = vmatpush1.bf16.msra.mxu0 %v2125
  %2180 = vmatprep.subr.bf16.mxu0 0
  %2181 = vmatpush1.bf16.msra.mxu0 %v2126
  %2182 = vmatprep.subr.bf16.mxu0 0
  %2183 = vmatpush1.bf16.msra.mxu0 %v2127
  %2184 = vmatprep.subr.bf16.mxu0 0
  %2185 = vmatpush1.bf16.msra.mxu0 %v2128
  %2186 = vmatprep.subr.bf16.mxu0 0
  %2187 = vmatpush1.bf16.msra.mxu0 %v2129
  %2188 = vmatprep.subr.bf16.mxu0 0
  %2189 = vmatpush1.bf16.msra.mxu0 %v2130
  %2190 = vmatprep.subr.bf16.mxu0 0
  %2191 = vmatpush1.bf16.msra.mxu0 %v2131
  %2192 = vmatprep.subr.bf16.mxu0 0
  %2193 = vmatpush1.bf16.msra.mxu0 %v2132
  %2194 = vmatprep.subr.bf16.mxu0 0
  %2195 = vmatpush1.bf16.msra.mxu0 %v2133
  %2196 = vmatprep.subr.bf16.mxu0 0
  %2197 = vmatpush1.bf16.msra.mxu0 %v2134
  %2198 = vmatprep.subr.bf16.mxu0 0
  %2199 = vmatpush1.bf16.msra.mxu0 %v2135
  %2200 = vmatprep.subr.bf16.mxu0 0
  %2201 = vmatpush1.bf16.msra.mxu0 %v2136
  %2202 = vmatprep.subr.bf16.mxu0 0
  %2203 = vmatpush1.bf16.msra.mxu0 %v2137
  %2204 = vmatprep.subr.bf16.mxu0 0
  %2205 = vmatpush1.bf16.msra.mxu0 %v2138
  %2206 = vmatprep.subr.bf16.mxu0 0
  %2207 = vmatpush1.bf16.msra.mxu0 %v2139
  %2208 = vmatprep.mubr.bf16.mxu0 %v2171
  %2209 = vmatmul.mubr.bf16.gmra.mrb[0].mxu0 %v2170
  %v2210 = vpop.f32.mrb[0].mxu0
  %v2211 = vadd.f32 %v2153, %v2210
  %v2212 = vpop.f32.mrb[0].mxu0
  %v2213 = vpop.f32.mrb[0].mxu0
  %v2214 = vadd.f32 %v2158, %v2213
  %v2215 = vpop.f32.mrb[0].mxu0
  %2216 = vdwg.mxu0
  %2217 = vmatprep.subr.bf16.mxu0 0
  %2218 = vmatpush1.bf16.msra.mxu0 %v2140
  %2219 = vmatprep.subr.bf16.mxu0 0
  %2220 = vmatpush1.bf16.msra.mxu0 %v2141
  %2221 = vmatprep.subr.bf16.mxu0 0
  %2222 = vmatpush1.bf16.msra.mxu0 %v2142
  %2223 = vmatprep.subr.bf16.mxu0 0
  %2224 = vmatpush1.bf16.msra.mxu0 %v2143
  %2225 = vmatprep.subr.bf16.mxu0 0
  %2226 = vmatpush1.bf16.msra.mxu0 %v2144
  %2227 = vmatprep.subr.bf16.mxu0 0
  %2228 = vmatpush1.bf16.msra.mxu0 %v2145
  %2229 = vmatprep.subr.bf16.mxu0 0
  %2230 = vmatpush1.bf16.msra.mxu0 %v2146
  %2231 = vmatprep.subr.bf16.mxu0 0
  %2232 = vmatpush1.bf16.msra.mxu0 %v2147
  %2233 = vmatprep.subr.bf16.mxu0 0
  %2234 = vmatpush1.bf16.msra.mxu0 0
  %2235 = vmatprep.subr.bf16.mxu0 0
  %2236 = vmatpush1.bf16.msra.mxu0 0
  %2237 = vmatprep.subr.bf16.mxu0 0
  %2238 = vmatpush1.bf16.msra.mxu0 0
  %2239 = vmatprep.subr.bf16.mxu0 0
  %2240 = vmatpush1.bf16.msra.mxu0 0
  %2241 = vmatprep.subr.bf16.mxu0 0
  %2242 = vmatpush1.bf16.msra.mxu0 0
  %2243 = vmatprep.subr.bf16.mxu0 0
  %2244 = vmatpush1.bf16.msra.mxu0 0
  %2245 = vmatprep.subr.bf16.mxu0 0
  %2246 = vmatpush1.bf16.msra.mxu0 0
  %2247 = vmatprep.subr.bf16.mxu0 0
  %2248 = vmatpush1.bf16.msra.mxu0 0
  %2249 = vmatprep.mubr.bf16.mxu0 0
  %2250 = vmatmul.mubr.bf16.gmra.mrb[0].mxu0 %v2172
  %v2251 = vpop.f32.mrb[0].mxu0
  %v2252 = vadd.f32 %v2211, %v2251
  %v2253 = vpop.f32.mrb[0].mxu0
  %v2254 = vpop.f32.mrb[0].mxu0
  %v2255 = vadd.f32 %v2214, %v2254
  %v2256 = vpop.f32.mrb[0].mxu0
  %2257 = vdwg.mxu0
  %vm2258 = vcmask 130048
  %v2259 = vsel %vm2258, %v2252, -inf
  %vm2260 = vcmask 123904
  %v2261 = vsel %vm2260, %v2255, -inf
  %v2262 = vmax.f32 %v2259, %v2261
  %v2263 = vrot.slane %v2262, 4
  %v2264 = vmax.f32 %v2262, %v2263
  %v2265 = vrot.slane %v2264, 2
  %v2266 = vmax.f32 %v2264, %v2265
  %v2267 = vrot.slane %v2266, 1
  %v2268 = vmax.f32 %v2266, %v2267
  %v2269 = vsub.f32 %v2252, %v2268
  %v2270 = vsub.f32 %v2255, %v2268
  %v2271 = vmul.f32 %v2269, 1.442695
  %v2272 = vpow.pop %v2271
  %v2273 = vmul.f32 %v2270, 1.442695
  %v2274 = vpow.pop %v2273
  %v2275 = vsel %vm2258, %v2272, 0.0
  %v2276 = vsel %vm2260, %v2274, 0.0
  %v2277 = vadd.f32 %v2275, %v2276
  %v2278 = vrot.slane %v2277, 4
  %v2279 = vadd.f32 %v2277, %v2278
  %v2280 = vrot.slane %v2279, 2
  %v2281 = vadd.f32 %v2279, %v2280
  %v2282 = vrot.slane %v2281, 1
  %v2283 = vadd.f32 %v2281, %v2282
  %v2284 = vlog2.pop %v2283
  %v2285 = vmul.f32 %v2284, 0.6931472
  %v2286 = vsub.f32 %v2269, %v2285
  %v2287 = vsub.f32 %v2270, %v2285
  %2288 = vst.msk [vmem:[%s5] sm:$0xff] %vm2258, %v2286
  %2289 = vst.msk [vmem:[%s5 + $0x8] sm:$0x3] %vm2260, %v2287
  // Predicated region
  $region22: #{net1_forward.5} parent=0 // pred_check
    _
  $region23: #{net1_forward.5} parent=0 // pred_check_branch
    %2291 = sbr.rel (0) target = $region25
  $region24: #{net1_forward.5} parent=0 // pred_region
    _
  $region25: #{net1_forward.5} parent=0 // pred_fallthru
    _
  // Predicated region
  $region26: #{net1_forward.5} parent=0 // pred_check
    _
  $region27: #{net1_forward.5} parent=0 // pred_check_branch
    %2293 = sbr.rel (0) target = $region29
  $region28: #{net1_forward.5} parent=0 // pred_region
    _
  $region29: #{net1_forward.5} parent=0 // pred_fallthru
    _

</llo_original>
